<compile_context>
chip_gen: v7x
topology: tpu7x:2x2x1
jax: 0.10.0
libtpu: 0.0.40
codegen_flags: <defaults>
</compile_context>

<pallas_src>
import functools

import numpy as np
import jax
import jax.numpy as jnp
from jax.experimental import pallas as pl
from jax.experimental.pallas import tpu as pltpu

_EPS = 1e-5
_NEG_SLOPE = 0.2
_LANE = 128


def _conv_out(size, k, stride, pad):
    return (size + 2 * pad - k) // stride + 1


# ---------------------------------------------------------------------------
# Fused kernel: whole discriminator forward, all activations stay in VMEM.
# ---------------------------------------------------------------------------
def _disc_kernel(p1_ref, w1_ref, s2_ref, w2_ref, s3_ref, w3_ref, w4_ref,
                 w5_ref, bgb_ref, out_ref, p2_ref, p3_ref, p4_ref):

    def post(acc, lidx, cout, use_bn, lrelu):
        bgb = bgb_ref[lidx]                                 # (3, bgb_w) f32
        acc = acc + bgb[0:1, :cout]                         # conv bias
        if use_bn:                                          # BatchNorm2d (train)
            mean = jnp.mean(acc, axis=0, keepdims=True)
            var = jnp.mean(jnp.square(acc - mean), axis=0, keepdims=True)
            acc = (acc - mean) * jax.lax.rsqrt(var + _EPS)
            acc = acc * bgb[1:2, :cout] + bgb[2:3, :cout]
        if lrelu:                                           # LeakyReLU(0.2)
            acc = jnp.where(acc > 0, acc, _NEG_SLOPE * acc)
        else:                                               # ReLU
            acc = jnp.maximum(acc, 0.0)
        return acc

    def gather_layer(a_f32, s_ref, w_ref, patch_ref, lidx):
        """Conv layer: stacked bf16 gather matmul + T VMEM block copies into a
        patch scratch + one wide-K matmul (2 MXU pushes total)."""
        m_out = patch_ref.shape[0]
        cin = a_f32.shape[1]
        taps = s_ref.shape[0] // m_out
        a_b = a_f32.astype(jnp.bfloat16)                    # one cast per layer
        g = jnp.dot(s_ref[...], a_b, preferred_element_type=jnp.float32)
        for t in range(taps):                               # ld/st only, no MXU
            patch_ref[:, t * cin:(t + 1) * cin] = g[t * m_out:(t + 1) * m_out, :]
        patches = patch_ref[...].astype(jnp.bfloat16)       # (m_out, taps*cin)
        y = jnp.dot(patches, w_ref[...], preferred_element_type=jnp.float32)
        return post(y, lidx, w_ref.shape[1], True, True)

    # --- dn1: wrapper-side im2col, K = 4*4*16 = 256 -------------------------
    a = jnp.dot(p1_ref[...], w1_ref[...], preferred_element_type=jnp.float32)
    a = post(a, 0, w1_ref.shape[1], False, False)           # ReLU, no BN

    # --- dn2 / dn3: stacked gather + wide-K matmul --------------------------
    a = gather_layer(a, s2_ref, w2_ref, p2_ref, 1)          # (32, 64)
    a = gather_layer(a, s3_ref, w3_ref, p3_ref, 2)          # (8, 128)

    # --- dn4: its 4 surviving taps tile the 2x2 input exactly, so the patch
    #     matrix is just the dn3 rows laid side by side (no gather matmul). ---
    n_b = p4_ref.shape[0]
    cin3 = a.shape[1]
    taps4 = p4_ref.shape[1] // cin3
    for b in range(n_b):
        for t in range(taps4):
            p4_ref[b:b + 1, t * cin3:(t + 1) * cin3] = \
                a[b * taps4 + t:b * taps4 + t + 1, :]
    patches4 = p4_ref[...].astype(jnp.bfloat16)              # (2, 512)
    a = post(jnp.dot(patches4, w4_ref[...], preferred_element_type=jnp.float32),
             3, w4_ref.shape[1], True, True)                 # (2, 256)

    # --- output conv: only tap (1,1) survives -> plain matmul, lane-padded. --
    y = jnp.dot(a.astype(jnp.bfloat16), w5_ref[...],
                preferred_element_type=jnp.float32)           # (2, 128)
    out_ref[...] = post(y, 4, w5_ref.shape[1], False, False)  # ReLU, no BN


# ---------------------------------------------------------------------------
# Wrapper-side (compile-time) helpers
# ---------------------------------------------------------------------------
@functools.lru_cache(maxsize=None)
def _stacked_gather_np(n, h, w, kh, kw, stride, pad):
    """0/1 gather matrix with tap-major row blocks: for each tap t,
    rows [t*M_out, (t+1)*M_out) of S @ A are im2col tap t of A."""
    oh, ow = _conv_out(h, kh, stride, pad), _conv_out(w, kw, stride, pad)
    taps, m_out, m_in = kh * kw, n * oh * ow, n * h * w
    s = np.zeros((taps * m_out, m_in), np.float32)
    for i in range(kh):
        for j in range(kw):
            t = i * kw + j
            for b in range(n):
                for oy in range(oh):
                    iy = oy * stride - pad + i
                    if not 0 <= iy < h:
                        continue
                    for ox in range(ow):
                        ix = ox * stride - pad + j
                        if 0 <= ix < w:
                            s[t * m_out + (b * oh + oy) * ow + ox,
                              (b * h + iy) * w + ix] = 1.0
    return s, oh, ow


def _im2col(x_nhwc, kh, kw, stride, pad):
    n, h, w, cin = x_nhwc.shape
    xp = jnp.pad(x_nhwc, ((0, 0), (pad, pad), (pad, pad), (0, 0)))
    oh, ow = _conv_out(h, kh, stride, pad), _conv_out(w, kw, stride, pad)
    cols = [xp[:, i:i + stride * oh:stride, j:j + stride * ow:stride, :]
            for i in range(kh) for j in range(kw)]
    patches = jnp.concatenate(cols, axis=-1)              # (N, OH, OW, KH*KW*Cin)
    return patches.reshape(n * oh * ow, kh * kw * cin), oh, ow


def _pack_bgb_all(params, names, width):
    rows = []
    for name in names:
        p = params[name]
        padw = width - p["b"].shape[0]
        rows.append(jnp.stack([jnp.pad(p["b"], (0, padw)),
                               jnp.pad(p["gamma"], (0, padw)),
                               jnp.pad(p["beta"], (0, padw))], axis=0))
    return jnp.stack(rows, axis=0).astype(jnp.float32)       # (5, 3, width)


# ---------------------------------------------------------------------------
# Public forward pass
# ---------------------------------------------------------------------------
def discriminator_forward(params, x_nchw):
    x = jnp.transpose(x_nchw, (0, 2, 3, 1)).astype(jnp.float32)   # NCHW -> NHWC
    n, h, w, cin = x.shape

    # dn1: im2col in the wrapper; Cin padded 9 -> 16 so K = 4*4*16 = 256.
    cin_p = ((cin + 7) // 8) * 8
    xpad = jnp.pad(x, ((0, 0), (0, 0), (0, 0), (0, cin_p - cin)))
    p1, h1, w1d = _im2col(xpad, 4, 4, 2, 1)
    p1 = p1.astype(jnp.bfloat16)
    c1 = params["dn1"]["w"].shape[-1]
    w1 = jnp.pad(params["dn1"]["w"], ((0, 0), (0, 0), (0, cin_p - cin), (0, 0)))
    w1 = w1.reshape(16 * cin_p, c1).astype(jnp.bfloat16)

    # dn2 / dn3: stacked 0/1 gather (bf16, exact) + K-concatenated weights.
    s2_np, h2, w2d = _stacked_gather_np(n, h1, w1d, 4, 4, 2, 1)
    s2 = jnp.asarray(s2_np, dtype=jnp.bfloat16)
    c2 = params["dn2"]["w"].shape[-1]
    w2 = params["dn2"]["w"].reshape(16 * c1, c2).astype(jnp.bfloat16)

    s3_np, h3, w3d = _stacked_gather_np(n, h2, w2d, 4, 4, 2, 1)
    s3 = jnp.asarray(s3_np, dtype=jnp.bfloat16)
    c3 = params["dn3"]["w"].shape[-1]
    w3 = params["dn3"]["w"].reshape(16 * c2, c3).astype(jnp.bfloat16)

    # dn4: 2x2 input -> only taps (i,j) in {1,2}^2 survive zero padding and
    # they tile the input exactly; patch assembly is done in-kernel with row
    # copies (no gather matrix).  Weights concatenated along K in tap order.
    assert (h3, w3d) == (2, 2), (h3, w3d)
    h4, w4d = _conv_out(h3, 4, 2, 1), _conv_out(w3d, 4, 2, 1)
    c4 = params["dn4"]["w"].shape[-1]
    w4 = params["dn4"]["w"][1:3, 1:3].reshape(4 * c3, c4).astype(jnp.bfloat16)

    # output conv (k=2, s=2, p=1) on a 1x1 map: only tap (1,1) survives.
    assert (h4, w4d) == (1, 1), (h4, w4d)
    h5, w5d = _conv_out(h4, 2, 2, 1), _conv_out(w4d, 2, 2, 1)
    cout = params["output"]["w"].shape[-1]
    cout_p = ((cout + _LANE - 1) // _LANE) * _LANE                # lane-dense store
    w5 = jnp.pad(params["output"]["w"][1, 1], ((0, 0), (0, cout_p - cout)))
    w5 = w5.astype(jnp.bfloat16)

    names = ["dn1", "dn2", "dn3", "dn4", "output"]
    couts = [params[nm]["b"].shape[0] for nm in names]
    bgb_w = ((max(couts + [cout_p]) + _LANE - 1) // _LANE) * _LANE
    bgb = _pack_bgb_all(params, names, bgb_w)

    m2, m3, m4 = n * h2 * w2d, n * h3 * w3d, n * h4 * w4d
    m5 = n * h5 * w5d
    inputs = (p1, w1, s2, w2, s3, w3, w4, w5, bgb)

    def spec(shape):
        return pl.BlockSpec(shape, lambda i, r=len(shape): (0,) * r)

    out = pl.pallas_call(
        _disc_kernel,
        out_shape=jax.ShapeDtypeStruct((m5, cout_p), jnp.float32),
        grid=(1,),
        in_specs=[spec(a.shape) for a in inputs],
        out_specs=spec((m5, cout_p)),
        scratch_shapes=[pltpu.VMEM((m2, 16 * c1), jnp.float32),   # dn2 patches
                        pltpu.VMEM((m3, 16 * c2), jnp.float32),   # dn3 patches
                        pltpu.VMEM((m4, 4 * c3), jnp.float32)],   # dn4 patches
        compiler_params=pltpu.CompilerParams(dimension_semantics=("arbitrary",)),
    )(*inputs)

    y = out[:, :cout].reshape(n, h5, w5d, cout)
    return jnp.transpose(y, (0, 3, 1, 2))                         # back to NCHW


def init_params(key, in_channels=9, hid_channels=32, out_channels=1):
    names = ["dn1", "dn2", "dn3", "dn4", "output"]
    cfg = [
        (in_channels, hid_channels, 4),
        (hid_channels, 2 * hid_channels, 4),
        (2 * hid_channels, 4 * hid_channels, 4),
        (4 * hid_channels, 8 * hid_channels, 4),
        (8 * hid_channels, out_channels, 2),
    ]
    keys = jax.random.split(key, 2 * len(cfg))
    params = {}
    for i, (name, (ci, co, ks)) in enumerate(zip(names, cfg)):
        params[name] = dict(
            w=0.05 * jax.random.normal(keys[2 * i], (ks, ks, ci, co), dtype=jnp.float32),
            b=0.01 * jax.random.normal(keys[2 * i + 1], (co,), dtype=jnp.float32),
            gamma=jnp.ones((co,), jnp.float32),   # BatchNorm2d default init
            beta=jnp.zeros((co,), jnp.float32),
        )
    return params


if __name__ == "__main__":
    key = jax.random.PRNGKey(0)
    kp, kx = jax.random.split(key)
    params = init_params(kp, in_channels=9, hid_channels=32, out_channels=1)
    x = jax.random.normal(kx, (2, 9, 16, 16), dtype=jnp.float32)   # NCHW

    fwd = jax.jit(discriminator_forward)
    y = fwd(params, x)
    jax.block_until_ready(y)

    # 16 -> 8 -> 4 -> 2 -> 1 -> 1  (patch-GAN style output)
    assert y.shape == (2, 1, 1, 1), y.shape
    assert jnp.all(jnp.isfinite(y))
    print("KERNEL_OK")
</pallas_src>

<mosaic_0001>
module attributes {stable_mosaic.version = 11 : i64} {
  func.func @_disc_kernel(%arg0: i32, %arg1: memref<128x256xbf16, #tpu.memory_space<vmem>>, %arg2: memref<256x32xbf16, #tpu.memory_space<vmem>>, %arg3: memref<512x128xbf16, #tpu.memory_space<vmem>>, %arg4: memref<512x64xbf16, #tpu.memory_space<vmem>>, %arg5: memref<128x32xbf16, #tpu.memory_space<vmem>>, %arg6: memref<1024x128xbf16, #tpu.memory_space<vmem>>, %arg7: memref<512x256xbf16, #tpu.memory_space<vmem>>, %arg8: memref<256x128xbf16, #tpu.memory_space<vmem>>, %arg9: memref<5x3x256xf32, #tpu.memory_space<vmem>>, %arg10: memref<2x128xf32, #tpu.memory_space<vmem>>, %arg11: memref<32x512xf32, #tpu.memory_space<vmem>>, %arg12: memref<8x1024xf32, #tpu.memory_space<vmem>>, %arg13: memref<2x512xf32, #tpu.memory_space<vmem>>) attributes {dimension_semantics = [#tpu.dimension_semantics<arbitrary>], iteration_bounds = array<i64: 1>, scalar_prefetch = 0 : i64, scratch_operands = 3 : i64, tpu.core_type = #tpu.core_type<tc>, window_params = [{pipeline_mode = #tpu.pipeline_mode<synchronous>, transform_indices = @transform_0, window_bounds = array<i64: 128, 256>}, {pipeline_mode = #tpu.pipeline_mode<synchronous>, transform_indices = @transform_1, window_bounds = array<i64: 256, 32>}, {pipeline_mode = #tpu.pipeline_mode<synchronous>, transform_indices = @transform_2, window_bounds = array<i64: 512, 128>}, {pipeline_mode = #tpu.pipeline_mode<synchronous>, transform_indices = @transform_3, window_bounds = array<i64: 512, 64>}, {pipeline_mode = #tpu.pipeline_mode<synchronous>, transform_indices = @transform_4, window_bounds = array<i64: 128, 32>}, {pipeline_mode = #tpu.pipeline_mode<synchronous>, transform_indices = @transform_5, window_bounds = array<i64: 1024, 128>}, {pipeline_mode = #tpu.pipeline_mode<synchronous>, transform_indices = @transform_6, window_bounds = array<i64: 512, 256>}, {pipeline_mode = #tpu.pipeline_mode<synchronous>, transform_indices = @transform_7, window_bounds = array<i64: 256, 128>}, {pipeline_mode = #tpu.pipeline_mode<synchronous>, transform_indices = @transform_8, window_bounds = array<i64: 5, 3, 256>}, {pipeline_mode = #tpu.pipeline_mode<synchronous>, transform_indices = @transform_9, window_bounds = array<i64: 2, 128>}]} {
    %c0 = arith.constant 0 : index
    %c0_0 = arith.constant 0 : index
    %0 = vector.load %arg1[%c0, %c0_0] : memref<128x256xbf16, #tpu.memory_space<vmem>>, vector<128x256xbf16>
    %c0_1 = arith.constant 0 : index
    %c0_2 = arith.constant 0 : index
    %1 = vector.load %arg2[%c0_1, %c0_2] : memref<256x32xbf16, #tpu.memory_space<vmem>>, vector<256x32xbf16>
    %cst = arith.constant dense<0.000000e+00> : vector<128x32xf32>
    %2 = tpu.matmul %0, %1, %cst {dimension_numbers = #tpu.dot_dimension_numbers<[1], [0], [0], [1], [0, 0, 1, 1], [], []>} : vector<128x256xbf16>, vector<256x32xbf16>, vector<128x32xf32> -> vector<128x32xf32>
    %c0_3 = arith.constant 0 : index
    %c0_4 = arith.constant 0 : index
    %c0_5 = arith.constant 0 : index
    %3 = vector.load %arg9[%c0_3, %c0_4, %c0_5] : memref<5x3x256xf32, #tpu.memory_space<vmem>>, vector<1x3x256xf32>
    %4 = vector.shape_cast %3 : vector<1x3x256xf32> to vector<3x256xf32>
    %5 = vector.extract_strided_slice %4 {offsets = [0, 0], sizes = [1, 32], strides = [1, 1]} : vector<3x256xf32> to vector<1x32xf32>
    %6 = vector.broadcast %5 : vector<1x32xf32> to vector<128x32xf32>
    %7 = arith.addf %2, %6 : vector<128x32xf32>
    %cst_6 = arith.constant 0.000000e+00 : f32
    %8 = vector.broadcast %cst_6 : f32 to vector<128x32xf32>
    %9 = arith.maximumf %7, %8 : vector<128x32xf32>
    %10 = arith.truncf %9 : vector<128x32xf32> to vector<128x32xbf16>
    %c0_7 = arith.constant 0 : index
    %c0_8 = arith.constant 0 : index
    %11 = vector.load %arg3[%c0_7, %c0_8] : memref<512x128xbf16, #tpu.memory_space<vmem>>, vector<512x128xbf16>
    %cst_9 = arith.constant dense<0.000000e+00> : vector<512x32xf32>
    %12 = tpu.matmul %11, %10, %cst_9 {dimension_numbers = #tpu.dot_dimension_numbers<[1], [0], [0], [1], [0, 0, 1, 1], [], []>} : vector<512x128xbf16>, vector<128x32xbf16>, vector<512x32xf32> -> vector<512x32xf32>
    %13 = vector.extract_strided_slice %12 {offsets = [0, 0], sizes = [32, 32], strides = [1, 1]} : vector<512x32xf32> to vector<32x32xf32>
    %c0_10 = arith.constant 0 : index
    %c0_11 = arith.constant 0 : index
    %14 = vector.load %arg11[%c0_10, %c0_11] : memref<32x512xf32, #tpu.memory_space<vmem>>, vector<32x32xf32>
    tpu.vector_store %arg11[%c0_10, %c0_11], %13 {strides = array<i32>} : memref<32x512xf32, #tpu.memory_space<vmem>>, vector<32x32xf32>,
    %15 = vector.extract_strided_slice %12 {offsets = [32, 0], sizes = [32, 32], strides = [1, 1]} : vector<512x32xf32> to vector<32x32xf32>
    %c0_12 = arith.constant 0 : index
    %c32 = arith.constant 32 : index
    %16 = vector.load %arg11[%c0_12, %c32] : memref<32x512xf32, #tpu.memory_space<vmem>>, vector<32x32xf32>
    tpu.vector_store %arg11[%c0_12, %c32], %15 {strides = array<i32>} : memref<32x512xf32, #tpu.memory_space<vmem>>, vector<32x32xf32>,
    %17 = vector.extract_strided_slice %12 {offsets = [64, 0], sizes = [32, 32], strides = [1, 1]} : vector<512x32xf32> to vector<32x32xf32>
    %c0_13 = arith.constant 0 : index
    %c64 = arith.constant 64 : index
    %18 = vector.load %arg11[%c0_13, %c64] : memref<32x512xf32, #tpu.memory_space<vmem>>, vector<32x32xf32>
    tpu.vector_store %arg11[%c0_13, %c64], %17 {strides = array<i32>} : memref<32x512xf32, #tpu.memory_space<vmem>>, vector<32x32xf32>,
    %19 = vector.extract_strided_slice %12 {offsets = [96, 0], sizes = [32, 32], strides = [1, 1]} : vector<512x32xf32> to vector<32x32xf32>
    %c0_14 = arith.constant 0 : index
    %c96 = arith.constant 96 : index
    %20 = vector.load %arg11[%c0_14, %c96] : memref<32x512xf32, #tpu.memory_space<vmem>>, vector<32x32xf32>
    tpu.vector_store %arg11[%c0_14, %c96], %19 {strides = array<i32>} : memref<32x512xf32, #tpu.memory_space<vmem>>, vector<32x32xf32>,
    %21 = vector.extract_strided_slice %12 {offsets = [128, 0], sizes = [32, 32], strides = [1, 1]} : vector<512x32xf32> to vector<32x32xf32>
    %c0_15 = arith.constant 0 : index
    %c128 = arith.constant 128 : index
    %22 = vector.load %arg11[%c0_15, %c128] : memref<32x512xf32, #tpu.memory_space<vmem>>, vector<32x32xf32>
    tpu.vector_store %arg11[%c0_15, %c128], %21 {strides = array<i32>} : memref<32x512xf32, #tpu.memory_space<vmem>>, vector<32x32xf32>,
    %23 = vector.extract_strided_slice %12 {offsets = [160, 0], sizes = [32, 32], strides = [1, 1]} : vector<512x32xf32> to vector<32x32xf32>
    %c0_16 = arith.constant 0 : index
    %c160 = arith.constant 160 : index
    %24 = vector.load %arg11[%c0_16, %c160] : memref<32x512xf32, #tpu.memory_space<vmem>>, vector<32x32xf32>
    tpu.vector_store %arg11[%c0_16, %c160], %23 {strides = array<i32>} : memref<32x512xf32, #tpu.memory_space<vmem>>, vector<32x32xf32>,
    %25 = vector.extract_strided_slice %12 {offsets = [192, 0], sizes = [32, 32], strides = [1, 1]} : vector<512x32xf32> to vector<32x32xf32>
    %c0_17 = arith.constant 0 : index
    %c192 = arith.constant 192 : index
    %26 = vector.load %arg11[%c0_17, %c192] : memref<32x512xf32, #tpu.memory_space<vmem>>, vector<32x32xf32>
    tpu.vector_store %arg11[%c0_17, %c192], %25 {strides = array<i32>} : memref<32x512xf32, #tpu.memory_space<vmem>>, vector<32x32xf32>,
    %27 = vector.extract_strided_slice %12 {offsets = [224, 0], sizes = [32, 32], strides = [1, 1]} : vector<512x32xf32> to vector<32x32xf32>
    %c0_18 = arith.constant 0 : index
    %c224 = arith.constant 224 : index
    %28 = vector.load %arg11[%c0_18, %c224] : memref<32x512xf32, #tpu.memory_space<vmem>>, vector<32x32xf32>
    tpu.vector_store %arg11[%c0_18, %c224], %27 {strides = array<i32>} : memref<32x512xf32, #tpu.memory_space<vmem>>, vector<32x32xf32>,
    %29 = vector.extract_strided_slice %12 {offsets = [256, 0], sizes = [32, 32], strides = [1, 1]} : vector<512x32xf32> to vector<32x32xf32>
    %c0_19 = arith.constant 0 : index
    %c256 = arith.constant 256 : index
    %30 = vector.load %arg11[%c0_19, %c256] : memref<32x512xf32, #tpu.memory_space<vmem>>, vector<32x32xf32>
    tpu.vector_store %arg11[%c0_19, %c256], %29 {strides = array<i32>} : memref<32x512xf32, #tpu.memory_space<vmem>>, vector<32x32xf32>,
    %31 = vector.extract_strided_slice %12 {offsets = [288, 0], sizes = [32, 32], strides = [1, 1]} : vector<512x32xf32> to vector<32x32xf32>
    %c0_20 = arith.constant 0 : index
    %c288 = arith.constant 288 : index
    %32 = vector.load %arg11[%c0_20, %c288] : memref<32x512xf32, #tpu.memory_space<vmem>>, vector<32x32xf32>
    tpu.vector_store %arg11[%c0_20, %c288], %31 {strides = array<i32>} : memref<32x512xf32, #tpu.memory_space<vmem>>, vector<32x32xf32>,
    %33 = vector.extract_strided_slice %12 {offsets = [320, 0], sizes = [32, 32], strides = [1, 1]} : vector<512x32xf32> to vector<32x32xf32>
    %c0_21 = arith.constant 0 : index
    %c320 = arith.constant 320 : index
    %34 = vector.load %arg11[%c0_21, %c320] : memref<32x512xf32, #tpu.memory_space<vmem>>, vector<32x32xf32>
    tpu.vector_store %arg11[%c0_21, %c320], %33 {strides = array<i32>} : memref<32x512xf32, #tpu.memory_space<vmem>>, vector<32x32xf32>,
    %35 = vector.extract_strided_slice %12 {offsets = [352, 0], sizes = [32, 32], strides = [1, 1]} : vector<512x32xf32> to vector<32x32xf32>
    %c0_22 = arith.constant 0 : index
    %c352 = arith.constant 352 : index
    %36 = vector.load %arg11[%c0_22, %c352] : memref<32x512xf32, #tpu.memory_space<vmem>>, vector<32x32xf32>
    tpu.vector_store %arg11[%c0_22, %c352], %35 {strides = array<i32>} : memref<32x512xf32, #tpu.memory_space<vmem>>, vector<32x32xf32>,
    %37 = vector.extract_strided_slice %12 {offsets = [384, 0], sizes = [32, 32], strides = [1, 1]} : vector<512x32xf32> to vector<32x32xf32>
    %c0_23 = arith.constant 0 : index
    %c384 = arith.constant 384 : index
    %38 = vector.load %arg11[%c0_23, %c384] : memref<32x512xf32, #tpu.memory_space<vmem>>, vector<32x32xf32>
    tpu.vector_store %arg11[%c0_23, %c384], %37 {strides = array<i32>} : memref<32x512xf32, #tpu.memory_space<vmem>>, vector<32x32xf32>,
    %39 = vector.extract_strided_slice %12 {offsets = [416, 0], sizes = [32, 32], strides = [1, 1]} : vector<512x32xf32> to vector<32x32xf32>
    %c0_24 = arith.constant 0 : index
    %c416 = arith.constant 416 : index
    %40 = vector.load %arg11[%c0_24, %c416] : memref<32x512xf32, #tpu.memory_space<vmem>>, vector<32x32xf32>
    tpu.vector_store %arg11[%c0_24, %c416], %39 {strides = array<i32>} : memref<32x512xf32, #tpu.memory_space<vmem>>, vector<32x32xf32>,
    %41 = vector.extract_strided_slice %12 {offsets = [448, 0], sizes = [32, 32], strides = [1, 1]} : vector<512x32xf32> to vector<32x32xf32>
    %c0_25 = arith.constant 0 : index
    %c448 = arith.constant 448 : index
    %42 = vector.load %arg11[%c0_25, %c448] : memref<32x512xf32, #tpu.memory_space<vmem>>, vector<32x32xf32>
    tpu.vector_store %arg11[%c0_25, %c448], %41 {strides = array<i32>} : memref<32x512xf32, #tpu.memory_space<vmem>>, vector<32x32xf32>,
    %43 = vector.extract_strided_slice %12 {offsets = [480, 0], sizes = [32, 32], strides = [1, 1]} : vector<512x32xf32> to vector<32x32xf32>
    %c0_26 = arith.constant 0 : index
    %c480 = arith.constant 480 : index
    %44 = vector.load %arg11[%c0_26, %c480] : memref<32x512xf32, #tpu.memory_space<vmem>>, vector<32x32xf32>
    tpu.vector_store %arg11[%c0_26, %c480], %43 {strides = array<i32>} : memref<32x512xf32, #tpu.memory_space<vmem>>, vector<32x32xf32>,
    %c0_27 = arith.constant 0 : index
    %c0_28 = arith.constant 0 : index
    %45 = vector.load %arg11[%c0_27, %c0_28] : memref<32x512xf32, #tpu.memory_space<vmem>>, vector<32x512xf32>
    %46 = arith.truncf %45 : vector<32x512xf32> to vector<32x512xbf16>
    %c0_29 = arith.constant 0 : index
    %c0_30 = arith.constant 0 : index
    %47 = vector.load %arg4[%c0_29, %c0_30] : memref<512x64xbf16, #tpu.memory_space<vmem>>, vector<512x64xbf16>
    %cst_31 = arith.constant dense<0.000000e+00> : vector<32x64xf32>
    %48 = tpu.matmul %46, %47, %cst_31 {dimension_numbers = #tpu.dot_dimension_numbers<[1], [0], [0], [1], [0, 0, 1, 1], [], []>} : vector<32x512xbf16>, vector<512x64xbf16>, vector<32x64xf32> -> vector<32x64xf32>
    %c1 = arith.constant 1 : index
    %c0_32 = arith.constant 0 : index
    %c0_33 = arith.constant 0 : index
    %49 = vector.load %arg9[%c1, %c0_32, %c0_33] : memref<5x3x256xf32, #tpu.memory_space<vmem>>, vector<1x3x256xf32>
    %50 = vector.shape_cast %49 : vector<1x3x256xf32> to vector<3x256xf32>
    %51 = vector.extract_strided_slice %50 {offsets = [0, 0], sizes = [1, 64], strides = [1, 1]} : vector<3x256xf32> to vector<1x64xf32>
    %52 = vector.broadcast %51 : vector<1x64xf32> to vector<32x64xf32>
    %53 = arith.addf %48, %52 : vector<32x64xf32>
    %cst_34 = arith.constant dense<0.000000e+00> : vector<64xf32>
    %54 = vector.multi_reduction <add>, %53, %cst_34 [0] : vector<32x64xf32> to vector<64xf32>
    %55 = vector.shape_cast %54 : vector<64xf32> to vector<1x64xf32>
    %cst_35 = arith.constant 3.200000e+01 : f32
    %56 = vector.broadcast %cst_35 : f32 to vector<1x64xf32>
    %57 = arith.divf %55, %56 : vector<1x64xf32>
    %58 = vector.broadcast %57 : vector<1x64xf32> to vector<32x64xf32>
    %59 = arith.subf %53, %58 : vector<32x64xf32>
    %60 = arith.mulf %59, %59 : vector<32x64xf32>
    %cst_36 = arith.constant dense<0.000000e+00> : vector<64xf32>
    %61 = vector.multi_reduction <add>, %60, %cst_36 [0] : vector<32x64xf32> to vector<64xf32>
    %62 = vector.shape_cast %61 : vector<64xf32> to vector<1x64xf32>
    %cst_37 = arith.constant 3.200000e+01 : f32
    %63 = vector.broadcast %cst_37 : f32 to vector<1x64xf32>
    %64 = arith.divf %62, %63 : vector<1x64xf32>
    %65 = vector.broadcast %57 : vector<1x64xf32> to vector<32x64xf32>
    %66 = arith.subf %53, %65 : vector<32x64xf32>
    %cst_38 = arith.constant 9.99999974E-6 : f32
    %67 = vector.broadcast %cst_38 : f32 to vector<1x64xf32>
    %68 = arith.addf %64, %67 : vector<1x64xf32>
    %69 = math.rsqrt %68 : vector<1x64xf32>
    %70 = vector.broadcast %69 : vector<1x64xf32> to vector<32x64xf32>
    %71 = arith.mulf %66, %70 : vector<32x64xf32>
    %72 = vector.extract_strided_slice %50 {offsets = [1, 0], sizes = [1, 64], strides = [1, 1]} : vector<3x256xf32> to vector<1x64xf32>
    %73 = vector.broadcast %72 : vector<1x64xf32> to vector<32x64xf32>
    %74 = arith.mulf %71, %73 : vector<32x64xf32>
    %75 = vector.extract_strided_slice %50 {offsets = [2, 0], sizes = [1, 64], strides = [1, 1]} : vector<3x256xf32> to vector<1x64xf32>
    %76 = vector.broadcast %75 : vector<1x64xf32> to vector<32x64xf32>
    %77 = arith.addf %74, %76 : vector<32x64xf32>
    %cst_39 = arith.constant 0.000000e+00 : f32
    %78 = vector.broadcast %cst_39 : f32 to vector<32x64xf32>
    %79 = arith.cmpf ogt, %77, %78 : vector<32x64xf32>
    %cst_40 = arith.constant 2.000000e-01 : f32
    %80 = vector.broadcast %cst_40 : f32 to vector<32x64xf32>
    %81 = arith.mulf %80, %77 : vector<32x64xf32>
    %82 = arith.select %79, %77, %81 : vector<32x64xi1>, vector<32x64xf32>
    %83 = arith.truncf %82 : vector<32x64xf32> to vector<32x64xbf16>
    %c0_41 = arith.constant 0 : index
    %c0_42 = arith.constant 0 : index
    %84 = vector.load %arg5[%c0_41, %c0_42] : memref<128x32xbf16, #tpu.memory_space<vmem>>, vector<128x32xbf16>
    %cst_43 = arith.constant dense<0.000000e+00> : vector<128x64xf32>
    %85 = tpu.matmul %84, %83, %cst_43 {dimension_numbers = #tpu.dot_dimension_numbers<[1], [0], [0], [1], [0, 0, 1, 1], [], []>} : vector<128x32xbf16>, vector<32x64xbf16>, vector<128x64xf32> -> vector<128x64xf32>
    %86 = vector.extract_strided_slice %85 {offsets = [0, 0], sizes = [8, 64], strides = [1, 1]} : vector<128x64xf32> to vector<8x64xf32>
    %c0_44 = arith.constant 0 : index
    %c0_45 = arith.constant 0 : index
    %87 = vector.load %arg12[%c0_44, %c0_45] : memref<8x1024xf32, #tpu.memory_space<vmem>>, vector<8x64xf32>
    tpu.vector_store %arg12[%c0_44, %c0_45], %86 {strides = array<i32>} : memref<8x1024xf32, #tpu.memory_space<vmem>>, vector<8x64xf32>,
    %88 = vector.extract_strided_slice %85 {offsets = [8, 0], sizes = [8, 64], strides = [1, 1]} : vector<128x64xf32> to vector<8x64xf32>
    %c0_46 = arith.constant 0 : index
    %c64_47 = arith.constant 64 : index
    %89 = vector.load %arg12[%c0_46, %c64_47] : memref<8x1024xf32, #tpu.memory_space<vmem>>, vector<8x64xf32>
    tpu.vector_store %arg12[%c0_46, %c64_47], %88 {strides = array<i32>} : memref<8x1024xf32, #tpu.memory_space<vmem>>, vector<8x64xf32>,
    %90 = vector.extract_strided_slice %85 {offsets = [16, 0], sizes = [8, 64], strides = [1, 1]} : vector<128x64xf32> to vector<8x64xf32>
    %c0_48 = arith.constant 0 : index
    %c128_49 = arith.constant 128 : index
    %91 = vector.load %arg12[%c0_48, %c128_49] : memref<8x1024xf32, #tpu.memory_space<vmem>>, vector<8x64xf32>
    tpu.vector_store %arg12[%c0_48, %c128_49], %90 {strides = array<i32>} : memref<8x1024xf32, #tpu.memory_space<vmem>>, vector<8x64xf32>,
    %92 = vector.extract_strided_slice %85 {offsets = [24, 0], sizes = [8, 64], strides = [1, 1]} : vector<128x64xf32> to vector<8x64xf32>
    %c0_50 = arith.constant 0 : index
    %c192_51 = arith.constant 192 : index
    %93 = vector.load %arg12[%c0_50, %c192_51] : memref<8x1024xf32, #tpu.memory_space<vmem>>, vector<8x64xf32>
    tpu.vector_store %arg12[%c0_50, %c192_51], %92 {strides = array<i32>} : memref<8x1024xf32, #tpu.memory_space<vmem>>, vector<8x64xf32>,
    %94 = vector.extract_strided_slice %85 {offsets = [32, 0], sizes = [8, 64], strides = [1, 1]} : vector<128x64xf32> to vector<8x64xf32>
    %c0_52 = arith.constant 0 : index
    %c256_53 = arith.constant 256 : index
    %95 = vector.load %arg12[%c0_52, %c256_53] : memref<8x1024xf32, #tpu.memory_space<vmem>>, vector<8x64xf32>
    tpu.vector_store %arg12[%c0_52, %c256_53], %94 {strides = array<i32>} : memref<8x1024xf32, #tpu.memory_space<vmem>>, vector<8x64xf32>,
    %96 = vector.extract_strided_slice %85 {offsets = [40, 0], sizes = [8, 64], strides = [1, 1]} : vector<128x64xf32> to vector<8x64xf32>
    %c0_54 = arith.constant 0 : index
    %c320_55 = arith.constant 320 : index
    %97 = vector.load %arg12[%c0_54, %c320_55] : memref<8x1024xf32, #tpu.memory_space<vmem>>, vector<8x64xf32>
    tpu.vector_store %arg12[%c0_54, %c320_55], %96 {strides = array<i32>} : memref<8x1024xf32, #tpu.memory_space<vmem>>, vector<8x64xf32>,
    %98 = vector.extract_strided_slice %85 {offsets = [48, 0], sizes = [8, 64], strides = [1, 1]} : vector<128x64xf32> to vector<8x64xf32>
    %c0_56 = arith.constant 0 : index
    %c384_57 = arith.constant 384 : index
    %99 = vector.load %arg12[%c0_56, %c384_57] : memref<8x1024xf32, #tpu.memory_space<vmem>>, vector<8x64xf32>
    tpu.vector_store %arg12[%c0_56, %c384_57], %98 {strides = array<i32>} : memref<8x1024xf32, #tpu.memory_space<vmem>>, vector<8x64xf32>,
    %100 = vector.extract_strided_slice %85 {offsets = [56, 0], sizes = [8, 64], strides = [1, 1]} : vector<128x64xf32> to vector<8x64xf32>
    %c0_58 = arith.constant 0 : index
    %c448_59 = arith.constant 448 : index
    %101 = vector.load %arg12[%c0_58, %c448_59] : memref<8x1024xf32, #tpu.memory_space<vmem>>, vector<8x64xf32>
    tpu.vector_store %arg12[%c0_58, %c448_59], %100 {strides = array<i32>} : memref<8x1024xf32, #tpu.memory_space<vmem>>, vector<8x64xf32>,
    %102 = vector.extract_strided_slice %85 {offsets = [64, 0], sizes = [8, 64], strides = [1, 1]} : vector<128x64xf32> to vector<8x64xf32>
    %c0_60 = arith.constant 0 : index
    %c512 = arith.constant 512 : index
    %103 = vector.load %arg12[%c0_60, %c512] : memref<8x1024xf32, #tpu.memory_space<vmem>>, vector<8x64xf32>
    tpu.vector_store %arg12[%c0_60, %c512], %102 {strides = array<i32>} : memref<8x1024xf32, #tpu.memory_space<vmem>>, vector<8x64xf32>,
    %104 = vector.extract_strided_slice %85 {offsets = [72, 0], sizes = [8, 64], strides = [1, 1]} : vector<128x64xf32> to vector<8x64xf32>
    %c0_61 = arith.constant 0 : index
    %c576 = arith.constant 576 : index
    %105 = vector.load %arg12[%c0_61, %c576] : memref<8x1024xf32, #tpu.memory_space<vmem>>, vector<8x64xf32>
    tpu.vector_store %arg12[%c0_61, %c576], %104 {strides = array<i32>} : memref<8x1024xf32, #tpu.memory_space<vmem>>, vector<8x64xf32>,
    %106 = vector.extract_strided_slice %85 {offsets = [80, 0], sizes = [8, 64], strides = [1, 1]} : vector<128x64xf32> to vector<8x64xf32>
    %c0_62 = arith.constant 0 : index
    %c640 = arith.constant 640 : index
    %107 = vector.load %arg12[%c0_62, %c640] : memref<8x1024xf32, #tpu.memory_space<vmem>>, vector<8x64xf32>
    tpu.vector_store %arg12[%c0_62, %c640], %106 {strides = array<i32>} : memref<8x1024xf32, #tpu.memory_space<vmem>>, vector<8x64xf32>,
    %108 = vector.extract_strided_slice %85 {offsets = [88, 0], sizes = [8, 64], strides = [1, 1]} : vector<128x64xf32> to vector<8x64xf32>
    %c0_63 = arith.constant 0 : index
    %c704 = arith.constant 704 : index
    %109 = vector.load %arg12[%c0_63, %c704] : memref<8x1024xf32, #tpu.memory_space<vmem>>, vector<8x64xf32>
    tpu.vector_store %arg12[%c0_63, %c704], %108 {strides = array<i32>} : memref<8x1024xf32, #tpu.memory_space<vmem>>, vector<8x64xf32>,
    %110 = vector.extract_strided_slice %85 {offsets = [96, 0], sizes = [8, 64], strides = [1, 1]} : vector<128x64xf32> to vector<8x64xf32>
    %c0_64 = arith.constant 0 : index
    %c768 = arith.constant 768 : index
    %111 = vector.load %arg12[%c0_64, %c768] : memref<8x1024xf32, #tpu.memory_space<vmem>>, vector<8x64xf32>
    tpu.vector_store %arg12[%c0_64, %c768], %110 {strides = array<i32>} : memref<8x1024xf32, #tpu.memory_space<vmem>>, vector<8x64xf32>,
    %112 = vector.extract_strided_slice %85 {offsets = [104, 0], sizes = [8, 64], strides = [1, 1]} : vector<128x64xf32> to vector<8x64xf32>
    %c0_65 = arith.constant 0 : index
    %c832 = arith.constant 832 : index
    %113 = vector.load %arg12[%c0_65, %c832] : memref<8x1024xf32, #tpu.memory_space<vmem>>, vector<8x64xf32>
    tpu.vector_store %arg12[%c0_65, %c832], %112 {strides = array<i32>} : memref<8x1024xf32, #tpu.memory_space<vmem>>, vector<8x64xf32>,
    %114 = vector.extract_strided_slice %85 {offsets = [112, 0], sizes = [8, 64], strides = [1, 1]} : vector<128x64xf32> to vector<8x64xf32>
    %c0_66 = arith.constant 0 : index
    %c896 = arith.constant 896 : index
    %115 = vector.load %arg12[%c0_66, %c896] : memref<8x1024xf32, #tpu.memory_space<vmem>>, vector<8x64xf32>
    tpu.vector_store %arg12[%c0_66, %c896], %114 {strides = array<i32>} : memref<8x1024xf32, #tpu.memory_space<vmem>>, vector<8x64xf32>,
    %116 = vector.extract_strided_slice %85 {offsets = [120, 0], sizes = [8, 64], strides = [1, 1]} : vector<128x64xf32> to vector<8x64xf32>
    %c0_67 = arith.constant 0 : index
    %c960 = arith.constant 960 : index
    %117 = vector.load %arg12[%c0_67, %c960] : memref<8x1024xf32, #tpu.memory_space<vmem>>, vector<8x64xf32>
    tpu.vector_store %arg12[%c0_67, %c960], %116 {strides = array<i32>} : memref<8x1024xf32, #tpu.memory_space<vmem>>, vector<8x64xf32>,
    %c0_68 = arith.constant 0 : index
    %c0_69 = arith.constant 0 : index
    %118 = vector.load %arg12[%c0_68, %c0_69] : memref<8x1024xf32, #tpu.memory_space<vmem>>, vector<8x1024xf32>
    %119 = arith.truncf %118 : vector<8x1024xf32> to vector<8x1024xbf16>
    %c0_70 = arith.constant 0 : index
    %c0_71 = arith.constant 0 : index
    %120 = vector.load %arg6[%c0_70, %c0_71] : memref<1024x128xbf16, #tpu.memory_space<vmem>>, vector<1024x128xbf16>
    %cst_72 = arith.constant dense<0.000000e+00> : vector<8x128xf32>
    %121 = tpu.matmul %119, %120, %cst_72 {dimension_numbers = #tpu.dot_dimension_numbers<[1], [0], [0], [1], [0, 0, 1, 1], [], []>} : vector<8x1024xbf16>, vector<1024x128xbf16>, vector<8x128xf32> -> vector<8x128xf32>
    %c2 = arith.constant 2 : index
    %c0_73 = arith.constant 0 : index
    %c0_74 = arith.constant 0 : index
    %122 = vector.load %arg9[%c2, %c0_73, %c0_74] : memref<5x3x256xf32, #tpu.memory_space<vmem>>, vector<1x3x256xf32>
    %123 = vector.shape_cast %122 : vector<1x3x256xf32> to vector<3x256xf32>
    %124 = vector.extract_strided_slice %123 {offsets = [0, 0], sizes = [1, 128], strides = [1, 1]} : vector<3x256xf32> to vector<1x128xf32>
    %125 = vector.broadcast %124 : vector<1x128xf32> to vector<8x128xf32>
    %126 = arith.addf %121, %125 : vector<8x128xf32>
    %cst_75 = arith.constant dense<0.000000e+00> : vector<128xf32>
    %127 = vector.multi_reduction <add>, %126, %cst_75 [0] : vector<8x128xf32> to vector<128xf32>
    %128 = vector.shape_cast %127 : vector<128xf32> to vector<1x128xf32>
    %cst_76 = arith.constant 8.000000e+00 : f32
    %129 = vector.broadcast %cst_76 : f32 to vector<1x128xf32>
    %130 = arith.divf %128, %129 : vector<1x128xf32>
    %131 = vector.broadcast %130 : vector<1x128xf32> to vector<8x128xf32>
    %132 = arith.subf %126, %131 : vector<8x128xf32>
    %133 = arith.mulf %132, %132 : vector<8x128xf32>
    %cst_77 = arith.constant dense<0.000000e+00> : vector<128xf32>
    %134 = vector.multi_reduction <add>, %133, %cst_77 [0] : vector<8x128xf32> to vector<128xf32>
    %135 = vector.shape_cast %134 : vector<128xf32> to vector<1x128xf32>
    %cst_78 = arith.constant 8.000000e+00 : f32
    %136 = vector.broadcast %cst_78 : f32 to vector<1x128xf32>
    %137 = arith.divf %135, %136 : vector<1x128xf32>
    %138 = vector.broadcast %130 : vector<1x128xf32> to vector<8x128xf32>
    %139 = arith.subf %126, %138 : vector<8x128xf32>
    %cst_79 = arith.constant 9.99999974E-6 : f32
    %140 = vector.broadcast %cst_79 : f32 to vector<1x128xf32>
    %141 = arith.addf %137, %140 : vector<1x128xf32>
    %142 = math.rsqrt %141 : vector<1x128xf32>
    %143 = vector.broadcast %142 : vector<1x128xf32> to vector<8x128xf32>
    %144 = arith.mulf %139, %143 : vector<8x128xf32>
    %145 = vector.extract_strided_slice %123 {offsets = [1, 0], sizes = [1, 128], strides = [1, 1]} : vector<3x256xf32> to vector<1x128xf32>
    %146 = vector.broadcast %145 : vector<1x128xf32> to vector<8x128xf32>
    %147 = arith.mulf %144, %146 : vector<8x128xf32>
    %148 = vector.extract_strided_slice %123 {offsets = [2, 0], sizes = [1, 128], strides = [1, 1]} : vector<3x256xf32> to vector<1x128xf32>
    %149 = vector.broadcast %148 : vector<1x128xf32> to vector<8x128xf32>
    %150 = arith.addf %147, %149 : vector<8x128xf32>
    %cst_80 = arith.constant 0.000000e+00 : f32
    %151 = vector.broadcast %cst_80 : f32 to vector<8x128xf32>
    %152 = arith.cmpf ogt, %150, %151 : vector<8x128xf32>
    %cst_81 = arith.constant 2.000000e-01 : f32
    %153 = vector.broadcast %cst_81 : f32 to vector<8x128xf32>
    %154 = arith.mulf %153, %150 : vector<8x128xf32>
    %155 = arith.select %152, %150, %154 : vector<8x128xi1>, vector<8x128xf32>
    %156 = vector.extract_strided_slice %155 {offsets = [0, 0], sizes = [1, 128], strides = [1, 1]} : vector<8x128xf32> to vector<1x128xf32>
    %c0_82 = arith.constant 0 : index
    %c0_83 = arith.constant 0 : index
    %157 = vector.load %arg13[%c0_82, %c0_83] : memref<2x512xf32, #tpu.memory_space<vmem>>, vector<1x128xf32>
    tpu.vector_store %arg13[%c0_82, %c0_83], %156 {strides = array<i32>} : memref<2x512xf32, #tpu.memory_space<vmem>>, vector<1x128xf32>,
    %158 = vector.extract_strided_slice %155 {offsets = [1, 0], sizes = [1, 128], strides = [1, 1]} : vector<8x128xf32> to vector<1x128xf32>
    %c0_84 = arith.constant 0 : index
    %c128_85 = arith.constant 128 : index
    %159 = vector.load %arg13[%c0_84, %c128_85] : memref<2x512xf32, #tpu.memory_space<vmem>>, vector<1x128xf32>
    tpu.vector_store %arg13[%c0_84, %c128_85], %158 {strides = array<i32>} : memref<2x512xf32, #tpu.memory_space<vmem>>, vector<1x128xf32>,
    %160 = vector.extract_strided_slice %155 {offsets = [2, 0], sizes = [1, 128], strides = [1, 1]} : vector<8x128xf32> to vector<1x128xf32>
    %c0_86 = arith.constant 0 : index
    %c256_87 = arith.constant 256 : index
    %161 = vector.load %arg13[%c0_86, %c256_87] : memref<2x512xf32, #tpu.memory_space<vmem>>, vector<1x128xf32>
    tpu.vector_store %arg13[%c0_86, %c256_87], %160 {strides = array<i32>} : memref<2x512xf32, #tpu.memory_space<vmem>>, vector<1x128xf32>,
    %162 = vector.extract_strided_slice %155 {offsets = [3, 0], sizes = [1, 128], strides = [1, 1]} : vector<8x128xf32> to vector<1x128xf32>
    %c0_88 = arith.constant 0 : index
    %c384_89 = arith.constant 384 : index
    %163 = vector.load %arg13[%c0_88, %c384_89] : memref<2x512xf32, #tpu.memory_space<vmem>>, vector<1x128xf32>
    tpu.vector_store %arg13[%c0_88, %c384_89], %162 {strides = array<i32>} : memref<2x512xf32, #tpu.memory_space<vmem>>, vector<1x128xf32>,
    %164 = vector.extract_strided_slice %155 {offsets = [4, 0], sizes = [1, 128], strides = [1, 1]} : vector<8x128xf32> to vector<1x128xf32>
    %c1_90 = arith.constant 1 : index
    %c0_91 = arith.constant 0 : index
    %165 = vector.load %arg13[%c1_90, %c0_91] : memref<2x512xf32, #tpu.memory_space<vmem>>, vector<1x128xf32>
    tpu.vector_store %arg13[%c1_90, %c0_91], %164 {strides = array<i32>} : memref<2x512xf32, #tpu.memory_space<vmem>>, vector<1x128xf32>,
    %166 = vector.extract_strided_slice %155 {offsets = [5, 0], sizes = [1, 128], strides = [1, 1]} : vector<8x128xf32> to vector<1x128xf32>
    %c1_92 = arith.constant 1 : index
    %c128_93 = arith.constant 128 : index
    %167 = vector.load %arg13[%c1_92, %c128_93] : memref<2x512xf32, #tpu.memory_space<vmem>>, vector<1x128xf32>
    tpu.vector_store %arg13[%c1_92, %c128_93], %166 {strides = array<i32>} : memref<2x512xf32, #tpu.memory_space<vmem>>, vector<1x128xf32>,
    %168 = vector.extract_strided_slice %155 {offsets = [6, 0], sizes = [1, 128], strides = [1, 1]} : vector<8x128xf32> to vector<1x128xf32>
    %c1_94 = arith.constant 1 : index
    %c256_95 = arith.constant 256 : index
    %169 = vector.load %arg13[%c1_94, %c256_95] : memref<2x512xf32, #tpu.memory_space<vmem>>, vector<1x128xf32>
    tpu.vector_store %arg13[%c1_94, %c256_95], %168 {strides = array<i32>} : memref<2x512xf32, #tpu.memory_space<vmem>>, vector<1x128xf32>,
    %170 = vector.extract_strided_slice %155 {offsets = [7, 0], sizes = [1, 128], strides = [1, 1]} : vector<8x128xf32> to vector<1x128xf32>
    %c1_96 = arith.constant 1 : index
    %c384_97 = arith.constant 384 : index
    %171 = vector.load %arg13[%c1_96, %c384_97] : memref<2x512xf32, #tpu.memory_space<vmem>>, vector<1x128xf32>
    tpu.vector_store %arg13[%c1_96, %c384_97], %170 {strides = array<i32>} : memref<2x512xf32, #tpu.memory_space<vmem>>, vector<1x128xf32>,
    %c0_98 = arith.constant 0 : index
    %c0_99 = arith.constant 0 : index
    %172 = vector.load %arg13[%c0_98, %c0_99] : memref<2x512xf32, #tpu.memory_space<vmem>>, vector<2x512xf32>
    %173 = arith.truncf %172 : vector<2x512xf32> to vector<2x512xbf16>
    %c0_100 = arith.constant 0 : index
    %c0_101 = arith.constant 0 : index
    %174 = vector.load %arg7[%c0_100, %c0_101] : memref<512x256xbf16, #tpu.memory_space<vmem>>, vector<512x256xbf16>
    %cst_102 = arith.constant dense<0.000000e+00> : vector<2x256xf32>
    %175 = tpu.matmul %173, %174, %cst_102 {dimension_numbers = #tpu.dot_dimension_numbers<[1], [0], [0], [1], [0, 0, 1, 1], [], []>} : vector<2x512xbf16>, vector<512x256xbf16>, vector<2x256xf32> -> vector<2x256xf32>
    %c3 = arith.constant 3 : index
    %c0_103 = arith.constant 0 : index
    %c0_104 = arith.constant 0 : index
    %176 = vector.load %arg9[%c3, %c0_103, %c0_104] : memref<5x3x256xf32, #tpu.memory_space<vmem>>, vector<1x3x256xf32>
    %177 = vector.shape_cast %176 : vector<1x3x256xf32> to vector<3x256xf32>
    %178 = vector.extract_strided_slice %177 {offsets = [0, 0], sizes = [1, 256], strides = [1, 1]} : vector<3x256xf32> to vector<1x256xf32>
    %179 = vector.broadcast %178 : vector<1x256xf32> to vector<2x256xf32>
    %180 = arith.addf %175, %179 : vector<2x256xf32>
    %cst_105 = arith.constant dense<0.000000e+00> : vector<256xf32>
    %181 = vector.multi_reduction <add>, %180, %cst_105 [0] : vector<2x256xf32> to vector<256xf32>
    %182 = vector.shape_cast %181 : vector<256xf32> to vector<1x256xf32>
    %cst_106 = arith.constant 2.000000e+00 : f32
    %183 = vector.broadcast %cst_106 : f32 to vector<1x256xf32>
    %184 = arith.divf %182, %183 : vector<1x256xf32>
    %185 = vector.broadcast %184 : vector<1x256xf32> to vector<2x256xf32>
    %186 = arith.subf %180, %185 : vector<2x256xf32>
    %187 = arith.mulf %186, %186 : vector<2x256xf32>
    %cst_107 = arith.constant dense<0.000000e+00> : vector<256xf32>
    %188 = vector.multi_reduction <add>, %187, %cst_107 [0] : vector<2x256xf32> to vector<256xf32>
    %189 = vector.shape_cast %188 : vector<256xf32> to vector<1x256xf32>
    %cst_108 = arith.constant 2.000000e+00 : f32
    %190 = vector.broadcast %cst_108 : f32 to vector<1x256xf32>
    %191 = arith.divf %189, %190 : vector<1x256xf32>
    %192 = vector.broadcast %184 : vector<1x256xf32> to vector<2x256xf32>
    %193 = arith.subf %180, %192 : vector<2x256xf32>
    %cst_109 = arith.constant 9.99999974E-6 : f32
    %194 = vector.broadcast %cst_109 : f32 to vector<1x256xf32>
    %195 = arith.addf %191, %194 : vector<1x256xf32>
    %196 = math.rsqrt %195 : vector<1x256xf32>
    %197 = vector.broadcast %196 : vector<1x256xf32> to vector<2x256xf32>
    %198 = arith.mulf %193, %197 : vector<2x256xf32>
    %199 = vector.extract_strided_slice %177 {offsets = [1, 0], sizes = [1, 256], strides = [1, 1]} : vector<3x256xf32> to vector<1x256xf32>
    %200 = vector.broadcast %199 : vector<1x256xf32> to vector<2x256xf32>
    %201 = arith.mulf %198, %200 : vector<2x256xf32>
    %202 = vector.extract_strided_slice %177 {offsets = [2, 0], sizes = [1, 256], strides = [1, 1]} : vector<3x256xf32> to vector<1x256xf32>
    %203 = vector.broadcast %202 : vector<1x256xf32> to vector<2x256xf32>
    %204 = arith.addf %201, %203 : vector<2x256xf32>
    %cst_110 = arith.constant 0.000000e+00 : f32
    %205 = vector.broadcast %cst_110 : f32 to vector<2x256xf32>
    %206 = arith.cmpf ogt, %204, %205 : vector<2x256xf32>
    %cst_111 = arith.constant 2.000000e-01 : f32
    %207 = vector.broadcast %cst_111 : f32 to vector<2x256xf32>
    %208 = arith.mulf %207, %204 : vector<2x256xf32>
    %209 = arith.select %206, %204, %208 : vector<2x256xi1>, vector<2x256xf32>
    %210 = arith.truncf %209 : vector<2x256xf32> to vector<2x256xbf16>
    %c0_112 = arith.constant 0 : index
    %c0_113 = arith.constant 0 : index
    %211 = vector.load %arg8[%c0_112, %c0_113] : memref<256x128xbf16, #tpu.memory_space<vmem>>, vector<256x128xbf16>
    %cst_114 = arith.constant dense<0.000000e+00> : vector<2x128xf32>
    %212 = tpu.matmul %210, %211, %cst_114 {dimension_numbers = #tpu.dot_dimension_numbers<[1], [0], [0], [1], [0, 0, 1, 1], [], []>} : vector<2x256xbf16>, vector<256x128xbf16>, vector<2x128xf32> -> vector<2x128xf32>
    %c4 = arith.constant 4 : index
    %c0_115 = arith.constant 0 : index
    %c0_116 = arith.constant 0 : index
    %213 = vector.load %arg9[%c4, %c0_115, %c0_116] : memref<5x3x256xf32, #tpu.memory_space<vmem>>, vector<1x3x256xf32>
    %214 = vector.shape_cast %213 : vector<1x3x256xf32> to vector<3x256xf32>
    %215 = vector.extract_strided_slice %214 {offsets = [0, 0], sizes = [1, 128], strides = [1, 1]} : vector<3x256xf32> to vector<1x128xf32>
    %216 = vector.broadcast %215 : vector<1x128xf32> to vector<2x128xf32>
    %217 = arith.addf %212, %216 : vector<2x128xf32>
    %cst_117 = arith.constant 0.000000e+00 : f32
    %218 = vector.broadcast %cst_117 : f32 to vector<2x128xf32>
    %219 = arith.maximumf %217, %218 : vector<2x128xf32>
    %c0_118 = arith.constant 0 : index
    %c0_119 = arith.constant 0 : index
    %220 = vector.load %arg10[%c0_118, %c0_119] : memref<2x128xf32, #tpu.memory_space<vmem>>, vector<2x128xf32>
    tpu.vector_store %arg10[%c0_118, %c0_119], %219 {strides = array<i32>} : memref<2x128xf32, #tpu.memory_space<vmem>>, vector<2x128xf32>,
    return
  }
  func.func @transform_0(%arg0: i32) -> (i32, i32) {
    %c0_i32 = arith.constant 0 : i32
    %c0_i32_0 = arith.constant 0 : i32
    %c0_i32_1 = arith.constant 0 : i32
    return %c0_i32, %c0_i32_0 : i32, i32
  }
  func.func @transform_1(%arg0: i32) -> (i32, i32) {
    %c0_i32 = arith.constant 0 : i32
    %c0_i32_0 = arith.constant 0 : i32
    %c0_i32_1 = arith.constant 0 : i32
    return %c0_i32, %c0_i32_0 : i32, i32
  }
  func.func @transform_2(%arg0: i32) -> (i32, i32) {
    %c0_i32 = arith.constant 0 : i32
    %c0_i32_0 = arith.constant 0 : i32
    %c0_i32_1 = arith.constant 0 : i32
    return %c0_i32, %c0_i32_0 : i32, i32
  }
  func.func @transform_3(%arg0: i32) -> (i32, i32) {
    %c0_i32 = arith.constant 0 : i32
    %c0_i32_0 = arith.constant 0 : i32
    %c0_i32_1 = arith.constant 0 : i32
    return %c0_i32, %c0_i32_0 : i32, i32
  }
  func.func @transform_4(%arg0: i32) -> (i32, i32) {
    %c0_i32 = arith.constant 0 : i32
    %c0_i32_0 = arith.constant 0 : i32
    %c0_i32_1 = arith.constant 0 : i32
    return %c0_i32, %c0_i32_0 : i32, i32
  }
  func.func @transform_5(%arg0: i32) -> (i32, i32) {
    %c0_i32 = arith.constant 0 : i32
    %c0_i32_0 = arith.constant 0 : i32
    %c0_i32_1 = arith.constant 0 : i32
    return %c0_i32, %c0_i32_0 : i32, i32
  }
  func.func @transform_6(%arg0: i32) -> (i32, i32) {
    %c0_i32 = arith.constant 0 : i32
    %c0_i32_0 = arith.constant 0 : i32
    %c0_i32_1 = arith.constant 0 : i32
    return %c0_i32, %c0_i32_0 : i32, i32
  }
  func.func @transform_7(%arg0: i32) -> (i32, i32) {
    %c0_i32 = arith.constant 0 : i32
    %c0_i32_0 = arith.constant 0 : i32
    %c0_i32_1 = arith.constant 0 : i32
    return %c0_i32, %c0_i32_0 : i32, i32
  }
  func.func @transform_8(%arg0: i32) -> (i32, i32, i32) {
    %c0_i32 = arith.constant 0 : i32
    %c0_i32_0 = arith.constant 0 : i32
    %c0_i32_1 = arith.constant 0 : i32
    %c0_i32_2 = arith.constant 0 : i32
    return %c0_i32, %c0_i32_0, %c0_i32_1 : i32, i32, i32
  }
  func.func @transform_9(%arg0: i32) -> (i32, i32) {
    %c0_i32 = arith.constant 0 : i32
    %c0_i32_0 = arith.constant 0 : i32
    %c0_i32_1 = arith.constant 0 : i32
    return %c0_i32, %c0_i32_0 : i32, i32
  }
}

</mosaic_0001>

<llo_original>
// kernel: discriminator_forward.1
$region0: #{discriminator_forward.1}
  #allocation0 [shape = 'u32[]', space=smem, size = 0x4, offset = 0x4, fixed_abs, tag = 'smem constant byte address 0x4 - core index']
  #allocation1 [shape = 'u32[144,128]{1,0:T(1,128)}', space=vmem, size = 0x12000, scoped, tag = 'internal scratch']
  #allocation2 [shape = 'f32[32,512]{1,0:T(8,128)}', space=vmem, size = 0x10000, scoped, tag = 'scratch operand']
  #allocation3 [shape = 'f32[8,1024]{1,0:T(8,128)}', space=vmem, size = 0x8000, scoped, tag = 'scratch operand']
  #allocation4 [shape = 'f32[2,512]{1,0:T(2,128)}', space=vmem, size = 0x1000, scoped, tag = 'scratch operand']
  %s0 = inlined_call_operand.vmem [shape: bf16[128,256], index: 0, kind: input, shape index: {}]
  %s1 = inlined_call_operand.vmem [shape: bf16[256,32], index: 1, kind: input, shape index: {}]
  %s2 = inlined_call_operand.vmem [shape: bf16[512,128], index: 2, kind: input, shape index: {}]
  %s3 = inlined_call_operand.vmem [shape: bf16[512,64], index: 3, kind: input, shape index: {}]
  %s4 = inlined_call_operand.vmem [shape: bf16[128,32], index: 4, kind: input, shape index: {}]
  %s5 = inlined_call_operand.vmem [shape: bf16[1024,128], index: 5, kind: input, shape index: {}]
  %s6 = inlined_call_operand.vmem [shape: bf16[512,256], index: 6, kind: input, shape index: {}]
  %s7 = inlined_call_operand.vmem [shape: bf16[256,128], index: 7, kind: input, shape index: {}]
  %s8 = inlined_call_operand.vmem [shape: f32[5,3,256], index: 8, kind: input, shape index: {}]
  %s9 = inlined_call_operand.vmem [shape: f32[2,128], index: 9, kind: output, shape index: {}]
  %s10 = sld [smem:[#allocation0]]
  $region46: #{discriminator_forward.1} parent=0
    _
  %s12 = ssub.s32 1, %s10
  %s13 = scalar_select 0, %s12, %s10
  // Predicated region
  $region2: #{discriminator_forward.1} parent=0 // pred_check
    _
  $region3: #{discriminator_forward.1} parent=0 // pred_check_branch
    %15 = sbr.rel (0) target = $region5
  $region4: #{discriminator_forward.1} parent=0 // pred_region
    _
  $region5: #{discriminator_forward.1} parent=0 // pred_fallthru
    _
  // Predicated region
  $region6: #{discriminator_forward.1} parent=0 // pred_check
    _
  $region7: #{discriminator_forward.1} parent=0 // pred_check_branch
    %17 = sbr.rel (0) target = $region9
  $region8: #{discriminator_forward.1} parent=0 // pred_region
    _
  $region9: #{discriminator_forward.1} parent=0 // pred_fallthru
    _
  // Predicated region
  $region10: #{discriminator_forward.1} parent=0 // pred_check
    _
  $region11: #{discriminator_forward.1} parent=0 // pred_check_branch
    %19 = sbr.rel (0) target = $region13
  $region12: #{discriminator_forward.1} parent=0 // pred_region
    _
  $region13: #{discriminator_forward.1} parent=0 // pred_fallthru
    _
  // Predicated region
  $region14: #{discriminator_forward.1} parent=0 // pred_check
    _
  $region15: #{discriminator_forward.1} parent=0 // pred_check_branch
    %21 = sbr.rel (0) target = $region17
  $region16: #{discriminator_forward.1} parent=0 // pred_region
    _
  $region17: #{discriminator_forward.1} parent=0 // pred_fallthru
    _
  // Predicated region
  $region18: #{discriminator_forward.1} parent=0 // pred_check
    _
  $region19: #{discriminator_forward.1} parent=0 // pred_check_branch
    %23 = sbr.rel (0) target = $region21
  $region20: #{discriminator_forward.1} parent=0 // pred_region
    _
  $region21: #{discriminator_forward.1} parent=0 // pred_fallthru
    _
  // Predicated region
  $region22: #{discriminator_forward.1} parent=0 // pred_check
    _
  $region23: #{discriminator_forward.1} parent=0 // pred_check_branch
    %25 = sbr.rel (0) target = $region25
  $region24: #{discriminator_forward.1} parent=0 // pred_region
    _
  $region25: #{discriminator_forward.1} parent=0 // pred_fallthru
    _
  // Predicated region
  $region26: #{discriminator_forward.1} parent=0 // pred_check
    _
  $region27: #{discriminator_forward.1} parent=0 // pred_check_branch
    %27 = sbr.rel (0) target = $region29
  $region28: #{discriminator_forward.1} parent=0 // pred_region
    _
  $region29: #{discriminator_forward.1} parent=0 // pred_fallthru
    _
  // Predicated region
  $region30: #{discriminator_forward.1} parent=0 // pred_check
    _
  $region31: #{discriminator_forward.1} parent=0 // pred_check_branch
    %29 = sbr.rel (0) target = $region33
  $region32: #{discriminator_forward.1} parent=0 // pred_region
    _
  $region33: #{discriminator_forward.1} parent=0 // pred_fallthru
    _
  // Predicated region
  $region34: #{discriminator_forward.1} parent=0 // pred_check
    _
  $region35: #{discriminator_forward.1} parent=0 // pred_check_branch
    %31 = sbr.rel (0) target = $region37
  $region36: #{discriminator_forward.1} parent=0 // pred_region
    _
  $region37: #{discriminator_forward.1} parent=0 // pred_fallthru
    _
  %v33 = vld [vmem:[%s0] sm:$0xff]
  %v34 = vld [vmem:[%s0 + $0x8] sm:$0xff]
  %v35 = vld [vmem:[%s0 + $0x10] sm:$0xff]
  %v36 = vld [vmem:[%s0 + $0x18] sm:$0xff]
  %v37 = vld [vmem:[%s0 + $0x20] sm:$0xff]
  %v38 = vld [vmem:[%s0 + $0x28] sm:$0xff]
  %v39 = vld [vmem:[%s0 + $0x30] sm:$0xff]
  %v40 = vld [vmem:[%s0 + $0x38] sm:$0xff]
  %v41 = vld [vmem:[%s0 + $0x40] sm:$0xff]
  %v42 = vld [vmem:[%s0 + $0x48] sm:$0xff]
  %v43 = vld [vmem:[%s0 + $0x50] sm:$0xff]
  %v44 = vld [vmem:[%s0 + $0x58] sm:$0xff]
  %v45 = vld [vmem:[%s0 + $0x60] sm:$0xff]
  %v46 = vld [vmem:[%s0 + $0x68] sm:$0xff]
  %v47 = vld [vmem:[%s0 + $0x70] sm:$0xff]
  %v48 = vld [vmem:[%s0 + $0x78] sm:$0xff]
  %v49 = vld [vmem:[%s1] sm:$0xf]
  %v50 = vld [vmem:[%s1 + $0x4] sm:$0xf]
  %v51 = vld [vmem:[%s1 + $0x8] sm:$0xf]
  %v52 = vld [vmem:[%s1 + $0xc] sm:$0xf]
  %v53 = vld [vmem:[%s1 + $0x10] sm:$0xf]
  %v54 = vld [vmem:[%s1 + $0x14] sm:$0xf]
  %v55 = vld [vmem:[%s1 + $0x18] sm:$0xf]
  %v56 = vld [vmem:[%s1 + $0x1c] sm:$0xf]
  %v57 = vld [vmem:[%s1 + $0x20] sm:$0xf]
  %v58 = vld [vmem:[%s1 + $0x24] sm:$0xf]
  %v59 = vld [vmem:[%s1 + $0x28] sm:$0xf]
  %v60 = vld [vmem:[%s1 + $0x2c] sm:$0xf]
  %v61 = vld [vmem:[%s1 + $0x30] sm:$0xf]
  %v62 = vld [vmem:[%s1 + $0x34] sm:$0xf]
  %v63 = vld [vmem:[%s1 + $0x38] sm:$0xf]
  %v64 = vld [vmem:[%s1 + $0x3c] sm:$0xf]
  %v65 = vld [vmem:[%s1 + $0x40] sm:$0xf]
  %v66 = vld [vmem:[%s1 + $0x44] sm:$0xf]
  %v67 = vld [vmem:[%s1 + $0x48] sm:$0xf]
  %v68 = vld [vmem:[%s1 + $0x4c] sm:$0xf]
  %v69 = vld [vmem:[%s1 + $0x50] sm:$0xf]
  %v70 = vld [vmem:[%s1 + $0x54] sm:$0xf]
  %v71 = vld [vmem:[%s1 + $0x58] sm:$0xf]
  %v72 = vld [vmem:[%s1 + $0x5c] sm:$0xf]
  %v73 = vld [vmem:[%s1 + $0x60] sm:$0xf]
  %v74 = vld [vmem:[%s1 + $0x64] sm:$0xf]
  %v75 = vld [vmem:[%s1 + $0x68] sm:$0xf]
  %v76 = vld [vmem:[%s1 + $0x6c] sm:$0xf]
  %v77 = vld [vmem:[%s1 + $0x70] sm:$0xf]
  %v78 = vld [vmem:[%s1 + $0x74] sm:$0xf]
  %v79 = vld [vmem:[%s1 + $0x78] sm:$0xf]
  %v80 = vld [vmem:[%s1 + $0x7c] sm:$0xf]
  %v81 = vld [vmem:[%s8] sm:$0x77]
  %v82 = vlaneseq
  %v83 = vshrl.u32 %v82, 7
  %v84 = vsub.s32 0, %v83
  %v85 = vrot.slane %v81, %v84
  %v102 = vunpack.c.l.b16 %v33
  %v103 = vunpack.c.h.b16 %v33
  %v104 = vunpack.c.l.b16 %v34
  %v105 = vunpack.c.h.b16 %v34
  %v106 = vunpack.c.l.b16 %v35
  %v107 = vunpack.c.h.b16 %v35
  %v108 = vunpack.c.l.b16 %v36
  %v109 = vunpack.c.h.b16 %v36
  %v110 = vunpack.c.l.b16 %v37
  %v111 = vunpack.c.h.b16 %v37
  %v112 = vunpack.c.l.b16 %v38
  %v113 = vunpack.c.h.b16 %v38
  %v114 = vunpack.c.l.b16 %v39
  %v115 = vunpack.c.h.b16 %v39
  %v116 = vunpack.c.l.b16 %v40
  %v117 = vunpack.c.h.b16 %v40
  %v118 = vunpack.c.l.b16 %v41
  %v119 = vunpack.c.h.b16 %v41
  %v120 = vunpack.c.l.b16 %v42
  %v121 = vunpack.c.h.b16 %v42
  %v122 = vunpack.c.l.b16 %v43
  %v123 = vunpack.c.h.b16 %v43
  %v124 = vunpack.c.l.b16 %v44
  %v125 = vunpack.c.h.b16 %v44
  %v126 = vunpack.c.l.b16 %v45
  %v127 = vunpack.c.h.b16 %v45
  %v128 = vunpack.c.l.b16 %v46
  %v129 = vunpack.c.h.b16 %v46
  %v130 = vunpack.c.l.b16 %v47
  %v131 = vunpack.c.h.b16 %v47
  %v132 = vunpack.c.l.b16 %v48
  %v133 = vunpack.c.h.b16 %v48
  %v134 = vpack.c.b16 %v104, %v102
  %v135 = vpack.c.b16 %v105, %v103
  %v136 = vpack.c.b16 %v108, %v106
  %v137 = vpack.c.b16 %v109, %v107
  %v138 = vpack.c.b16 %v112, %v110
  %v139 = vpack.c.b16 %v113, %v111
  %v140 = vpack.c.b16 %v116, %v114
  %v141 = vpack.c.b16 %v117, %v115
  %v142 = vpack.c.b16 %v120, %v118
  %v143 = vpack.c.b16 %v121, %v119
  %v144 = vpack.c.b16 %v124, %v122
  %v145 = vpack.c.b16 %v125, %v123
  %v146 = vpack.c.b16 %v128, %v126
  %v147 = vpack.c.b16 %v129, %v127
  %v148 = vpack.c.b16 %v132, %v130
  %v149 = vpack.c.b16 %v133, %v131
  %v198 = vunpack.c.l.b16 %v49
  %v199 = vunpack.c.l.b16 %v50
  %v200 = vunpack.c.l.b16 %v51
  %v201 = vunpack.c.l.b16 %v52
  %v202 = vunpack.c.l.b16 %v53
  %v203 = vunpack.c.l.b16 %v54
  %v204 = vunpack.c.l.b16 %v55
  %v205 = vunpack.c.l.b16 %v56
  %v206 = vunpack.c.l.b16 %v57
  %v207 = vunpack.c.l.b16 %v58
  %v208 = vunpack.c.l.b16 %v59
  %v209 = vunpack.c.l.b16 %v60
  %v210 = vunpack.c.l.b16 %v61
  %v211 = vunpack.c.l.b16 %v62
  %v212 = vunpack.c.l.b16 %v63
  %v213 = vunpack.c.l.b16 %v64
  %v214 = vunpack.c.l.b16 %v65
  %v215 = vunpack.c.l.b16 %v66
  %v216 = vunpack.c.l.b16 %v67
  %v217 = vunpack.c.l.b16 %v68
  %v218 = vunpack.c.l.b16 %v69
  %v219 = vunpack.c.l.b16 %v70
  %v220 = vunpack.c.l.b16 %v71
  %v221 = vunpack.c.l.b16 %v72
  %v222 = vunpack.c.l.b16 %v73
  %v223 = vunpack.c.l.b16 %v74
  %v224 = vunpack.c.l.b16 %v75
  %v225 = vunpack.c.l.b16 %v76
  %v226 = vunpack.c.l.b16 %v77
  %v227 = vunpack.c.l.b16 %v78
  %v228 = vunpack.c.l.b16 %v79
  %v229 = vunpack.c.l.b16 %v80
  %v230 = vpack.c.b16 %v199, %v198
  %v231 = vpack.c.b16 %v201, %v200
  %v232 = vpack.c.b16 %v203, %v202
  %v233 = vpack.c.b16 %v205, %v204
  %v234 = vpack.c.b16 %v207, %v206
  %v235 = vpack.c.b16 %v209, %v208
  %v236 = vpack.c.b16 %v211, %v210
  %v237 = vpack.c.b16 %v213, %v212
  %v238 = vpack.c.b16 %v215, %v214
  %v239 = vpack.c.b16 %v217, %v216
  %v240 = vpack.c.b16 %v219, %v218
  %v241 = vpack.c.b16 %v221, %v220
  %v242 = vpack.c.b16 %v223, %v222
  %v243 = vpack.c.b16 %v225, %v224
  %v244 = vpack.c.b16 %v227, %v226
  %v245 = vpack.c.b16 %v229, %v228
  %262 = vmatprep.subr.bf16.mxu0 0
  %263 = vmatpush1.bf16.msra.mxu0 %v230
  %264 = vmatprep.subr.bf16.mxu0 0
  %265 = vmatpush1.bf16.msra.mxu0 %v231
  %266 = vmatprep.subr.bf16.mxu0 0
  %267 = vmatpush1.bf16.msra.mxu0 %v232
  %268 = vmatprep.subr.bf16.mxu0 0
  %269 = vmatpush1.bf16.msra.mxu0 %v233
  %270 = vmatprep.subr.bf16.mxu0 0
  %271 = vmatpush1.bf16.msra.mxu0 %v234
  %272 = vmatprep.subr.bf16.mxu0 0
  %273 = vmatpush1.bf16.msra.mxu0 %v235
  %274 = vmatprep.subr.bf16.mxu0 0
  %275 = vmatpush1.bf16.msra.mxu0 %v236
  %276 = vmatprep.subr.bf16.mxu0 0
  %277 = vmatpush1.bf16.msra.mxu0 %v237
  %278 = vmatprep.subr.bf16.mxu0 0
  %279 = vmatpush1.bf16.msra.mxu0 %v238
  %280 = vmatprep.subr.bf16.mxu0 0
  %281 = vmatpush1.bf16.msra.mxu0 %v239
  %282 = vmatprep.subr.bf16.mxu0 0
  %283 = vmatpush1.bf16.msra.mxu0 %v240
  %284 = vmatprep.subr.bf16.mxu0 0
  %285 = vmatpush1.bf16.msra.mxu0 %v241
  %286 = vmatprep.subr.bf16.mxu0 0
  %287 = vmatpush1.bf16.msra.mxu0 %v242
  %288 = vmatprep.subr.bf16.mxu0 0
  %289 = vmatpush1.bf16.msra.mxu0 %v243
  %290 = vmatprep.subr.bf16.mxu0 0
  %291 = vmatpush1.bf16.msra.mxu0 %v244
  %292 = vmatprep.subr.bf16.mxu0 0
  %293 = vmatpush1.bf16.msra.mxu0 %v245
  %294 = vmatprep.mubr.bf16.mxu0 %v135
  %295 = vmatmul.mubr.bf16.gmra.mrb[0].mxu0 %v134
  %v296 = vpop.f32.mrb[0].mxu0
  %v297 = vadd.f32 %v85, %v296
  %v298 = vpop.f32.mrb[0].mxu0
  %v299 = vpop.f32.mrb[0].mxu0
  %v300 = vadd.f32 %v85, %v299
  %v301 = vpop.f32.mrb[0].mxu0
  %302 = vmatprep.mubr.bf16.mxu0 %v137
  %303 = vmatmul.mubr.bf16.gmra.mrb[0].mxu0 %v136
  %v304 = vpop.f32.mrb[0].mxu0
  %v305 = vadd.f32 %v85, %v304
  %v306 = vpop.f32.mrb[0].mxu0
  %v307 = vpop.f32.mrb[0].mxu0
  %v308 = vadd.f32 %v85, %v307
  %v309 = vpop.f32.mrb[0].mxu0
  %310 = vmatprep.mubr.bf16.mxu0 %v139
  %311 = vmatmul.mubr.bf16.gmra.mrb[0].mxu0 %v138
  %v312 = vpop.f32.mrb[0].mxu0
  %v313 = vadd.f32 %v85, %v312
  %v314 = vpop.f32.mrb[0].mxu0
  %v315 = vpop.f32.mrb[0].mxu0
  %v316 = vadd.f32 %v85, %v315
  %v317 = vpop.f32.mrb[0].mxu0
  %318 = vmatprep.mubr.bf16.mxu0 %v141
  %319 = vmatmul.mubr.bf16.gmra.mrb[0].mxu0 %v140
  %v320 = vpop.f32.mrb[0].mxu0
  %v321 = vadd.f32 %v85, %v320
  %v322 = vpop.f32.mrb[0].mxu0
  %v323 = vpop.f32.mrb[0].mxu0
  %v324 = vadd.f32 %v85, %v323
  %v325 = vpop.f32.mrb[0].mxu0
  %326 = vmatprep.mubr.bf16.mxu0 %v143
  %327 = vmatmul.mubr.bf16.gmra.mrb[0].mxu0 %v142
  %v328 = vpop.f32.mrb[0].mxu0
  %v329 = vadd.f32 %v85, %v328
  %v330 = vpop.f32.mrb[0].mxu0
  %v331 = vpop.f32.mrb[0].mxu0
  %v332 = vadd.f32 %v85, %v331
  %v333 = vpop.f32.mrb[0].mxu0
  %334 = vmatprep.mubr.bf16.mxu0 %v145
  %335 = vmatmul.mubr.bf16.gmra.mrb[0].mxu0 %v144
  %v336 = vpop.f32.mrb[0].mxu0
  %v337 = vadd.f32 %v85, %v336
  %v338 = vpop.f32.mrb[0].mxu0
  %v339 = vpop.f32.mrb[0].mxu0
  %v340 = vadd.f32 %v85, %v339
  %v341 = vpop.f32.mrb[0].mxu0
  %342 = vmatprep.mubr.bf16.mxu0 %v147
  %343 = vmatmul.mubr.bf16.gmra.mrb[0].mxu0 %v146
  %v344 = vpop.f32.mrb[0].mxu0
  %v345 = vadd.f32 %v85, %v344
  %v346 = vpop.f32.mrb[0].mxu0
  %v347 = vpop.f32.mrb[0].mxu0
  %v348 = vadd.f32 %v85, %v347
  %v349 = vpop.f32.mrb[0].mxu0
  %350 = vmatprep.mubr.bf16.mxu0 %v149
  %351 = vmatmul.mubr.bf16.gmra.mrb[0].mxu0 %v148
  %v352 = vpop.f32.mrb[0].mxu0
  %v353 = vadd.f32 %v85, %v352
  %v354 = vpop.f32.mrb[0].mxu0
  %v355 = vpop.f32.mrb[0].mxu0
  %v356 = vadd.f32 %v85, %v355
  %v357 = vpop.f32.mrb[0].mxu0
  %358 = vdwg.mxu0
  %v359 = vmax.f32 %v297, 0.0
  %v360 = vmax.f32 %v300, 0.0
  %v361 = vmax.f32 %v305, 0.0
  %v362 = vmax.f32 %v308, 0.0
  %v363 = vmax.f32 %v313, 0.0
  %v364 = vmax.f32 %v316, 0.0
  %v365 = vmax.f32 %v321, 0.0
  %v366 = vmax.f32 %v324, 0.0
  %v367 = vmax.f32 %v329, 0.0
  %v368 = vmax.f32 %v332, 0.0
  %v369 = vmax.f32 %v337, 0.0
  %v370 = vmax.f32 %v340, 0.0
  %v371 = vmax.f32 %v345, 0.0
  %v372 = vmax.f32 %v348, 0.0
  %v373 = vmax.f32 %v353, 0.0
  %v374 = vmax.f32 %v356, 0.0
  %v375 = vpack.c.bf16 %v360, %v359
  %v376 = vpack.c.bf16 %v362, %v361
  %v377 = vpack.c.bf16 %v364, %v363
  %v378 = vpack.c.bf16 %v366, %v365
  %v379 = vpack.c.bf16 %v368, %v367
  %v380 = vpack.c.bf16 %v370, %v369
  %v381 = vpack.c.bf16 %v372, %v371
  %v382 = vpack.c.bf16 %v374, %v373
  %v383 = vld [vmem:[%s2] sm:$0xf]
  %v384 = vld [vmem:[%s2 + $0x4] sm:$0xf]
  %v385 = vld [vmem:[%s2 + $0x8] sm:$0xf]
  %v386 = vld [vmem:[%s2 + $0xc] sm:$0xf]
  %v387 = vld [vmem:[%s2 + $0x10] sm:$0xf]
  %v388 = vld [vmem:[%s2 + $0x14] sm:$0xf]
  %v389 = vld [vmem:[%s2 + $0x18] sm:$0xf]
  %v390 = vld [vmem:[%s2 + $0x1c] sm:$0xf]
  %v391 = vld [vmem:[%s2 + $0x20] sm:$0xf]
  %v392 = vld [vmem:[%s2 + $0x24] sm:$0xf]
  %v393 = vld [vmem:[%s2 + $0x28] sm:$0xf]
  %v394 = vld [vmem:[%s2 + $0x2c] sm:$0xf]
  %v395 = vld [vmem:[%s2 + $0x30] sm:$0xf]
  %v396 = vld [vmem:[%s2 + $0x34] sm:$0xf]
  %v397 = vld [vmem:[%s2 + $0x38] sm:$0xf]
  %v398 = vld [vmem:[%s2 + $0x3c] sm:$0xf]
  %v399 = vld [vmem:[%s2 + $0x40] sm:$0xf]
  %v400 = vld [vmem:[%s2 + $0x44] sm:$0xf]
  %v401 = vld [vmem:[%s2 + $0x48] sm:$0xf]
  %v402 = vld [vmem:[%s2 + $0x4c] sm:$0xf]
  %v403 = vld [vmem:[%s2 + $0x50] sm:$0xf]
  %v404 = vld [vmem:[%s2 + $0x54] sm:$0xf]
  %v405 = vld [vmem:[%s2 + $0x58] sm:$0xf]
  %v406 = vld [vmem:[%s2 + $0x5c] sm:$0xf]
  %v407 = vld [vmem:[%s2 + $0x60] sm:$0xf]
  %v408 = vld [vmem:[%s2 + $0x64] sm:$0xf]
  %v409 = vld [vmem:[%s2 + $0x68] sm:$0xf]
  %v410 = vld [vmem:[%s2 + $0x6c] sm:$0xf]
  %v411 = vld [vmem:[%s2 + $0x70] sm:$0xf]
  %v412 = vld [vmem:[%s2 + $0x74] sm:$0xf]
  %v413 = vld [vmem:[%s2 + $0x78] sm:$0xf]
  %v414 = vld [vmem:[%s2 + $0x7c] sm:$0xf]
  %v415 = vld [vmem:[%s2 + $0x80] sm:$0xf]
  %v416 = vld [vmem:[%s2 + $0x84] sm:$0xf]
  %v417 = vld [vmem:[%s2 + $0x88] sm:$0xf]
  %v418 = vld [vmem:[%s2 + $0x8c] sm:$0xf]
  %v419 = vld [vmem:[%s2 + $0x90] sm:$0xf]
  %v420 = vld [vmem:[%s2 + $0x94] sm:$0xf]
  %v421 = vld [vmem:[%s2 + $0x98] sm:$0xf]
  %v422 = vld [vmem:[%s2 + $0x9c] sm:$0xf]
  %v423 = vld [vmem:[%s2 + $0xa0] sm:$0xf]
  %v424 = vld [vmem:[%s2 + $0xa4] sm:$0xf]
  %v425 = vld [vmem:[%s2 + $0xa8] sm:$0xf]
  %v426 = vld [vmem:[%s2 + $0xac] sm:$0xf]
  %v427 = vld [vmem:[%s2 + $0xb0] sm:$0xf]
  %v428 = vld [vmem:[%s2 + $0xb4] sm:$0xf]
  %v429 = vld [vmem:[%s2 + $0xb8] sm:$0xf]
  %v430 = vld [vmem:[%s2 + $0xbc] sm:$0xf]
  %v431 = vld [vmem:[%s2 + $0xc0] sm:$0xf]
  %v432 = vld [vmem:[%s2 + $0xc4] sm:$0xf]
  %v433 = vld [vmem:[%s2 + $0xc8] sm:$0xf]
  %v434 = vld [vmem:[%s2 + $0xcc] sm:$0xf]
  %v435 = vld [vmem:[%s2 + $0xd0] sm:$0xf]
  %v436 = vld [vmem:[%s2 + $0xd4] sm:$0xf]
  %v437 = vld [vmem:[%s2 + $0xd8] sm:$0xf]
  %v438 = vld [vmem:[%s2 + $0xdc] sm:$0xf]
  %v439 = vld [vmem:[%s2 + $0xe0] sm:$0xf]
  %v440 = vld [vmem:[%s2 + $0xe4] sm:$0xf]
  %v441 = vld [vmem:[%s2 + $0xe8] sm:$0xf]
  %v442 = vld [vmem:[%s2 + $0xec] sm:$0xf]
  %v443 = vld [vmem:[%s2 + $0xf0] sm:$0xf]
  %v444 = vld [vmem:[%s2 + $0xf4] sm:$0xf]
  %v445 = vld [vmem:[%s2 + $0xf8] sm:$0xf]
  %v446 = vld [vmem:[%s2 + $0xfc] sm:$0xf]
  %v511 = vunpack.c.l.b16 %v383
  %v512 = vunpack.c.l.b16 %v384
  %v513 = vunpack.c.l.b16 %v385
  %v514 = vunpack.c.l.b16 %v386
  %v515 = vunpack.c.l.b16 %v387
  %v516 = vunpack.c.l.b16 %v388
  %v517 = vunpack.c.l.b16 %v389
  %v518 = vunpack.c.l.b16 %v390
  %v519 = vunpack.c.l.b16 %v391
  %v520 = vunpack.c.l.b16 %v392
  %v521 = vunpack.c.l.b16 %v393
  %v522 = vunpack.c.l.b16 %v394
  %v523 = vunpack.c.l.b16 %v395
  %v524 = vunpack.c.l.b16 %v396
  %v525 = vunpack.c.l.b16 %v397
  %v526 = vunpack.c.l.b16 %v398
  %v527 = vunpack.c.l.b16 %v399
  %v528 = vunpack.c.l.b16 %v400
  %v529 = vunpack.c.l.b16 %v401
  %v530 = vunpack.c.l.b16 %v402
  %v531 = vunpack.c.l.b16 %v403
  %v532 = vunpack.c.l.b16 %v404
  %v533 = vunpack.c.l.b16 %v405
  %v534 = vunpack.c.l.b16 %v406
  %v535 = vunpack.c.l.b16 %v407
  %v536 = vunpack.c.l.b16 %v408
  %v537 = vunpack.c.l.b16 %v409
  %v538 = vunpack.c.l.b16 %v410
  %v539 = vunpack.c.l.b16 %v411
  %v540 = vunpack.c.l.b16 %v412
  %v541 = vunpack.c.l.b16 %v413
  %v542 = vunpack.c.l.b16 %v414
  %v543 = vunpack.c.l.b16 %v415
  %v544 = vunpack.c.l.b16 %v416
  %v545 = vunpack.c.l.b16 %v417
  %v546 = vunpack.c.l.b16 %v418
  %v547 = vunpack.c.l.b16 %v419
  %v548 = vunpack.c.l.b16 %v420
  %v549 = vunpack.c.l.b16 %v421
  %v550 = vunpack.c.l.b16 %v422
  %v551 = vunpack.c.l.b16 %v423
  %v552 = vunpack.c.l.b16 %v424
  %v553 = vunpack.c.l.b16 %v425
  %v554 = vunpack.c.l.b16 %v426
  %v555 = vunpack.c.l.b16 %v427
  %v556 = vunpack.c.l.b16 %v428
  %v557 = vunpack.c.l.b16 %v429
  %v558 = vunpack.c.l.b16 %v430
  %v559 = vunpack.c.l.b16 %v431
  %v560 = vunpack.c.l.b16 %v432
  %v561 = vunpack.c.l.b16 %v433
  %v562 = vunpack.c.l.b16 %v434
  %v563 = vunpack.c.l.b16 %v435
  %v564 = vunpack.c.l.b16 %v436
  %v565 = vunpack.c.l.b16 %v437
  %v566 = vunpack.c.l.b16 %v438
  %v567 = vunpack.c.l.b16 %v439
  %v568 = vunpack.c.l.b16 %v440
  %v569 = vunpack.c.l.b16 %v441
  %v570 = vunpack.c.l.b16 %v442
  %v571 = vunpack.c.l.b16 %v443
  %v572 = vunpack.c.l.b16 %v444
  %v573 = vunpack.c.l.b16 %v445
  %v574 = vunpack.c.l.b16 %v446
  %v575 = vpack.c.b16 %v512, %v511
  %v576 = vpack.c.b16 %v514, %v513
  %v577 = vpack.c.b16 %v516, %v515
  %v578 = vpack.c.b16 %v518, %v517
  %v579 = vpack.c.b16 %v520, %v519
  %v580 = vpack.c.b16 %v522, %v521
  %v581 = vpack.c.b16 %v524, %v523
  %v582 = vpack.c.b16 %v526, %v525
  %v583 = vpack.c.b16 %v528, %v527
  %v584 = vpack.c.b16 %v530, %v529
  %v585 = vpack.c.b16 %v532, %v531
  %v586 = vpack.c.b16 %v534, %v533
  %v587 = vpack.c.b16 %v536, %v535
  %v588 = vpack.c.b16 %v538, %v537
  %v589 = vpack.c.b16 %v540, %v539
  %v590 = vpack.c.b16 %v542, %v541
  %v591 = vpack.c.b16 %v544, %v543
  %v592 = vpack.c.b16 %v546, %v545
  %v593 = vpack.c.b16 %v548, %v547
  %v594 = vpack.c.b16 %v550, %v549
  %v595 = vpack.c.b16 %v552, %v551
  %v596 = vpack.c.b16 %v554, %v553
  %v597 = vpack.c.b16 %v556, %v555
  %v598 = vpack.c.b16 %v558, %v557
  %v599 = vpack.c.b16 %v560, %v559
  %v600 = vpack.c.b16 %v562, %v561
  %v601 = vpack.c.b16 %v564, %v563
  %v602 = vpack.c.b16 %v566, %v565
  %v603 = vpack.c.b16 %v568, %v567
  %v604 = vpack.c.b16 %v570, %v569
  %v605 = vpack.c.b16 %v572, %v571
  %v606 = vpack.c.b16 %v574, %v573
  %639 = vmatprep.subr.bf16.mxu0 0
  %640 = vmatpush1.bf16.msra.mxu0 %v375
  %641 = vmatprep.subr.bf16.mxu0 0
  %642 = vmatpush1.bf16.msra.mxu0 %v376
  %643 = vmatprep.subr.bf16.mxu0 0
  %644 = vmatpush1.bf16.msra.mxu0 %v377
  %645 = vmatprep.subr.bf16.mxu0 0
  %646 = vmatpush1.bf16.msra.mxu0 %v378
  %647 = vmatprep.subr.bf16.mxu0 0
  %648 = vmatpush1.bf16.msra.mxu0 %v379
  %649 = vmatprep.subr.bf16.mxu0 0
  %650 = vmatpush1.bf16.msra.mxu0 %v380
  %651 = vmatprep.subr.bf16.mxu0 0
  %652 = vmatpush1.bf16.msra.mxu0 %v381
  %653 = vmatprep.subr.bf16.mxu0 0
  %654 = vmatpush1.bf16.msra.mxu0 %v382
  %655 = vmatprep.subr.bf16.mxu0 0
  %656 = vmatpush1.bf16.msra.mxu0 0
  %657 = vmatprep.subr.bf16.mxu0 0
  %658 = vmatpush1.bf16.msra.mxu0 0
  %659 = vmatprep.subr.bf16.mxu0 0
  %660 = vmatpush1.bf16.msra.mxu0 0
  %661 = vmatprep.subr.bf16.mxu0 0
  %662 = vmatpush1.bf16.msra.mxu0 0
  %663 = vmatprep.subr.bf16.mxu0 0
  %664 = vmatpush1.bf16.msra.mxu0 0
  %665 = vmatprep.subr.bf16.mxu0 0
  %666 = vmatpush1.bf16.msra.mxu0 0
  %667 = vmatprep.subr.bf16.mxu0 0
  %668 = vmatpush1.bf16.msra.mxu0 0
  %669 = vmatprep.subr.bf16.mxu0 0
  %670 = vmatpush1.bf16.msra.mxu0 0
  %671 = vmatprep.mubr.bf16.mxu0 0
  %672 = vmatmul.mubr.bf16.gmra.mrb[0].mxu0 %v575
  %v673 = vpop.f32.mrb[0].mxu0
  %v674 = vadd.f32 0.0, %v673
  %v675 = vpop.f32.mrb[0].mxu0
  %v676 = vpop.f32.mrb[0].mxu0
  %v677 = vadd.f32 0.0, %v676
  %v678 = vpop.f32.mrb[0].mxu0
  %679 = vmatprep.mubr.bf16.mxu0 0
  %680 = vmatmul.mubr.bf16.gmra.mrb[0].mxu0 %v576
  %v681 = vpop.f32.mrb[0].mxu0
  %v682 = vadd.f32 0.0, %v681
  %v683 = vpop.f32.mrb[0].mxu0
  %v684 = vpop.f32.mrb[0].mxu0
  %v685 = vadd.f32 0.0, %v684
  %v686 = vpop.f32.mrb[0].mxu0
  %687 = vmatprep.mubr.bf16.mxu0 0
  %688 = vmatmul.mubr.bf16.gmra.mrb[0].mxu0 %v577
  %v689 = vpop.f32.mrb[0].mxu0
  %v690 = vadd.f32 0.0, %v689
  %v691 = vpop.f32.mrb[0].mxu0
  %v692 = vpop.f32.mrb[0].mxu0
  %v693 = vadd.f32 0.0, %v692
  %v694 = vpop.f32.mrb[0].mxu0
  %695 = vmatprep.mubr.bf16.mxu0 0
  %696 = vmatmul.mubr.bf16.gmra.mrb[0].mxu0 %v578
  %v697 = vpop.f32.mrb[0].mxu0
  %v698 = vadd.f32 0.0, %v697
  %v699 = vpop.f32.mrb[0].mxu0
  %v700 = vpop.f32.mrb[0].mxu0
  %v701 = vadd.f32 0.0, %v700
  %v702 = vpop.f32.mrb[0].mxu0
  %703 = vmatprep.mubr.bf16.mxu0 0
  %704 = vmatmul.mubr.bf16.gmra.mrb[0].mxu0 %v579
  %v705 = vpop.f32.mrb[0].mxu0
  %v706 = vadd.f32 0.0, %v705
  %v707 = vpop.f32.mrb[0].mxu0
  %v708 = vpop.f32.mrb[0].mxu0
  %v709 = vadd.f32 0.0, %v708
  %v710 = vpop.f32.mrb[0].mxu0
  %711 = vmatprep.mubr.bf16.mxu0 0
  %712 = vmatmul.mubr.bf16.gmra.mrb[0].mxu0 %v580
  %v713 = vpop.f32.mrb[0].mxu0
  %v714 = vadd.f32 0.0, %v713
  %v715 = vpop.f32.mrb[0].mxu0
  %v716 = vpop.f32.mrb[0].mxu0
  %v717 = vadd.f32 0.0, %v716
  %v718 = vpop.f32.mrb[0].mxu0
  %719 = vmatprep.mubr.bf16.mxu0 0
  %720 = vmatmul.mubr.bf16.gmra.mrb[0].mxu0 %v581
  %v721 = vpop.f32.mrb[0].mxu0
  %v722 = vadd.f32 0.0, %v721
  %v723 = vpop.f32.mrb[0].mxu0
  %v724 = vpop.f32.mrb[0].mxu0
  %v725 = vadd.f32 0.0, %v724
  %v726 = vpop.f32.mrb[0].mxu0
  %727 = vmatprep.mubr.bf16.mxu0 0
  %728 = vmatmul.mubr.bf16.gmra.mrb[0].mxu0 %v582
  %v729 = vpop.f32.mrb[0].mxu0
  %v730 = vadd.f32 0.0, %v729
  %v731 = vpop.f32.mrb[0].mxu0
  %v732 = vpop.f32.mrb[0].mxu0
  %v733 = vadd.f32 0.0, %v732
  %v734 = vpop.f32.mrb[0].mxu0
  %735 = vmatprep.mubr.bf16.mxu0 0
  %736 = vmatmul.mubr.bf16.gmra.mrb[0].mxu0 %v583
  %v737 = vpop.f32.mrb[0].mxu0
  %v738 = vadd.f32 0.0, %v737
  %v739 = vpop.f32.mrb[0].mxu0
  %v740 = vpop.f32.mrb[0].mxu0
  %v741 = vadd.f32 0.0, %v740
  %v742 = vpop.f32.mrb[0].mxu0
  %743 = vmatprep.mubr.bf16.mxu0 0
  %744 = vmatmul.mubr.bf16.gmra.mrb[0].mxu0 %v584
  %v745 = vpop.f32.mrb[0].mxu0
  %v746 = vadd.f32 0.0, %v745
  %v747 = vpop.f32.mrb[0].mxu0
  %v748 = vpop.f32.mrb[0].mxu0
  %v749 = vadd.f32 0.0, %v748
  %v750 = vpop.f32.mrb[0].mxu0
  %751 = vmatprep.mubr.bf16.mxu0 0
  %752 = vmatmul.mubr.bf16.gmra.mrb[0].mxu0 %v585
  %v753 = vpop.f32.mrb[0].mxu0
  %v754 = vadd.f32 0.0, %v753
  %v755 = vpop.f32.mrb[0].mxu0
  %v756 = vpop.f32.mrb[0].mxu0
  %v757 = vadd.f32 0.0, %v756
  %v758 = vpop.f32.mrb[0].mxu0
  %759 = vmatprep.mubr.bf16.mxu0 0
  %760 = vmatmul.mubr.bf16.gmra.mrb[0].mxu0 %v586
  %v761 = vpop.f32.mrb[0].mxu0
  %v762 = vadd.f32 0.0, %v761
  %v763 = vpop.f32.mrb[0].mxu0
  %v764 = vpop.f32.mrb[0].mxu0
  %v765 = vadd.f32 0.0, %v764
  %v766 = vpop.f32.mrb[0].mxu0
  %767 = vmatprep.mubr.bf16.mxu0 0
  %768 = vmatmul.mubr.bf16.gmra.mrb[0].mxu0 %v587
  %v769 = vpop.f32.mrb[0].mxu0
  %v770 = vadd.f32 0.0, %v769
  %v771 = vpop.f32.mrb[0].mxu0
  %v772 = vpop.f32.mrb[0].mxu0
  %v773 = vadd.f32 0.0, %v772
  %v774 = vpop.f32.mrb[0].mxu0
  %775 = vmatprep.mubr.bf16.mxu0 0
  %776 = vmatmul.mubr.bf16.gmra.mrb[0].mxu0 %v588
  %v777 = vpop.f32.mrb[0].mxu0
  %v778 = vadd.f32 0.0, %v777
  %v779 = vpop.f32.mrb[0].mxu0
  %v780 = vpop.f32.mrb[0].mxu0
  %v781 = vadd.f32 0.0, %v780
  %v782 = vpop.f32.mrb[0].mxu0
  %783 = vmatprep.mubr.bf16.mxu0 0
  %784 = vmatmul.mubr.bf16.gmra.mrb[0].mxu0 %v589
  %v785 = vpop.f32.mrb[0].mxu0
  %v786 = vadd.f32 0.0, %v785
  %v787 = vpop.f32.mrb[0].mxu0
  %v788 = vpop.f32.mrb[0].mxu0
  %v789 = vadd.f32 0.0, %v788
  %v790 = vpop.f32.mrb[0].mxu0
  %791 = vmatprep.mubr.bf16.mxu0 0
  %792 = vmatmul.mubr.bf16.gmra.mrb[0].mxu0 %v590
  %v793 = vpop.f32.mrb[0].mxu0
  %v794 = vadd.f32 0.0, %v793
  %v795 = vpop.f32.mrb[0].mxu0
  %v796 = vpop.f32.mrb[0].mxu0
  %v797 = vadd.f32 0.0, %v796
  %v798 = vpop.f32.mrb[0].mxu0
  %799 = vmatprep.mubr.bf16.mxu0 0
  %800 = vmatmul.mubr.bf16.gmra.mrb[0].mxu0 %v591
  %v801 = vpop.f32.mrb[0].mxu0
  %v802 = vadd.f32 0.0, %v801
  %v803 = vpop.f32.mrb[0].mxu0
  %v804 = vpop.f32.mrb[0].mxu0
  %v805 = vadd.f32 0.0, %v804
  %v806 = vpop.f32.mrb[0].mxu0
  %807 = vmatprep.mubr.bf16.mxu0 0
  %808 = vmatmul.mubr.bf16.gmra.mrb[0].mxu0 %v592
  %v809 = vpop.f32.mrb[0].mxu0
  %v810 = vadd.f32 0.0, %v809
  %v811 = vpop.f32.mrb[0].mxu0
  %v812 = vpop.f32.mrb[0].mxu0
  %v813 = vadd.f32 0.0, %v812
  %v814 = vpop.f32.mrb[0].mxu0
  %815 = vmatprep.mubr.bf16.mxu0 0
  %816 = vmatmul.mubr.bf16.gmra.mrb[0].mxu0 %v593
  %v817 = vpop.f32.mrb[0].mxu0
  %v818 = vadd.f32 0.0, %v817
  %v819 = vpop.f32.mrb[0].mxu0
  %v820 = vpop.f32.mrb[0].mxu0
  %v821 = vadd.f32 0.0, %v820
  %v822 = vpop.f32.mrb[0].mxu0
  %823 = vmatprep.mubr.bf16.mxu0 0
  %824 = vmatmul.mubr.bf16.gmra.mrb[0].mxu0 %v594
  %v825 = vpop.f32.mrb[0].mxu0
  %v826 = vadd.f32 0.0, %v825
  %v827 = vpop.f32.mrb[0].mxu0
  %v828 = vpop.f32.mrb[0].mxu0
  %v829 = vadd.f32 0.0, %v828
  %v830 = vpop.f32.mrb[0].mxu0
  %831 = vmatprep.mubr.bf16.mxu0 0
  %832 = vmatmul.mubr.bf16.gmra.mrb[0].mxu0 %v595
  %v833 = vpop.f32.mrb[0].mxu0
  %v834 = vadd.f32 0.0, %v833
  %v835 = vpop.f32.mrb[0].mxu0
  %v836 = vpop.f32.mrb[0].mxu0
  %v837 = vadd.f32 0.0, %v836
  %v838 = vpop.f32.mrb[0].mxu0
  %839 = vmatprep.mubr.bf16.mxu0 0
  %840 = vmatmul.mubr.bf16.gmra.mrb[0].mxu0 %v596
  %v841 = vpop.f32.mrb[0].mxu0
  %v842 = vadd.f32 0.0, %v841
  %v843 = vpop.f32.mrb[0].mxu0
  %v844 = vpop.f32.mrb[0].mxu0
  %v845 = vadd.f32 0.0, %v844
  %v846 = vpop.f32.mrb[0].mxu0
  %847 = vmatprep.mubr.bf16.mxu0 0
  %848 = vmatmul.mubr.bf16.gmra.mrb[0].mxu0 %v597
  %v849 = vpop.f32.mrb[0].mxu0
  %v850 = vadd.f32 0.0, %v849
  %v851 = vpop.f32.mrb[0].mxu0
  %v852 = vpop.f32.mrb[0].mxu0
  %v853 = vadd.f32 0.0, %v852
  %v854 = vpop.f32.mrb[0].mxu0
  %855 = vmatprep.mubr.bf16.mxu0 0
  %856 = vmatmul.mubr.bf16.gmra.mrb[0].mxu0 %v598
  %v857 = vpop.f32.mrb[0].mxu0
  %v858 = vadd.f32 0.0, %v857
  %v859 = vpop.f32.mrb[0].mxu0
  %v860 = vpop.f32.mrb[0].mxu0
  %v861 = vadd.f32 0.0, %v860
  %v862 = vpop.f32.mrb[0].mxu0
  %863 = vmatprep.mubr.bf16.mxu0 0
  %864 = vmatmul.mubr.bf16.gmra.mrb[0].mxu0 %v599
  %v865 = vpop.f32.mrb[0].mxu0
  %v866 = vadd.f32 0.0, %v865
  %v867 = vpop.f32.mrb[0].mxu0
  %v868 = vpop.f32.mrb[0].mxu0
  %v869 = vadd.f32 0.0, %v868
  %v870 = vpop.f32.mrb[0].mxu0
  %871 = vmatprep.mubr.bf16.mxu0 0
  %872 = vmatmul.mubr.bf16.gmra.mrb[0].mxu0 %v600
  %v873 = vpop.f32.mrb[0].mxu0
  %v874 = vadd.f32 0.0, %v873
  %v875 = vpop.f32.mrb[0].mxu0
  %v876 = vpop.f32.mrb[0].mxu0
  %v877 = vadd.f32 0.0, %v876
  %v878 = vpop.f32.mrb[0].mxu0
  %879 = vmatprep.mubr.bf16.mxu0 0
  %880 = vmatmul.mubr.bf16.gmra.mrb[0].mxu0 %v601
  %v881 = vpop.f32.mrb[0].mxu0
  %v882 = vadd.f32 0.0, %v881
  %v883 = vpop.f32.mrb[0].mxu0
  %v884 = vpop.f32.mrb[0].mxu0
  %v885 = vadd.f32 0.0, %v884
  %v886 = vpop.f32.mrb[0].mxu0
  %887 = vmatprep.mubr.bf16.mxu0 0
  %888 = vmatmul.mubr.bf16.gmra.mrb[0].mxu0 %v602
  %v889 = vpop.f32.mrb[0].mxu0
  %v890 = vadd.f32 0.0, %v889
  %v891 = vpop.f32.mrb[0].mxu0
  %v892 = vpop.f32.mrb[0].mxu0
  %v893 = vadd.f32 0.0, %v892
  %v894 = vpop.f32.mrb[0].mxu0
  %895 = vmatprep.mubr.bf16.mxu0 0
  %896 = vmatmul.mubr.bf16.gmra.mrb[0].mxu0 %v603
  %v897 = vpop.f32.mrb[0].mxu0
  %v898 = vadd.f32 0.0, %v897
  %v899 = vpop.f32.mrb[0].mxu0
  %v900 = vpop.f32.mrb[0].mxu0
  %v901 = vadd.f32 0.0, %v900
  %v902 = vpop.f32.mrb[0].mxu0
  %903 = vmatprep.mubr.bf16.mxu0 0
  %904 = vmatmul.mubr.bf16.gmra.mrb[0].mxu0 %v604
  %v905 = vpop.f32.mrb[0].mxu0
  %v906 = vadd.f32 0.0, %v905
  %v907 = vpop.f32.mrb[0].mxu0
  %v908 = vpop.f32.mrb[0].mxu0
  %v909 = vadd.f32 0.0, %v908
  %v910 = vpop.f32.mrb[0].mxu0
  %911 = vmatprep.mubr.bf16.mxu0 0
  %912 = vmatmul.mubr.bf16.gmra.mrb[0].mxu0 %v605
  %v913 = vpop.f32.mrb[0].mxu0
  %v914 = vadd.f32 0.0, %v913
  %v915 = vpop.f32.mrb[0].mxu0
  %v916 = vpop.f32.mrb[0].mxu0
  %v917 = vadd.f32 0.0, %v916
  %v918 = vpop.f32.mrb[0].mxu0
  %919 = vmatprep.mubr.bf16.mxu0 0
  %920 = vmatmul.mubr.bf16.gmra.mrb[0].mxu0 %v606
  %v921 = vpop.f32.mrb[0].mxu0
  %v922 = vadd.f32 0.0, %v921
  %v923 = vpop.f32.mrb[0].mxu0
  %v924 = vpop.f32.mrb[0].mxu0
  %v925 = vadd.f32 0.0, %v924
  %v926 = vpop.f32.mrb[0].mxu0
  %927 = vdwg.mxu0
  %vm928 = vcmask 261120
  %929 = vst.msk [vmem:[#allocation2] sm:$0xff] %vm928, %v674
  %930 = vst.msk [vmem:[#allocation2 + $0x20] sm:$0xff] %vm928, %v677
  %931 = vst.msk [vmem:[#allocation2 + $0x40] sm:$0xff] %vm928, %v682
  %932 = vst.msk [vmem:[#allocation2 + $0x60] sm:$0xff] %vm928, %v685
  %937 = vrot.lane.b32.xlu0 %v690, 32
  %v938 = vpop.permute.xlu0 %937
  %939 = vrot.lane.b32.xlu0 %v693, 32
  %v940 = vpop.permute.xlu0 %939
  %941 = vrot.lane.b32.xlu0 %v698, 32
  %v942 = vpop.permute.xlu0 %941
  %943 = vrot.lane.b32.xlu0 %v701, 32
  %v944 = vpop.permute.xlu0 %943
  %vm949 = vcmask 523520
  %950 = vst.msk [vmem:[#allocation2] sm:$0xff] %vm949, %v938
  %951 = vst.msk [vmem:[#allocation2 + $0x20] sm:$0xff] %vm949, %v940
  %952 = vst.msk [vmem:[#allocation2 + $0x40] sm:$0xff] %vm949, %v942
  %953 = vst.msk [vmem:[#allocation2 + $0x60] sm:$0xff] %vm949, %v944
  %958 = vrot.lane.b32.xlu0 %v706, 64
  %v959 = vpop.permute.xlu0 %958
  %960 = vrot.lane.b32.xlu0 %v709, 64
  %v961 = vpop.permute.xlu0 %960
  %962 = vrot.lane.b32.xlu0 %v714, 64
  %v963 = vpop.permute.xlu0 %962
  %964 = vrot.lane.b32.xlu0 %v717, 64
  %v965 = vpop.permute.xlu0 %964
  %vm970 = vcmask 785920
  %971 = vst.msk [vmem:[#allocation2] sm:$0xff] %vm970, %v959
  %972 = vst.msk [vmem:[#allocation2 + $0x20] sm:$0xff] %vm970, %v961
  %973 = vst.msk [vmem:[#allocation2 + $0x40] sm:$0xff] %vm970, %v963
  %974 = vst.msk [vmem:[#allocation2 + $0x60] sm:$0xff] %vm970, %v965
  %979 = vrot.lane.b32.xlu0 %v722, 96
  %v980 = vpop.permute.xlu0 %979
  %981 = vrot.lane.b32.xlu0 %v725, 96
  %v982 = vpop.permute.xlu0 %981
  %983 = vrot.lane.b32.xlu0 %v730, 96
  %v984 = vpop.permute.xlu0 %983
  %985 = vrot.lane.b32.xlu0 %v733, 96
  %v986 = vpop.permute.xlu0 %985
  %vm991 = vcmask 1048320
  %992 = vst.msk [vmem:[#allocation2] sm:$0xff] %vm991, %v980
  %993 = vst.msk [vmem:[#allocation2 + $0x20] sm:$0xff] %vm991, %v982
  %994 = vst.msk [vmem:[#allocation2 + $0x40] sm:$0xff] %vm991, %v984
  %995 = vst.msk [vmem:[#allocation2 + $0x60] sm:$0xff] %vm991, %v986
  %996 = vst.msk [vmem:[#allocation2 + $0x8] sm:$0xff] %vm928, %v738
  %997 = vst.msk [vmem:[#allocation2 + $0x28] sm:$0xff] %vm928, %v741
  %998 = vst.msk [vmem:[#allocation2 + $0x48] sm:$0xff] %vm928, %v746
  %999 = vst.msk [vmem:[#allocation2 + $0x68] sm:$0xff] %vm928, %v749
  %1004 = vrot.lane.b32.xlu0 %v754, 32
  %v1005 = vpop.permute.xlu0 %1004
  %1006 = vrot.lane.b32.xlu0 %v757, 32
  %v1007 = vpop.permute.xlu0 %1006
  %1008 = vrot.lane.b32.xlu0 %v762, 32
  %v1009 = vpop.permute.xlu0 %1008
  %1010 = vrot.lane.b32.xlu0 %v765, 32
  %v1011 = vpop.permute.xlu0 %1010
  %1016 = vst.msk [vmem:[#allocation2 + $0x8] sm:$0xff] %vm949, %v1005
  %1017 = vst.msk [vmem:[#allocation2 + $0x28] sm:$0xff] %vm949, %v1007
  %1018 = vst.msk [vmem:[#allocation2 + $0x48] sm:$0xff] %vm949, %v1009
  %1019 = vst.msk [vmem:[#allocation2 + $0x68] sm:$0xff] %vm949, %v1011
  %1024 = vrot.lane.b32.xlu0 %v770, 64
  %v1025 = vpop.permute.xlu0 %1024
  %1026 = vrot.lane.b32.xlu0 %v773, 64
  %v1027 = vpop.permute.xlu0 %1026
  %1028 = vrot.lane.b32.xlu0 %v778, 64
  %v1029 = vpop.permute.xlu0 %1028
  %1030 = vrot.lane.b32.xlu0 %v781, 64
  %v1031 = vpop.permute.xlu0 %1030
  %1036 = vst.msk [vmem:[#allocation2 + $0x8] sm:$0xff] %vm970, %v1025
  %1037 = vst.msk [vmem:[#allocation2 + $0x28] sm:$0xff] %vm970, %v1027
  %1038 = vst.msk [vmem:[#allocation2 + $0x48] sm:$0xff] %vm970, %v1029
  %1039 = vst.msk [vmem:[#allocation2 + $0x68] sm:$0xff] %vm970, %v1031
  %1044 = vrot.lane.b32.xlu0 %v786, 96
  %v1045 = vpop.permute.xlu0 %1044
  %1046 = vrot.lane.b32.xlu0 %v789, 96
  %v1047 = vpop.permute.xlu0 %1046
  %1048 = vrot.lane.b32.xlu0 %v794, 96
  %v1049 = vpop.permute.xlu0 %1048
  %1050 = vrot.lane.b32.xlu0 %v797, 96
  %v1051 = vpop.permute.xlu0 %1050
  %1056 = vst.msk [vmem:[#allocation2 + $0x8] sm:$0xff] %vm991, %v1045
  %1057 = vst.msk [vmem:[#allocation2 + $0x28] sm:$0xff] %vm991, %v1047
  %1058 = vst.msk [vmem:[#allocation2 + $0x48] sm:$0xff] %vm991, %v1049
  %1059 = vst.msk [vmem:[#allocation2 + $0x68] sm:$0xff] %vm991, %v1051
  %1060 = vst.msk [vmem:[#allocation2 + $0x10] sm:$0xff] %vm928, %v802
  %1061 = vst.msk [vmem:[#allocation2 + $0x30] sm:$0xff] %vm928, %v805
  %1062 = vst.msk [vmem:[#allocation2 + $0x50] sm:$0xff] %vm928, %v810
  %1063 = vst.msk [vmem:[#allocation2 + $0x70] sm:$0xff] %vm928, %v813
  %1068 = vrot.lane.b32.xlu0 %v818, 32
  %v1069 = vpop.permute.xlu0 %1068
  %1070 = vrot.lane.b32.xlu0 %v821, 32
  %v1071 = vpop.permute.xlu0 %1070
  %1072 = vrot.lane.b32.xlu0 %v826, 32
  %v1073 = vpop.permute.xlu0 %1072
  %1074 = vrot.lane.b32.xlu0 %v829, 32
  %v1075 = vpop.permute.xlu0 %1074
  %1080 = vst.msk [vmem:[#allocation2 + $0x10] sm:$0xff] %vm949, %v1069
  %1081 = vst.msk [vmem:[#allocation2 + $0x30] sm:$0xff] %vm949, %v1071
  %1082 = vst.msk [vmem:[#allocation2 + $0x50] sm:$0xff] %vm949, %v1073
  %1083 = vst.msk [vmem:[#allocation2 + $0x70] sm:$0xff] %vm949, %v1075
  %1088 = vrot.lane.b32.xlu0 %v834, 64
  %v1089 = vpop.permute.xlu0 %1088
  %1090 = vrot.lane.b32.xlu0 %v837, 64
  %v1091 = vpop.permute.xlu0 %1090
  %1092 = vrot.lane.b32.xlu0 %v842, 64
  %v1093 = vpop.permute.xlu0 %1092
  %1094 = vrot.lane.b32.xlu0 %v845, 64
  %v1095 = vpop.permute.xlu0 %1094
  %1100 = vst.msk [vmem:[#allocation2 + $0x10] sm:$0xff] %vm970, %v1089
  %1101 = vst.msk [vmem:[#allocation2 + $0x30] sm:$0xff] %vm970, %v1091
  %1102 = vst.msk [vmem:[#allocation2 + $0x50] sm:$0xff] %vm970, %v1093
  %1103 = vst.msk [vmem:[#allocation2 + $0x70] sm:$0xff] %vm970, %v1095
  %1108 = vrot.lane.b32.xlu0 %v850, 96
  %v1109 = vpop.permute.xlu0 %1108
  %1110 = vrot.lane.b32.xlu0 %v853, 96
  %v1111 = vpop.permute.xlu0 %1110
  %1112 = vrot.lane.b32.xlu0 %v858, 96
  %v1113 = vpop.permute.xlu0 %1112
  %1114 = vrot.lane.b32.xlu0 %v861, 96
  %v1115 = vpop.permute.xlu0 %1114
  %1120 = vst.msk [vmem:[#allocation2 + $0x10] sm:$0xff] %vm991, %v1109
  %1121 = vst.msk [vmem:[#allocation2 + $0x30] sm:$0xff] %vm991, %v1111
  %1122 = vst.msk [vmem:[#allocation2 + $0x50] sm:$0xff] %vm991, %v1113
  %1123 = vst.msk [vmem:[#allocation2 + $0x70] sm:$0xff] %vm991, %v1115
  %1124 = vst.msk [vmem:[#allocation2 + $0x18] sm:$0xff] %vm928, %v866
  %1125 = vst.msk [vmem:[#allocation2 + $0x38] sm:$0xff] %vm928, %v869
  %1126 = vst.msk [vmem:[#allocation2 + $0x58] sm:$0xff] %vm928, %v874
  %1127 = vst.msk [vmem:[#allocation2 + $0x78] sm:$0xff] %vm928, %v877
  %1132 = vrot.lane.b32.xlu0 %v882, 32
  %v1133 = vpop.permute.xlu0 %1132
  %1134 = vrot.lane.b32.xlu0 %v885, 32
  %v1135 = vpop.permute.xlu0 %1134
  %1136 = vrot.lane.b32.xlu0 %v890, 32
  %v1137 = vpop.permute.xlu0 %1136
  %1138 = vrot.lane.b32.xlu0 %v893, 32
  %v1139 = vpop.permute.xlu0 %1138
  %1144 = vst.msk [vmem:[#allocation2 + $0x18] sm:$0xff] %vm949, %v1133
  %1145 = vst.msk [vmem:[#allocation2 + $0x38] sm:$0xff] %vm949, %v1135
  %1146 = vst.msk [vmem:[#allocation2 + $0x58] sm:$0xff] %vm949, %v1137
  %1147 = vst.msk [vmem:[#allocation2 + $0x78] sm:$0xff] %vm949, %v1139
  %1152 = vrot.lane.b32.xlu0 %v898, 64
  %v1153 = vpop.permute.xlu0 %1152
  %1154 = vrot.lane.b32.xlu0 %v901, 64
  %v1155 = vpop.permute.xlu0 %1154
  %1156 = vrot.lane.b32.xlu0 %v906, 64
  %v1157 = vpop.permute.xlu0 %1156
  %1158 = vrot.lane.b32.xlu0 %v909, 64
  %v1159 = vpop.permute.xlu0 %1158
  %1164 = vst.msk [vmem:[#allocation2 + $0x18] sm:$0xff] %vm970, %v1153
  %1165 = vst.msk [vmem:[#allocation2 + $0x38] sm:$0xff] %vm970, %v1155
  %1166 = vst.msk [vmem:[#allocation2 + $0x58] sm:$0xff] %vm970, %v1157
  %1167 = vst.msk [vmem:[#allocation2 + $0x78] sm:$0xff] %vm970, %v1159
  %1172 = vrot.lane.b32.xlu0 %v914, 96
  %v1173 = vpop.permute.xlu0 %1172
  %1174 = vrot.lane.b32.xlu0 %v917, 96
  %v1175 = vpop.permute.xlu0 %1174
  %1176 = vrot.lane.b32.xlu0 %v922, 96
  %v1177 = vpop.permute.xlu0 %1176
  %1178 = vrot.lane.b32.xlu0 %v925, 96
  %v1179 = vpop.permute.xlu0 %1178
  %1184 = vst.msk [vmem:[#allocation2 + $0x18] sm:$0xff] %vm991, %v1173
  %1185 = vst.msk [vmem:[#allocation2 + $0x38] sm:$0xff] %vm991, %v1175
  %1186 = vst.msk [vmem:[#allocation2 + $0x58] sm:$0xff] %vm991, %v1177
  %1187 = vst.msk [vmem:[#allocation2 + $0x78] sm:$0xff] %vm991, %v1179
  %v1188 = vld [vmem:[#allocation2] sm:$0xff]
  %v1189 = vld [vmem:[#allocation2 + $0x8] sm:$0xff]
  %v1190 = vld [vmem:[#allocation2 + $0x10] sm:$0xff]
  %v1191 = vld [vmem:[#allocation2 + $0x18] sm:$0xff]
  %v1192 = vld [vmem:[#allocation2 + $0x20] sm:$0xff]
  %v1193 = vld [vmem:[#allocation2 + $0x28] sm:$0xff]
  %v1194 = vld [vmem:[#allocation2 + $0x30] sm:$0xff]
  %v1195 = vld [vmem:[#allocation2 + $0x38] sm:$0xff]
  %v1196 = vld [vmem:[#allocation2 + $0x40] sm:$0xff]
  %v1197 = vld [vmem:[#allocation2 + $0x48] sm:$0xff]
  %v1198 = vld [vmem:[#allocation2 + $0x50] sm:$0xff]
  %v1199 = vld [vmem:[#allocation2 + $0x58] sm:$0xff]
  %v1200 = vld [vmem:[#allocation2 + $0x60] sm:$0xff]
  %v1201 = vld [vmem:[#allocation2 + $0x68] sm:$0xff]
  %v1202 = vld [vmem:[#allocation2 + $0x70] sm:$0xff]
  %v1203 = vld [vmem:[#allocation2 + $0x78] sm:$0xff]
  %v1204 = vpack.c.bf16 %v1192, %v1188
  %v1205 = vpack.c.bf16 %v1193, %v1189
  %v1206 = vpack.c.bf16 %v1194, %v1190
  %v1207 = vpack.c.bf16 %v1195, %v1191
  %v1208 = vpack.c.bf16 %v1200, %v1196
  %v1209 = vpack.c.bf16 %v1201, %v1197
  %v1210 = vpack.c.bf16 %v1202, %v1198
  %v1211 = vpack.c.bf16 %v1203, %v1199
  %v1212 = vld [vmem:[%s3] sm:$0xf]
  %v1213 = vld [vmem:[%s3 + $0x4] sm:$0xf]
  %v1214 = vld [vmem:[%s3 + $0x8] sm:$0xf]
  %v1215 = vld [vmem:[%s3 + $0xc] sm:$0xf]
  %v1216 = vld [vmem:[%s3 + $0x10] sm:$0xf]
  %v1217 = vld [vmem:[%s3 + $0x14] sm:$0xf]
  %v1218 = vld [vmem:[%s3 + $0x18] sm:$0xf]
  %v1219 = vld [vmem:[%s3 + $0x1c] sm:$0xf]
  %v1220 = vld [vmem:[%s3 + $0x20] sm:$0xf]
  %v1221 = vld [vmem:[%s3 + $0x24] sm:$0xf]
  %v1222 = vld [vmem:[%s3 + $0x28] sm:$0xf]
  %v1223 = vld [vmem:[%s3 + $0x2c] sm:$0xf]
  %v1224 = vld [vmem:[%s3 + $0x30] sm:$0xf]
  %v1225 = vld [vmem:[%s3 + $0x34] sm:$0xf]
  %v1226 = vld [vmem:[%s3 + $0x38] sm:$0xf]
  %v1227 = vld [vmem:[%s3 + $0x3c] sm:$0xf]
  %v1228 = vld [vmem:[%s3 + $0x40] sm:$0xf]
  %v1229 = vld [vmem:[%s3 + $0x44] sm:$0xf]
  %v1230 = vld [vmem:[%s3 + $0x48] sm:$0xf]
  %v1231 = vld [vmem:[%s3 + $0x4c] sm:$0xf]
  %v1232 = vld [vmem:[%s3 + $0x50] sm:$0xf]
  %v1233 = vld [vmem:[%s3 + $0x54] sm:$0xf]
  %v1234 = vld [vmem:[%s3 + $0x58] sm:$0xf]
  %v1235 = vld [vmem:[%s3 + $0x5c] sm:$0xf]
  %v1236 = vld [vmem:[%s3 + $0x60] sm:$0xf]
  %v1237 = vld [vmem:[%s3 + $0x64] sm:$0xf]
  %v1238 = vld [vmem:[%s3 + $0x68] sm:$0xf]
  %v1239 = vld [vmem:[%s3 + $0x6c] sm:$0xf]
  %v1240 = vld [vmem:[%s3 + $0x70] sm:$0xf]
  %v1241 = vld [vmem:[%s3 + $0x74] sm:$0xf]
  %v1242 = vld [vmem:[%s3 + $0x78] sm:$0xf]
  %v1243 = vld [vmem:[%s3 + $0x7c] sm:$0xf]
  %v1244 = vld [vmem:[%s3 + $0x80] sm:$0xf]
  %v1245 = vld [vmem:[%s3 + $0x84] sm:$0xf]
  %v1246 = vld [vmem:[%s3 + $0x88] sm:$0xf]
  %v1247 = vld [vmem:[%s3 + $0x8c] sm:$0xf]
  %v1248 = vld [vmem:[%s3 + $0x90] sm:$0xf]
  %v1249 = vld [vmem:[%s3 + $0x94] sm:$0xf]
  %v1250 = vld [vmem:[%s3 + $0x98] sm:$0xf]
  %v1251 = vld [vmem:[%s3 + $0x9c] sm:$0xf]
  %v1252 = vld [vmem:[%s3 + $0xa0] sm:$0xf]
  %v1253 = vld [vmem:[%s3 + $0xa4] sm:$0xf]
  %v1254 = vld [vmem:[%s3 + $0xa8] sm:$0xf]
  %v1255 = vld [vmem:[%s3 + $0xac] sm:$0xf]
  %v1256 = vld [vmem:[%s3 + $0xb0] sm:$0xf]
  %v1257 = vld [vmem:[%s3 + $0xb4] sm:$0xf]
  %v1258 = vld [vmem:[%s3 + $0xb8] sm:$0xf]
  %v1259 = vld [vmem:[%s3 + $0xbc] sm:$0xf]
  %v1260 = vld [vmem:[%s3 + $0xc0] sm:$0xf]
  %v1261 = vld [vmem:[%s3 + $0xc4] sm:$0xf]
  %v1262 = vld [vmem:[%s3 + $0xc8] sm:$0xf]
  %v1263 = vld [vmem:[%s3 + $0xcc] sm:$0xf]
  %v1264 = vld [vmem:[%s3 + $0xd0] sm:$0xf]
  %v1265 = vld [vmem:[%s3 + $0xd4] sm:$0xf]
  %v1266 = vld [vmem:[%s3 + $0xd8] sm:$0xf]
  %v1267 = vld [vmem:[%s3 + $0xdc] sm:$0xf]
  %v1268 = vld [vmem:[%s3 + $0xe0] sm:$0xf]
  %v1269 = vld [vmem:[%s3 + $0xe4] sm:$0xf]
  %v1270 = vld [vmem:[%s3 + $0xe8] sm:$0xf]
  %v1271 = vld [vmem:[%s3 + $0xec] sm:$0xf]
  %v1272 = vld [vmem:[%s3 + $0xf0] sm:$0xf]
  %v1273 = vld [vmem:[%s3 + $0xf4] sm:$0xf]
  %v1274 = vld [vmem:[%s3 + $0xf8] sm:$0xf]
  %v1275 = vld [vmem:[%s3 + $0xfc] sm:$0xf]
  %s1276 = scalar_lea.vmem %s8, 8
  %v1277 = vld [vmem:[%s1276] sm:$0x77]
  %v1278 = vlaneseq
  %v1279 = vshrl.u32 %v1278, 7
  %v1280 = vsub.s32 0, %v1279
  %v1281 = vrot.slane %v1277, %v1280
  %v1346 = vunpack.c.l.b16 %v1212
  %v1347 = vunpack.c.l.b16 %v1213
  %v1348 = vunpack.c.l.b16 %v1214
  %v1349 = vunpack.c.l.b16 %v1215
  %v1350 = vunpack.c.l.b16 %v1216
  %v1351 = vunpack.c.l.b16 %v1217
  %v1352 = vunpack.c.l.b16 %v1218
  %v1353 = vunpack.c.l.b16 %v1219
  %v1354 = vunpack.c.l.b16 %v1220
  %v1355 = vunpack.c.l.b16 %v1221
  %v1356 = vunpack.c.l.b16 %v1222
  %v1357 = vunpack.c.l.b16 %v1223
  %v1358 = vunpack.c.l.b16 %v1224
  %v1359 = vunpack.c.l.b16 %v1225
  %v1360 = vunpack.c.l.b16 %v1226
  %v1361 = vunpack.c.l.b16 %v1227
  %v1362 = vunpack.c.l.b16 %v1228
  %v1363 = vunpack.c.l.b16 %v1229
  %v1364 = vunpack.c.l.b16 %v1230
  %v1365 = vunpack.c.l.b16 %v1231
  %v1366 = vunpack.c.l.b16 %v1232
  %v1367 = vunpack.c.l.b16 %v1233
  %v1368 = vunpack.c.l.b16 %v1234
  %v1369 = vunpack.c.l.b16 %v1235
  %v1370 = vunpack.c.l.b16 %v1236
  %v1371 = vunpack.c.l.b16 %v1237
  %v1372 = vunpack.c.l.b16 %v1238
  %v1373 = vunpack.c.l.b16 %v1239
  %v1374 = vunpack.c.l.b16 %v1240
  %v1375 = vunpack.c.l.b16 %v1241
  %v1376 = vunpack.c.l.b16 %v1242
  %v1377 = vunpack.c.l.b16 %v1243
  %v1378 = vunpack.c.l.b16 %v1244
  %v1379 = vunpack.c.l.b16 %v1245
  %v1380 = vunpack.c.l.b16 %v1246
  %v1381 = vunpack.c.l.b16 %v1247
  %v1382 = vunpack.c.l.b16 %v1248
  %v1383 = vunpack.c.l.b16 %v1249
  %v1384 = vunpack.c.l.b16 %v1250
  %v1385 = vunpack.c.l.b16 %v1251
  %v1386 = vunpack.c.l.b16 %v1252
  %v1387 = vunpack.c.l.b16 %v1253
  %v1388 = vunpack.c.l.b16 %v1254
  %v1389 = vunpack.c.l.b16 %v1255
  %v1390 = vunpack.c.l.b16 %v1256
  %v1391 = vunpack.c.l.b16 %v1257
  %v1392 = vunpack.c.l.b16 %v1258
  %v1393 = vunpack.c.l.b16 %v1259
  %v1394 = vunpack.c.l.b16 %v1260
  %v1395 = vunpack.c.l.b16 %v1261
  %v1396 = vunpack.c.l.b16 %v1262
  %v1397 = vunpack.c.l.b16 %v1263
  %v1398 = vunpack.c.l.b16 %v1264
  %v1399 = vunpack.c.l.b16 %v1265
  %v1400 = vunpack.c.l.b16 %v1266
  %v1401 = vunpack.c.l.b16 %v1267
  %v1402 = vunpack.c.l.b16 %v1268
  %v1403 = vunpack.c.l.b16 %v1269
  %v1404 = vunpack.c.l.b16 %v1270
  %v1405 = vunpack.c.l.b16 %v1271
  %v1406 = vunpack.c.l.b16 %v1272
  %v1407 = vunpack.c.l.b16 %v1273
  %v1408 = vunpack.c.l.b16 %v1274
  %v1409 = vunpack.c.l.b16 %v1275
  %v1410 = vpack.c.b16 %v1347, %v1346
  %v1411 = vpack.c.b16 %v1349, %v1348
  %v1412 = vpack.c.b16 %v1351, %v1350
  %v1413 = vpack.c.b16 %v1353, %v1352
  %v1414 = vpack.c.b16 %v1355, %v1354
  %v1415 = vpack.c.b16 %v1357, %v1356
  %v1416 = vpack.c.b16 %v1359, %v1358
  %v1417 = vpack.c.b16 %v1361, %v1360
  %v1418 = vpack.c.b16 %v1363, %v1362
  %v1419 = vpack.c.b16 %v1365, %v1364
  %v1420 = vpack.c.b16 %v1367, %v1366
  %v1421 = vpack.c.b16 %v1369, %v1368
  %v1422 = vpack.c.b16 %v1371, %v1370
  %v1423 = vpack.c.b16 %v1373, %v1372
  %v1424 = vpack.c.b16 %v1375, %v1374
  %v1425 = vpack.c.b16 %v1377, %v1376
  %v1426 = vpack.c.b16 %v1379, %v1378
  %v1427 = vpack.c.b16 %v1381, %v1380
  %v1428 = vpack.c.b16 %v1383, %v1382
  %v1429 = vpack.c.b16 %v1385, %v1384
  %v1430 = vpack.c.b16 %v1387, %v1386
  %v1431 = vpack.c.b16 %v1389, %v1388
  %v1432 = vpack.c.b16 %v1391, %v1390
  %v1433 = vpack.c.b16 %v1393, %v1392
  %v1434 = vpack.c.b16 %v1395, %v1394
  %v1435 = vpack.c.b16 %v1397, %v1396
  %v1436 = vpack.c.b16 %v1399, %v1398
  %v1437 = vpack.c.b16 %v1401, %v1400
  %v1438 = vpack.c.b16 %v1403, %v1402
  %v1439 = vpack.c.b16 %v1405, %v1404
  %v1440 = vpack.c.b16 %v1407, %v1406
  %v1441 = vpack.c.b16 %v1409, %v1408
  %1474 = vmatprep.subr.bf16.mxu0 0
  %1475 = vmatpush1.bf16.msra.mxu0 %v1410
  %1476 = vmatprep.subr.bf16.mxu0 0
  %1477 = vmatpush1.bf16.msra.mxu0 %v1411
  %1478 = vmatprep.subr.bf16.mxu0 0
  %1479 = vmatpush1.bf16.msra.mxu0 %v1412
  %1480 = vmatprep.subr.bf16.mxu0 0
  %1481 = vmatpush1.bf16.msra.mxu0 %v1413
  %1482 = vmatprep.subr.bf16.mxu0 0
  %1483 = vmatpush1.bf16.msra.mxu0 %v1414
  %1484 = vmatprep.subr.bf16.mxu0 0
  %1485 = vmatpush1.bf16.msra.mxu0 %v1415
  %1486 = vmatprep.subr.bf16.mxu0 0
  %1487 = vmatpush1.bf16.msra.mxu0 %v1416
  %1488 = vmatprep.subr.bf16.mxu0 0
  %1489 = vmatpush1.bf16.msra.mxu0 %v1417
  %1490 = vmatprep.subr.bf16.mxu0 0
  %1491 = vmatpush1.bf16.msra.mxu0 %v1418
  %1492 = vmatprep.subr.bf16.mxu0 0
  %1493 = vmatpush1.bf16.msra.mxu0 %v1419
  %1494 = vmatprep.subr.bf16.mxu0 0
  %1495 = vmatpush1.bf16.msra.mxu0 %v1420
  %1496 = vmatprep.subr.bf16.mxu0 0
  %1497 = vmatpush1.bf16.msra.mxu0 %v1421
  %1498 = vmatprep.subr.bf16.mxu0 0
  %1499 = vmatpush1.bf16.msra.mxu0 %v1422
  %1500 = vmatprep.subr.bf16.mxu0 0
  %1501 = vmatpush1.bf16.msra.mxu0 %v1423
  %1502 = vmatprep.subr.bf16.mxu0 0
  %1503 = vmatpush1.bf16.msra.mxu0 %v1424
  %1504 = vmatprep.subr.bf16.mxu0 0
  %1505 = vmatpush1.bf16.msra.mxu0 %v1425
  %1506 = vmatprep.mubr.bf16.mxu0 %v1205
  %1507 = vmatmul.mubr.bf16.gmra.mrb[0].mxu0 %v1204
  %v1508 = vpop.f32.mrb[0].mxu0
  %v1509 = vadd.f32 %v1281, %v1508
  %v1510 = vpop.f32.mrb[0].mxu0
  %v1511 = vpop.f32.mrb[0].mxu0
  %v1512 = vadd.f32 %v1281, %v1511
  %v1513 = vpop.f32.mrb[0].mxu0
  %1514 = vmatprep.mubr.bf16.mxu0 %v1209
  %1515 = vmatmul.mubr.bf16.gmra.mrb[0].mxu0 %v1208
  %v1516 = vpop.f32.mrb[0].mxu0
  %v1517 = vadd.f32 %v1281, %v1516
  %v1518 = vpop.f32.mrb[0].mxu0
  %v1519 = vpop.f32.mrb[0].mxu0
  %v1520 = vadd.f32 %v1281, %v1519
  %v1521 = vpop.f32.mrb[0].mxu0
  %1522 = vdwg.mxu0
  %1523 = vmatprep.subr.bf16.mxu0 0
  %1524 = vmatpush1.bf16.msra.mxu0 %v1426
  %1525 = vmatprep.subr.bf16.mxu0 0
  %1526 = vmatpush1.bf16.msra.mxu0 %v1427
  %1527 = vmatprep.subr.bf16.mxu0 0
  %1528 = vmatpush1.bf16.msra.mxu0 %v1428
  %1529 = vmatprep.subr.bf16.mxu0 0
  %1530 = vmatpush1.bf16.msra.mxu0 %v1429
  %1531 = vmatprep.subr.bf16.mxu0 0
  %1532 = vmatpush1.bf16.msra.mxu0 %v1430
  %1533 = vmatprep.subr.bf16.mxu0 0
  %1534 = vmatpush1.bf16.msra.mxu0 %v1431
  %1535 = vmatprep.subr.bf16.mxu0 0
  %1536 = vmatpush1.bf16.msra.mxu0 %v1432
  %1537 = vmatprep.subr.bf16.mxu0 0
  %1538 = vmatpush1.bf16.msra.mxu0 %v1433
  %1539 = vmatprep.subr.bf16.mxu0 0
  %1540 = vmatpush1.bf16.msra.mxu0 %v1434
  %1541 = vmatprep.subr.bf16.mxu0 0
  %1542 = vmatpush1.bf16.msra.mxu0 %v1435
  %1543 = vmatprep.subr.bf16.mxu0 0
  %1544 = vmatpush1.bf16.msra.mxu0 %v1436
  %1545 = vmatprep.subr.bf16.mxu0 0
  %1546 = vmatpush1.bf16.msra.mxu0 %v1437
  %1547 = vmatprep.subr.bf16.mxu0 0
  %1548 = vmatpush1.bf16.msra.mxu0 %v1438
  %1549 = vmatprep.subr.bf16.mxu0 0
  %1550 = vmatpush1.bf16.msra.mxu0 %v1439
  %1551 = vmatprep.subr.bf16.mxu0 0
  %1552 = vmatpush1.bf16.msra.mxu0 %v1440
  %1553 = vmatprep.subr.bf16.mxu0 0
  %1554 = vmatpush1.bf16.msra.mxu0 %v1441
  %1555 = vmatprep.mubr.bf16.mxu0 %v1207
  %1556 = vmatmul.mubr.bf16.gmra.mrb[0].mxu0 %v1206
  %v1557 = vpop.f32.mrb[0].mxu0
  %v1558 = vadd.f32 %v1509, %v1557
  %v1559 = vpop.f32.mrb[0].mxu0
  %v1560 = vpop.f32.mrb[0].mxu0
  %v1561 = vadd.f32 %v1512, %v1560
  %v1562 = vpop.f32.mrb[0].mxu0
  %1563 = vmatprep.mubr.bf16.mxu0 %v1211
  %1564 = vmatmul.mubr.bf16.gmra.mrb[0].mxu0 %v1210
  %v1565 = vpop.f32.mrb[0].mxu0
  %v1566 = vadd.f32 %v1517, %v1565
  %v1567 = vpop.f32.mrb[0].mxu0
  %v1568 = vpop.f32.mrb[0].mxu0
  %v1569 = vadd.f32 %v1520, %v1568
  %v1570 = vpop.f32.mrb[0].mxu0
  %1571 = vdwg.mxu0
  %vm1572 = vcmask 523264
  %v1573 = vsel %vm1572, %v1558, 0.0
  %v1574 = vsel %vm1572, %v1561, 0.0
  %v1575 = vadd.f32 %v1573, %v1574
  %v1576 = vsel %vm1572, %v1566, 0.0
  %v1577 = vadd.f32 %v1575, %v1576
  %v1578 = vsel %vm1572, %v1569, 0.0
  %v1579 = vadd.f32 %v1577, %v1578
  %v1580 = vrot.slane %v1579, 4
  %v1581 = vadd.f32 %v1579, %v1580
  %v1582 = vrot.slane %v1581, 2
  %v1583 = vadd.f32 %v1581, %v1582
  %v1584 = vrot.slane %v1583, 1
  %v1585 = vadd.f32 %v1583, %v1584
  %v1586 = vrcp.pop 32.0
  %v1587 = vmul.f32 %v1585, %v1586
  %v1588 = vsub.f32 %v1558, %v1587
  %v1589 = vsub.f32 %v1561, %v1587
  %v1590 = vsub.f32 %v1566, %v1587
  %v1591 = vsub.f32 %v1569, %v1587
  %v1592 = vmul.f32 %v1588, %v1588
  %v1593 = vmul.f32 %v1589, %v1589
  %v1594 = vmul.f32 %v1590, %v1590
  %v1595 = vmul.f32 %v1591, %v1591
  %v1596 = vsel %vm1572, %v1592, 0.0
  %v1597 = vsel %vm1572, %v1593, 0.0
  %v1598 = vadd.f32 %v1596, %v1597
  %v1599 = vsel %vm1572, %v1594, 0.0
  %v1600 = vadd.f32 %v1598, %v1599
  %v1601 = vsel %vm1572, %v1595, 0.0
  %v1602 = vadd.f32 %v1600, %v1601
  %v1603 = vrot.slane %v1602, 4
  %v1604 = vadd.f32 %v1602, %v1603
  %v1605 = vrot.slane %v1604, 2
  %v1606 = vadd.f32 %v1604, %v1605
  %v1607 = vrot.slane %v1606, 1
  %v1608 = vadd.f32 %v1606, %v1607
  %v1609 = vmul.f32 %v1608, %v1586
  %v1610 = vadd.f32 %v1609, 1e-05
  %v1611 = vrsqrt.pop %v1610
  %v1612 = vmul.f32 %v1588, %v1611
  %v1613 = vmul.f32 %v1589, %v1611
  %v1614 = vmul.f32 %v1590, %v1611
  %v1615 = vmul.f32 %v1591, %v1611
  %v1616 = vlaneseq
  %v1617 = vshrl.u32 %v1616, 7
  %v1618 = vsub.s32 1, %v1617
  %v1619 = vrot.slane %v1277, %v1618
  %v1620 = vmul.f32 %v1612, %v1619
  %v1621 = vmul.f32 %v1613, %v1619
  %v1622 = vmul.f32 %v1614, %v1619
  %v1623 = vmul.f32 %v1615, %v1619
  %v1624 = vlaneseq
  %v1625 = vshrl.u32 %v1624, 7
  %v1626 = vsub.s32 2, %v1625
  %v1627 = vrot.slane %v1277, %v1626
  %v1628 = vadd.f32 %v1620, %v1627
  %v1629 = vadd.f32 %v1621, %v1627
  %v1630 = vadd.f32 %v1622, %v1627
  %v1631 = vadd.f32 %v1623, %v1627
  %vm1632 = vcmp.gt.f32.partialorder %v1628, 0.0
  %vm1633 = vcmp.gt.f32.partialorder %v1629, 0.0
  %vm1634 = vcmp.gt.f32.partialorder %v1630, 0.0
  %vm1635 = vcmp.gt.f32.partialorder %v1631, 0.0
  %v1636 = vmul.f32 %v1628, 0.2
  %v1637 = vmul.f32 %v1629, 0.2
  %v1638 = vmul.f32 %v1630, 0.2
  %v1639 = vmul.f32 %v1631, 0.2
  %v1640 = vsel %vm1632, %v1628, %v1636
  %v1641 = vsel %vm1633, %v1629, %v1637
  %v1642 = vsel %vm1634, %v1630, %v1638
  %v1643 = vsel %vm1635, %v1631, %v1639
  %v1644 = vpack.c.bf16 %v1641, %v1640
  %v1645 = vpack.c.bf16 %v1643, %v1642
  %v1646 = vld [vmem:[%s4] sm:$0xf]
  %v1647 = vld [vmem:[%s4 + $0x4] sm:$0xf]
  %v1648 = vld [vmem:[%s4 + $0x8] sm:$0xf]
  %v1649 = vld [vmem:[%s4 + $0xc] sm:$0xf]
  %v1650 = vld [vmem:[%s4 + $0x10] sm:$0xf]
  %v1651 = vld [vmem:[%s4 + $0x14] sm:$0xf]
  %v1652 = vld [vmem:[%s4 + $0x18] sm:$0xf]
  %v1653 = vld [vmem:[%s4 + $0x1c] sm:$0xf]
  %v1654 = vld [vmem:[%s4 + $0x20] sm:$0xf]
  %v1655 = vld [vmem:[%s4 + $0x24] sm:$0xf]
  %v1656 = vld [vmem:[%s4 + $0x28] sm:$0xf]
  %v1657 = vld [vmem:[%s4 + $0x2c] sm:$0xf]
  %v1658 = vld [vmem:[%s4 + $0x30] sm:$0xf]
  %v1659 = vld [vmem:[%s4 + $0x34] sm:$0xf]
  %v1660 = vld [vmem:[%s4 + $0x38] sm:$0xf]
  %v1661 = vld [vmem:[%s4 + $0x3c] sm:$0xf]
  %v1678 = vunpack.c.l.b16 %v1646
  %v1679 = vunpack.c.l.b16 %v1647
  %v1680 = vunpack.c.l.b16 %v1648
  %v1681 = vunpack.c.l.b16 %v1649
  %v1682 = vunpack.c.l.b16 %v1650
  %v1683 = vunpack.c.l.b16 %v1651
  %v1684 = vunpack.c.l.b16 %v1652
  %v1685 = vunpack.c.l.b16 %v1653
  %v1686 = vunpack.c.l.b16 %v1654
  %v1687 = vunpack.c.l.b16 %v1655
  %v1688 = vunpack.c.l.b16 %v1656
  %v1689 = vunpack.c.l.b16 %v1657
  %v1690 = vunpack.c.l.b16 %v1658
  %v1691 = vunpack.c.l.b16 %v1659
  %v1692 = vunpack.c.l.b16 %v1660
  %v1693 = vunpack.c.l.b16 %v1661
  %v1694 = vpack.c.b16 %v1679, %v1678
  %v1695 = vpack.c.b16 %v1681, %v1680
  %v1696 = vpack.c.b16 %v1683, %v1682
  %v1697 = vpack.c.b16 %v1685, %v1684
  %v1698 = vpack.c.b16 %v1687, %v1686
  %v1699 = vpack.c.b16 %v1689, %v1688
  %v1700 = vpack.c.b16 %v1691, %v1690
  %v1701 = vpack.c.b16 %v1693, %v1692
  %v1703 = vsel %vm928, %v1694, 0
  %v1706 = vsel %vm928, %v1695, 0
  %v1709 = vsel %vm928, %v1696, 0
  %v1712 = vsel %vm928, %v1697, 0
  %v1715 = vsel %vm928, %v1698, 0
  %v1718 = vsel %vm928, %v1699, 0
  %v1721 = vsel %vm928, %v1700, 0
  %v1724 = vsel %vm928, %v1701, 0
  %1726 = vmatprep.subr.bf16.mxu0 0
  %1727 = vmatpush1.bf16.msra.mxu0 %v1644
  %1728 = vmatprep.subr.bf16.mxu0 0
  %1729 = vmatpush1.bf16.msra.mxu0 %v1645
  %1730 = vmatprep.subr.bf16.mxu0 0
  %1731 = vmatpush1.bf16.msra.mxu0 0
  %1732 = vmatprep.subr.bf16.mxu0 0
  %1733 = vmatpush1.bf16.msra.mxu0 0
  %1734 = vmatprep.subr.bf16.mxu0 0
  %1735 = vmatpush1.bf16.msra.mxu0 0
  %1736 = vmatprep.subr.bf16.mxu0 0
  %1737 = vmatpush1.bf16.msra.mxu0 0
  %1738 = vmatprep.subr.bf16.mxu0 0
  %1739 = vmatpush1.bf16.msra.mxu0 0
  %1740 = vmatprep.subr.bf16.mxu0 0
  %1741 = vmatpush1.bf16.msra.mxu0 0
  %1742 = vmatprep.subr.bf16.mxu0 0
  %1743 = vmatpush1.bf16.msra.mxu0 0
  %1744 = vmatprep.subr.bf16.mxu0 0
  %1745 = vmatpush1.bf16.msra.mxu0 0
  %1746 = vmatprep.subr.bf16.mxu0 0
  %1747 = vmatpush1.bf16.msra.mxu0 0
  %1748 = vmatprep.subr.bf16.mxu0 0
  %1749 = vmatpush1.bf16.msra.mxu0 0
  %1750 = vmatprep.subr.bf16.mxu0 0
  %1751 = vmatpush1.bf16.msra.mxu0 0
  %1752 = vmatprep.subr.bf16.mxu0 0
  %1753 = vmatpush1.bf16.msra.mxu0 0
  %1754 = vmatprep.subr.bf16.mxu0 0
  %1755 = vmatpush1.bf16.msra.mxu0 0
  %1756 = vmatprep.subr.bf16.mxu0 0
  %1757 = vmatpush1.bf16.msra.mxu0 0
  %1758 = vmatprep.mubr.bf16.mxu0 0
  %1759 = vmatmul.mubr.bf16.gmra.mrb[0].mxu0 %v1703
  %v1760 = vpop.f32.mrb[0].mxu0
  %v1761 = vadd.f32 0.0, %v1760
  %v1762 = vpop.f32.mrb[0].mxu0
  %v1763 = vpop.f32.mrb[0].mxu0
  %v1764 = vadd.f32 0.0, %v1763
  %v1765 = vpop.f32.mrb[0].mxu0
  %1766 = vmatprep.mubr.bf16.mxu0 0
  %1767 = vmatmul.mubr.bf16.gmra.mrb[0].mxu0 %v1706
  %v1768 = vpop.f32.mrb[0].mxu0
  %v1769 = vadd.f32 0.0, %v1768
  %v1770 = vpop.f32.mrb[0].mxu0
  %v1771 = vpop.f32.mrb[0].mxu0
  %v1772 = vadd.f32 0.0, %v1771
  %v1773 = vpop.f32.mrb[0].mxu0
  %1774 = vmatprep.mubr.bf16.mxu0 0
  %1775 = vmatmul.mubr.bf16.gmra.mrb[0].mxu0 %v1709
  %v1776 = vpop.f32.mrb[0].mxu0
  %v1777 = vadd.f32 0.0, %v1776
  %v1778 = vpop.f32.mrb[0].mxu0
  %v1779 = vpop.f32.mrb[0].mxu0
  %v1780 = vadd.f32 0.0, %v1779
  %v1781 = vpop.f32.mrb[0].mxu0
  %1782 = vmatprep.mubr.bf16.mxu0 0
  %1783 = vmatmul.mubr.bf16.gmra.mrb[0].mxu0 %v1712
  %v1784 = vpop.f32.mrb[0].mxu0
  %v1785 = vadd.f32 0.0, %v1784
  %v1786 = vpop.f32.mrb[0].mxu0
  %v1787 = vpop.f32.mrb[0].mxu0
  %v1788 = vadd.f32 0.0, %v1787
  %v1789 = vpop.f32.mrb[0].mxu0
  %1790 = vmatprep.mubr.bf16.mxu0 0
  %1791 = vmatmul.mubr.bf16.gmra.mrb[0].mxu0 %v1715
  %v1792 = vpop.f32.mrb[0].mxu0
  %v1793 = vadd.f32 0.0, %v1792
  %v1794 = vpop.f32.mrb[0].mxu0
  %v1795 = vpop.f32.mrb[0].mxu0
  %v1796 = vadd.f32 0.0, %v1795
  %v1797 = vpop.f32.mrb[0].mxu0
  %1798 = vmatprep.mubr.bf16.mxu0 0
  %1799 = vmatmul.mubr.bf16.gmra.mrb[0].mxu0 %v1718
  %v1800 = vpop.f32.mrb[0].mxu0
  %v1801 = vadd.f32 0.0, %v1800
  %v1802 = vpop.f32.mrb[0].mxu0
  %v1803 = vpop.f32.mrb[0].mxu0
  %v1804 = vadd.f32 0.0, %v1803
  %v1805 = vpop.f32.mrb[0].mxu0
  %1806 = vmatprep.mubr.bf16.mxu0 0
  %1807 = vmatmul.mubr.bf16.gmra.mrb[0].mxu0 %v1721
  %v1808 = vpop.f32.mrb[0].mxu0
  %v1809 = vadd.f32 0.0, %v1808
  %v1810 = vpop.f32.mrb[0].mxu0
  %v1811 = vpop.f32.mrb[0].mxu0
  %v1812 = vadd.f32 0.0, %v1811
  %v1813 = vpop.f32.mrb[0].mxu0
  %1814 = vmatprep.mubr.bf16.mxu0 0
  %1815 = vmatmul.mubr.bf16.gmra.mrb[0].mxu0 %v1724
  %v1816 = vpop.f32.mrb[0].mxu0
  %v1817 = vadd.f32 0.0, %v1816
  %v1818 = vpop.f32.mrb[0].mxu0
  %v1819 = vpop.f32.mrb[0].mxu0
  %v1820 = vadd.f32 0.0, %v1819
  %v1821 = vpop.f32.mrb[0].mxu0
  %1822 = vdwg.mxu0
  %1823 = vst.msk [vmem:[#allocation3] sm:$0xff] %vm1572, %v1761
  %1825 = vrot.lane.b32.xlu0 %v1764, 64
  %v1826 = vpop.permute.xlu0 %1825
  %vm1828 = vcmask 1048064
  %1829 = vst.msk [vmem:[#allocation3] sm:$0xff] %vm1828, %v1826
  %1830 = vst.msk [vmem:[#allocation3 + $0x8] sm:$0xff] %vm1572, %v1769
  %1832 = vrot.lane.b32.xlu0 %v1772, 64
  %v1833 = vpop.permute.xlu0 %1832
  %1835 = vst.msk [vmem:[#allocation3 + $0x8] sm:$0xff] %vm1828, %v1833
  %1836 = vst.msk [vmem:[#allocation3 + $0x10] sm:$0xff] %vm1572, %v1777
  %1838 = vrot.lane.b32.xlu0 %v1780, 64
  %v1839 = vpop.permute.xlu0 %1838
  %1841 = vst.msk [vmem:[#allocation3 + $0x10] sm:$0xff] %vm1828, %v1839
  %1842 = vst.msk [vmem:[#allocation3 + $0x18] sm:$0xff] %vm1572, %v1785
  %1844 = vrot.lane.b32.xlu0 %v1788, 64
  %v1845 = vpop.permute.xlu0 %1844
  %1847 = vst.msk [vmem:[#allocation3 + $0x18] sm:$0xff] %vm1828, %v1845
  %1848 = vst.msk [vmem:[#allocation3 + $0x20] sm:$0xff] %vm1572, %v1793
  %1850 = vrot.lane.b32.xlu0 %v1796, 64
  %v1851 = vpop.permute.xlu0 %1850
  %1853 = vst.msk [vmem:[#allocation3 + $0x20] sm:$0xff] %vm1828, %v1851
  %1854 = vst.msk [vmem:[#allocation3 + $0x28] sm:$0xff] %vm1572, %v1801
  %1856 = vrot.lane.b32.xlu0 %v1804, 64
  %v1857 = vpop.permute.xlu0 %1856
  %1859 = vst.msk [vmem:[#allocation3 + $0x28] sm:$0xff] %vm1828, %v1857
  %1860 = vst.msk [vmem:[#allocation3 + $0x30] sm:$0xff] %vm1572, %v1809
  %1862 = vrot.lane.b32.xlu0 %v1812, 64
  %v1863 = vpop.permute.xlu0 %1862
  %1865 = vst.msk [vmem:[#allocation3 + $0x30] sm:$0xff] %vm1828, %v1863
  %1866 = vst.msk [vmem:[#allocation3 + $0x38] sm:$0xff] %vm1572, %v1817
  %1868 = vrot.lane.b32.xlu0 %v1820, 64
  %v1869 = vpop.permute.xlu0 %1868
  %1871 = vst.msk [vmem:[#allocation3 + $0x38] sm:$0xff] %vm1828, %v1869
  %v1872 = vld [vmem:[#allocation3] sm:$0xff]
  %v1873 = vld [vmem:[#allocation3 + $0x8] sm:$0xff]
  %v1874 = vld [vmem:[#allocation3 + $0x10] sm:$0xff]
  %v1875 = vld [vmem:[#allocation3 + $0x18] sm:$0xff]
  %v1876 = vld [vmem:[#allocation3 + $0x20] sm:$0xff]
  %v1877 = vld [vmem:[#allocation3 + $0x28] sm:$0xff]
  %v1878 = vld [vmem:[#allocation3 + $0x30] sm:$0xff]
  %v1879 = vld [vmem:[#allocation3 + $0x38] sm:$0xff]
  %v1880 = vpack.c.bf16 %v1872, %v1872
  %v1881 = vpack.c.bf16 %v1873, %v1873
  %v1882 = vpack.c.bf16 %v1874, %v1874
  %v1883 = vpack.c.bf16 %v1875, %v1875
  %v1884 = vpack.c.bf16 %v1876, %v1876
  %v1885 = vpack.c.bf16 %v1877, %v1877
  %v1886 = vpack.c.bf16 %v1878, %v1878
  %v1887 = vpack.c.bf16 %v1879, %v1879
  %v1888 = vld [vmem:[%s5] sm:$0xf]
  %v1889 = vld [vmem:[%s5 + $0x4] sm:$0xf]
  %v1890 = vld [vmem:[%s5 + $0x8] sm:$0xf]
  %v1891 = vld [vmem:[%s5 + $0xc] sm:$0xf]
  %v1892 = vld [vmem:[%s5 + $0x10] sm:$0xf]
  %v1893 = vld [vmem:[%s5 + $0x14] sm:$0xf]
  %v1894 = vld [vmem:[%s5 + $0x18] sm:$0xf]
  %v1895 = vld [vmem:[%s5 + $0x1c] sm:$0xf]
  %v1896 = vld [vmem:[%s5 + $0x20] sm:$0xf]
  %v1897 = vld [vmem:[%s5 + $0x24] sm:$0xf]
  %v1898 = vld [vmem:[%s5 + $0x28] sm:$0xf]
  %v1899 = vld [vmem:[%s5 + $0x2c] sm:$0xf]
  %v1900 = vld [vmem:[%s5 + $0x30] sm:$0xf]
  %v1901 = vld [vmem:[%s5 + $0x34] sm:$0xf]
  %v1902 = vld [vmem:[%s5 + $0x38] sm:$0xf]
  %v1903 = vld [vmem:[%s5 + $0x3c] sm:$0xf]
  %v1904 = vld [vmem:[%s5 + $0x40] sm:$0xf]
  %v1905 = vld [vmem:[%s5 + $0x44] sm:$0xf]
  %v1906 = vld [vmem:[%s5 + $0x48] sm:$0xf]
  %v1907 = vld [vmem:[%s5 + $0x4c] sm:$0xf]
  %v1908 = vld [vmem:[%s5 + $0x50] sm:$0xf]
  %v1909 = vld [vmem:[%s5 + $0x54] sm:$0xf]
  %v1910 = vld [vmem:[%s5 + $0x58] sm:$0xf]
  %v1911 = vld [vmem:[%s5 + $0x5c] sm:$0xf]
  %v1912 = vld [vmem:[%s5 + $0x60] sm:$0xf]
  %v1913 = vld [vmem:[%s5 + $0x64] sm:$0xf]
  %v1914 = vld [vmem:[%s5 + $0x68] sm:$0xf]
  %v1915 = vld [vmem:[%s5 + $0x6c] sm:$0xf]
  %v1916 = vld [vmem:[%s5 + $0x70] sm:$0xf]
  %v1917 = vld [vmem:[%s5 + $0x74] sm:$0xf]
  %v1918 = vld [vmem:[%s5 + $0x78] sm:$0xf]
  %v1919 = vld [vmem:[%s5 + $0x7c] sm:$0xf]
  %v1920 = vld [vmem:[%s5 + $0x80] sm:$0xf]
  %v1921 = vld [vmem:[%s5 + $0x84] sm:$0xf]
  %v1922 = vld [vmem:[%s5 + $0x88] sm:$0xf]
  %v1923 = vld [vmem:[%s5 + $0x8c] sm:$0xf]
  %v1924 = vld [vmem:[%s5 + $0x90] sm:$0xf]
  %v1925 = vld [vmem:[%s5 + $0x94] sm:$0xf]
  %v1926 = vld [vmem:[%s5 + $0x98] sm:$0xf]
  %v1927 = vld [vmem:[%s5 + $0x9c] sm:$0xf]
  %v1928 = vld [vmem:[%s5 + $0xa0] sm:$0xf]
  %v1929 = vld [vmem:[%s5 + $0xa4] sm:$0xf]
  %v1930 = vld [vmem:[%s5 + $0xa8] sm:$0xf]
  %v1931 = vld [vmem:[%s5 + $0xac] sm:$0xf]
  %v1932 = vld [vmem:[%s5 + $0xb0] sm:$0xf]
  %v1933 = vld [vmem:[%s5 + $0xb4] sm:$0xf]
  %v1934 = vld [vmem:[%s5 + $0xb8] sm:$0xf]
  %v1935 = vld [vmem:[%s5 + $0xbc] sm:$0xf]
  %v1936 = vld [vmem:[%s5 + $0xc0] sm:$0xf]
  %v1937 = vld [vmem:[%s5 + $0xc4] sm:$0xf]
  %v1938 = vld [vmem:[%s5 + $0xc8] sm:$0xf]
  %v1939 = vld [vmem:[%s5 + $0xcc] sm:$0xf]
  %v1940 = vld [vmem:[%s5 + $0xd0] sm:$0xf]
  %v1941 = vld [vmem:[%s5 + $0xd4] sm:$0xf]
  %v1942 = vld [vmem:[%s5 + $0xd8] sm:$0xf]
  %v1943 = vld [vmem:[%s5 + $0xdc] sm:$0xf]
  %v1944 = vld [vmem:[%s5 + $0xe0] sm:$0xf]
  %v1945 = vld [vmem:[%s5 + $0xe4] sm:$0xf]
  %v1946 = vld [vmem:[%s5 + $0xe8] sm:$0xf]
  %v1947 = vld [vmem:[%s5 + $0xec] sm:$0xf]
  %v1948 = vld [vmem:[%s5 + $0xf0] sm:$0xf]
  %v1949 = vld [vmem:[%s5 + $0xf4] sm:$0xf]
  %v1950 = vld [vmem:[%s5 + $0xf8] sm:$0xf]
  %v1951 = vld [vmem:[%s5 + $0xfc] sm:$0xf]
  %v1952 = vld [vmem:[%s5 + $0x100] sm:$0xf]
  %v1953 = vld [vmem:[%s5 + $0x104] sm:$0xf]
  %v1954 = vld [vmem:[%s5 + $0x108] sm:$0xf]
  %v1955 = vld [vmem:[%s5 + $0x10c] sm:$0xf]
  %v1956 = vld [vmem:[%s5 + $0x110] sm:$0xf]
  %v1957 = vld [vmem:[%s5 + $0x114] sm:$0xf]
  %v1958 = vld [vmem:[%s5 + $0x118] sm:$0xf]
  %v1959 = vld [vmem:[%s5 + $0x11c] sm:$0xf]
  %v1960 = vld [vmem:[%s5 + $0x120] sm:$0xf]
  %v1961 = vld [vmem:[%s5 + $0x124] sm:$0xf]
  %v1962 = vld [vmem:[%s5 + $0x128] sm:$0xf]
  %v1963 = vld [vmem:[%s5 + $0x12c] sm:$0xf]
  %v1964 = vld [vmem:[%s5 + $0x130] sm:$0xf]
  %v1965 = vld [vmem:[%s5 + $0x134] sm:$0xf]
  %v1966 = vld [vmem:[%s5 + $0x138] sm:$0xf]
  %v1967 = vld [vmem:[%s5 + $0x13c] sm:$0xf]
  %v1968 = vld [vmem:[%s5 + $0x140] sm:$0xf]
  %v1969 = vld [vmem:[%s5 + $0x144] sm:$0xf]
  %v1970 = vld [vmem:[%s5 + $0x148] sm:$0xf]
  %v1971 = vld [vmem:[%s5 + $0x14c] sm:$0xf]
  %v1972 = vld [vmem:[%s5 + $0x150] sm:$0xf]
  %v1973 = vld [vmem:[%s5 + $0x154] sm:$0xf]
  %v1974 = vld [vmem:[%s5 + $0x158] sm:$0xf]
  %v1975 = vld [vmem:[%s5 + $0x15c] sm:$0xf]
  %v1976 = vld [vmem:[%s5 + $0x160] sm:$0xf]
  %v1977 = vld [vmem:[%s5 + $0x164] sm:$0xf]
  %v1978 = vld [vmem:[%s5 + $0x168] sm:$0xf]
  %v1979 = vld [vmem:[%s5 + $0x16c] sm:$0xf]
  %v1980 = vld [vmem:[%s5 + $0x170] sm:$0xf]
  %v1981 = vld [vmem:[%s5 + $0x174] sm:$0xf]
  %v1982 = vld [vmem:[%s5 + $0x178] sm:$0xf]
  %v1983 = vld [vmem:[%s5 + $0x17c] sm:$0xf]
  %v1984 = vld [vmem:[%s5 + $0x180] sm:$0xf]
  %v1985 = vld [vmem:[%s5 + $0x184] sm:$0xf]
  %v1986 = vld [vmem:[%s5 + $0x188] sm:$0xf]
  %v1987 = vld [vmem:[%s5 + $0x18c] sm:$0xf]
  %v1988 = vld [vmem:[%s5 + $0x190] sm:$0xf]
  %v1989 = vld [vmem:[%s5 + $0x194] sm:$0xf]
  %v1990 = vld [vmem:[%s5 + $0x198] sm:$0xf]
  %v1991 = vld [vmem:[%s5 + $0x19c] sm:$0xf]
  %v1992 = vld [vmem:[%s5 + $0x1a0] sm:$0xf]
  %v1993 = vld [vmem:[%s5 + $0x1a4] sm:$0xf]
  %v1994 = vld [vmem:[%s5 + $0x1a8] sm:$0xf]
  %v1995 = vld [vmem:[%s5 + $0x1ac] sm:$0xf]
  %v1996 = vld [vmem:[%s5 + $0x1b0] sm:$0xf]
  %v1997 = vld [vmem:[%s5 + $0x1b4] sm:$0xf]
  %v1998 = vld [vmem:[%s5 + $0x1b8] sm:$0xf]
  %v1999 = vld [vmem:[%s5 + $0x1bc] sm:$0xf]
  %v2000 = vld [vmem:[%s5 + $0x1c0] sm:$0xf]
  %v2001 = vld [vmem:[%s5 + $0x1c4] sm:$0xf]
  %v2002 = vld [vmem:[%s5 + $0x1c8] sm:$0xf]
  %v2003 = vld [vmem:[%s5 + $0x1cc] sm:$0xf]
  %v2004 = vld [vmem:[%s5 + $0x1d0] sm:$0xf]
  %v2005 = vld [vmem:[%s5 + $0x1d4] sm:$0xf]
  %v2006 = vld [vmem:[%s5 + $0x1d8] sm:$0xf]
  %v2007 = vld [vmem:[%s5 + $0x1dc] sm:$0xf]
  %v2008 = vld [vmem:[%s5 + $0x1e0] sm:$0xf]
  %v2009 = vld [vmem:[%s5 + $0x1e4] sm:$0xf]
  %v2010 = vld [vmem:[%s5 + $0x1e8] sm:$0xf]
  %v2011 = vld [vmem:[%s5 + $0x1ec] sm:$0xf]
  %v2012 = vld [vmem:[%s5 + $0x1f0] sm:$0xf]
  %v2013 = vld [vmem:[%s5 + $0x1f4] sm:$0xf]
  %v2014 = vld [vmem:[%s5 + $0x1f8] sm:$0xf]
  %v2015 = vld [vmem:[%s5 + $0x1fc] sm:$0xf]
  %s2016 = scalar_lea.vmem %s8, 16
  %v2017 = vld [vmem:[%s2016] sm:$0x77]
  %v2018 = vlaneseq
  %v2019 = vshrl.u32 %v2018, 7
  %v2020 = vsub.s32 0, %v2019
  %v2021 = vrot.slane %v2017, %v2020
  %v2150 = vunpack.c.l.b16 %v1888
  %v2151 = vunpack.c.l.b16 %v1889
  %v2152 = vunpack.c.l.b16 %v1890
  %v2153 = vunpack.c.l.b16 %v1891
  %v2154 = vunpack.c.l.b16 %v1892
  %v2155 = vunpack.c.l.b16 %v1893
  %v2156 = vunpack.c.l.b16 %v1894
  %v2157 = vunpack.c.l.b16 %v1895
  %v2158 = vunpack.c.l.b16 %v1896
  %v2159 = vunpack.c.l.b16 %v1897
  %v2160 = vunpack.c.l.b16 %v1898
  %v2161 = vunpack.c.l.b16 %v1899
  %v2162 = vunpack.c.l.b16 %v1900
  %v2163 = vunpack.c.l.b16 %v1901
  %v2164 = vunpack.c.l.b16 %v1902
  %v2165 = vunpack.c.l.b16 %v1903
  %v2166 = vunpack.c.l.b16 %v1904
  %v2167 = vunpack.c.l.b16 %v1905
  %v2168 = vunpack.c.l.b16 %v1906
  %v2169 = vunpack.c.l.b16 %v1907
  %v2170 = vunpack.c.l.b16 %v1908
  %v2171 = vunpack.c.l.b16 %v1909
  %v2172 = vunpack.c.l.b16 %v1910
  %v2173 = vunpack.c.l.b16 %v1911
  %v2174 = vunpack.c.l.b16 %v1912
  %v2175 = vunpack.c.l.b16 %v1913
  %v2176 = vunpack.c.l.b16 %v1914
  %v2177 = vunpack.c.l.b16 %v1915
  %v2178 = vunpack.c.l.b16 %v1916
  %v2179 = vunpack.c.l.b16 %v1917
  %v2180 = vunpack.c.l.b16 %v1918
  %v2181 = vunpack.c.l.b16 %v1919
  %v2182 = vunpack.c.l.b16 %v1920
  %v2183 = vunpack.c.l.b16 %v1921
  %v2184 = vunpack.c.l.b16 %v1922
  %v2185 = vunpack.c.l.b16 %v1923
  %v2186 = vunpack.c.l.b16 %v1924
  %v2187 = vunpack.c.l.b16 %v1925
  %v2188 = vunpack.c.l.b16 %v1926
  %v2189 = vunpack.c.l.b16 %v1927
  %v2190 = vunpack.c.l.b16 %v1928
  %v2191 = vunpack.c.l.b16 %v1929
  %v2192 = vunpack.c.l.b16 %v1930
  %v2193 = vunpack.c.l.b16 %v1931
  %v2194 = vunpack.c.l.b16 %v1932
  %v2195 = vunpack.c.l.b16 %v1933
  %v2196 = vunpack.c.l.b16 %v1934
  %v2197 = vunpack.c.l.b16 %v1935
  %v2198 = vunpack.c.l.b16 %v1936
  %v2199 = vunpack.c.l.b16 %v1937
  %v2200 = vunpack.c.l.b16 %v1938
  %v2201 = vunpack.c.l.b16 %v1939
  %v2202 = vunpack.c.l.b16 %v1940
  %v2203 = vunpack.c.l.b16 %v1941
  %v2204 = vunpack.c.l.b16 %v1942
  %v2205 = vunpack.c.l.b16 %v1943
  %v2206 = vunpack.c.l.b16 %v1944
  %v2207 = vunpack.c.l.b16 %v1945
  %v2208 = vunpack.c.l.b16 %v1946
  %v2209 = vunpack.c.l.b16 %v1947
  %v2210 = vunpack.c.l.b16 %v1948
  %v2211 = vunpack.c.l.b16 %v1949
  %v2212 = vunpack.c.l.b16 %v1950
  %v2213 = vunpack.c.l.b16 %v1951
  %v2214 = vunpack.c.l.b16 %v1952
  %v2215 = vunpack.c.l.b16 %v1953
  %v2216 = vunpack.c.l.b16 %v1954
  %v2217 = vunpack.c.l.b16 %v1955
  %v2218 = vunpack.c.l.b16 %v1956
  %v2219 = vunpack.c.l.b16 %v1957
  %v2220 = vunpack.c.l.b16 %v1958
  %v2221 = vunpack.c.l.b16 %v1959
  %v2222 = vunpack.c.l.b16 %v1960
  %v2223 = vunpack.c.l.b16 %v1961
  %v2224 = vunpack.c.l.b16 %v1962
  %v2225 = vunpack.c.l.b16 %v1963
  %v2226 = vunpack.c.l.b16 %v1964
  %v2227 = vunpack.c.l.b16 %v1965
  %v2228 = vunpack.c.l.b16 %v1966
  %v2229 = vunpack.c.l.b16 %v1967
  %v2230 = vunpack.c.l.b16 %v1968
  %v2231 = vunpack.c.l.b16 %v1969
  %v2232 = vunpack.c.l.b16 %v1970
  %v2233 = vunpack.c.l.b16 %v1971
  %v2234 = vunpack.c.l.b16 %v1972
  %v2235 = vunpack.c.l.b16 %v1973
  %v2236 = vunpack.c.l.b16 %v1974
  %v2237 = vunpack.c.l.b16 %v1975
  %v2238 = vunpack.c.l.b16 %v1976
  %v2239 = vunpack.c.l.b16 %v1977
  %v2240 = vunpack.c.l.b16 %v1978
  %v2241 = vunpack.c.l.b16 %v1979
  %v2242 = vunpack.c.l.b16 %v1980
  %v2243 = vunpack.c.l.b16 %v1981
  %v2244 = vunpack.c.l.b16 %v1982
  %v2245 = vunpack.c.l.b16 %v1983
  %v2246 = vunpack.c.l.b16 %v1984
  %v2247 = vunpack.c.l.b16 %v1985
  %v2248 = vunpack.c.l.b16 %v1986
  %v2249 = vunpack.c.l.b16 %v1987
  %v2250 = vunpack.c.l.b16 %v1988
  %v2251 = vunpack.c.l.b16 %v1989
  %v2252 = vunpack.c.l.b16 %v1990
  %v2253 = vunpack.c.l.b16 %v1991
  %v2254 = vunpack.c.l.b16 %v1992
  %v2255 = vunpack.c.l.b16 %v1993
  %v2256 = vunpack.c.l.b16 %v1994
  %v2257 = vunpack.c.l.b16 %v1995
  %v2258 = vunpack.c.l.b16 %v1996
  %v2259 = vunpack.c.l.b16 %v1997
  %v2260 = vunpack.c.l.b16 %v1998
  %v2261 = vunpack.c.l.b16 %v1999
  %v2262 = vunpack.c.l.b16 %v2000
  %v2263 = vunpack.c.l.b16 %v2001
  %v2264 = vunpack.c.l.b16 %v2002
  %v2265 = vunpack.c.l.b16 %v2003
  %v2266 = vunpack.c.l.b16 %v2004
  %v2267 = vunpack.c.l.b16 %v2005
  %v2268 = vunpack.c.l.b16 %v2006
  %v2269 = vunpack.c.l.b16 %v2007
  %v2270 = vunpack.c.l.b16 %v2008
  %v2271 = vunpack.c.l.b16 %v2009
  %v2272 = vunpack.c.l.b16 %v2010
  %v2273 = vunpack.c.l.b16 %v2011
  %v2274 = vunpack.c.l.b16 %v2012
  %v2275 = vunpack.c.l.b16 %v2013
  %v2276 = vunpack.c.l.b16 %v2014
  %v2277 = vunpack.c.l.b16 %v2015
  %v2278 = vpack.c.b16 %v2151, %v2150
  %v2279 = vpack.c.b16 %v2153, %v2152
  %v2280 = vpack.c.b16 %v2155, %v2154
  %v2281 = vpack.c.b16 %v2157, %v2156
  %v2282 = vpack.c.b16 %v2159, %v2158
  %v2283 = vpack.c.b16 %v2161, %v2160
  %v2284 = vpack.c.b16 %v2163, %v2162
  %v2285 = vpack.c.b16 %v2165, %v2164
  %v2286 = vpack.c.b16 %v2167, %v2166
  %v2287 = vpack.c.b16 %v2169, %v2168
  %v2288 = vpack.c.b16 %v2171, %v2170
  %v2289 = vpack.c.b16 %v2173, %v2172
  %v2290 = vpack.c.b16 %v2175, %v2174
  %v2291 = vpack.c.b16 %v2177, %v2176
  %v2292 = vpack.c.b16 %v2179, %v2178
  %v2293 = vpack.c.b16 %v2181, %v2180
  %v2294 = vpack.c.b16 %v2183, %v2182
  %v2295 = vpack.c.b16 %v2185, %v2184
  %v2296 = vpack.c.b16 %v2187, %v2186
  %v2297 = vpack.c.b16 %v2189, %v2188
  %v2298 = vpack.c.b16 %v2191, %v2190
  %v2299 = vpack.c.b16 %v2193, %v2192
  %v2300 = vpack.c.b16 %v2195, %v2194
  %v2301 = vpack.c.b16 %v2197, %v2196
  %v2302 = vpack.c.b16 %v2199, %v2198
  %v2303 = vpack.c.b16 %v2201, %v2200
  %v2304 = vpack.c.b16 %v2203, %v2202
  %v2305 = vpack.c.b16 %v2205, %v2204
  %v2306 = vpack.c.b16 %v2207, %v2206
  %v2307 = vpack.c.b16 %v2209, %v2208
  %v2308 = vpack.c.b16 %v2211, %v2210
  %v2309 = vpack.c.b16 %v2213, %v2212
  %v2310 = vpack.c.b16 %v2215, %v2214
  %v2311 = vpack.c.b16 %v2217, %v2216
  %v2312 = vpack.c.b16 %v2219, %v2218
  %v2313 = vpack.c.b16 %v2221, %v2220
  %v2314 = vpack.c.b16 %v2223, %v2222
  %v2315 = vpack.c.b16 %v2225, %v2224
  %v2316 = vpack.c.b16 %v2227, %v2226
  %v2317 = vpack.c.b16 %v2229, %v2228
  %v2318 = vpack.c.b16 %v2231, %v2230
  %v2319 = vpack.c.b16 %v2233, %v2232
  %v2320 = vpack.c.b16 %v2235, %v2234
  %v2321 = vpack.c.b16 %v2237, %v2236
  %v2322 = vpack.c.b16 %v2239, %v2238
  %v2323 = vpack.c.b16 %v2241, %v2240
  %v2324 = vpack.c.b16 %v2243, %v2242
  %v2325 = vpack.c.b16 %v2245, %v2244
  %v2326 = vpack.c.b16 %v2247, %v2246
  %v2327 = vpack.c.b16 %v2249, %v2248
  %v2328 = vpack.c.b16 %v2251, %v2250
  %v2329 = vpack.c.b16 %v2253, %v2252
  %v2330 = vpack.c.b16 %v2255, %v2254
  %v2331 = vpack.c.b16 %v2257, %v2256
  %v2332 = vpack.c.b16 %v2259, %v2258
  %v2333 = vpack.c.b16 %v2261, %v2260
  %v2334 = vpack.c.b16 %v2263, %v2262
  %v2335 = vpack.c.b16 %v2265, %v2264
  %v2336 = vpack.c.b16 %v2267, %v2266
  %v2337 = vpack.c.b16 %v2269, %v2268
  %v2338 = vpack.c.b16 %v2271, %v2270
  %v2339 = vpack.c.b16 %v2273, %v2272
  %v2340 = vpack.c.b16 %v2275, %v2274
  %v2341 = vpack.c.b16 %v2277, %v2276
  %2406 = vmatprep.subr.bf16.mxu0 0
  %2407 = vmatpush1.bf16.msra.mxu0 %v2278
  %2408 = vmatprep.subr.bf16.mxu0 0
  %2409 = vmatpush1.bf16.msra.mxu0 %v2279
  %2410 = vmatprep.subr.bf16.mxu0 0
  %2411 = vmatpush1.bf16.msra.mxu0 %v2280
  %2412 = vmatprep.subr.bf16.mxu0 0
  %2413 = vmatpush1.bf16.msra.mxu0 %v2281
  %2414 = vmatprep.subr.bf16.mxu0 0
  %2415 = vmatpush1.bf16.msra.mxu0 %v2282
  %2416 = vmatprep.subr.bf16.mxu0 0
  %2417 = vmatpush1.bf16.msra.mxu0 %v2283
  %2418 = vmatprep.subr.bf16.mxu0 0
  %2419 = vmatpush1.bf16.msra.mxu0 %v2284
  %2420 = vmatprep.subr.bf16.mxu0 0
  %2421 = vmatpush1.bf16.msra.mxu0 %v2285
  %2422 = vmatprep.subr.bf16.mxu0 0
  %2423 = vmatpush1.bf16.msra.mxu0 %v2286
  %2424 = vmatprep.subr.bf16.mxu0 0
  %2425 = vmatpush1.bf16.msra.mxu0 %v2287
  %2426 = vmatprep.subr.bf16.mxu0 0
  %2427 = vmatpush1.bf16.msra.mxu0 %v2288
  %2428 = vmatprep.subr.bf16.mxu0 0
  %2429 = vmatpush1.bf16.msra.mxu0 %v2289
  %2430 = vmatprep.subr.bf16.mxu0 0
  %2431 = vmatpush1.bf16.msra.mxu0 %v2290
  %2432 = vmatprep.subr.bf16.mxu0 0
  %2433 = vmatpush1.bf16.msra.mxu0 %v2291
  %2434 = vmatprep.subr.bf16.mxu0 0
  %2435 = vmatpush1.bf16.msra.mxu0 %v2292
  %2436 = vmatprep.subr.bf16.mxu0 0
  %2437 = vmatpush1.bf16.msra.mxu0 %v2293
  %2438 = vmatprep.mubr.bf16.mxu0 %v1881
  %2439 = vmatmul.mubr.bf16.gmra.mrb[0].mxu0 %v1880
  %v2440 = vpop.f32.mrb[0].mxu0
  %v2441 = vadd.f32 %v2021, %v2440
  %v2442 = vpop.f32.mrb[0].mxu0
  %v2443 = vpop.f32.mrb[0].mxu0
  %v2444 = vpop.f32.mrb[0].mxu0
  %2445 = vdwg.mxu0
  %2446 = vmatprep.subr.bf16.mxu0 0
  %2447 = vmatpush1.bf16.msra.mxu0 %v2294
  %2448 = vmatprep.subr.bf16.mxu0 0
  %2449 = vmatpush1.bf16.msra.mxu0 %v2295
  %2450 = vmatprep.subr.bf16.mxu0 0
  %2451 = vmatpush1.bf16.msra.mxu0 %v2296
  %2452 = vmatprep.subr.bf16.mxu0 0
  %2453 = vmatpush1.bf16.msra.mxu0 %v2297
  %2454 = vmatprep.subr.bf16.mxu0 0
  %2455 = vmatpush1.bf16.msra.mxu0 %v2298
  %2456 = vmatprep.subr.bf16.mxu0 0
  %2457 = vmatpush1.bf16.msra.mxu0 %v2299
  %2458 = vmatprep.subr.bf16.mxu0 0
  %2459 = vmatpush1.bf16.msra.mxu0 %v2300
  %2460 = vmatprep.subr.bf16.mxu0 0
  %2461 = vmatpush1.bf16.msra.mxu0 %v2301
  %2462 = vmatprep.subr.bf16.mxu0 0
  %2463 = vmatpush1.bf16.msra.mxu0 %v2302
  %2464 = vmatprep.subr.bf16.mxu0 0
  %2465 = vmatpush1.bf16.msra.mxu0 %v2303
  %2466 = vmatprep.subr.bf16.mxu0 0
  %2467 = vmatpush1.bf16.msra.mxu0 %v2304
  %2468 = vmatprep.subr.bf16.mxu0 0
  %2469 = vmatpush1.bf16.msra.mxu0 %v2305
  %2470 = vmatprep.subr.bf16.mxu0 0
  %2471 = vmatpush1.bf16.msra.mxu0 %v2306
  %2472 = vmatprep.subr.bf16.mxu0 0
  %2473 = vmatpush1.bf16.msra.mxu0 %v2307
  %2474 = vmatprep.subr.bf16.mxu0 0
  %2475 = vmatpush1.bf16.msra.mxu0 %v2308
  %2476 = vmatprep.subr.bf16.mxu0 0
  %2477 = vmatpush1.bf16.msra.mxu0 %v2309
  %2478 = vmatprep.mubr.bf16.mxu0 %v1883
  %2479 = vmatmul.mubr.bf16.gmra.mrb[0].mxu0 %v1882
  %v2480 = vpop.f32.mrb[0].mxu0
  %v2481 = vadd.f32 %v2441, %v2480
  %v2482 = vpop.f32.mrb[0].mxu0
  %v2483 = vpop.f32.mrb[0].mxu0
  %v2484 = vpop.f32.mrb[0].mxu0
  %2485 = vdwg.mxu0
  %2486 = vmatprep.subr.bf16.mxu0 0
  %2487 = vmatpush1.bf16.msra.mxu0 %v2310
  %2488 = vmatprep.subr.bf16.mxu0 0
  %2489 = vmatpush1.bf16.msra.mxu0 %v2311
  %2490 = vmatprep.subr.bf16.mxu0 0
  %2491 = vmatpush1.bf16.msra.mxu0 %v2312
  %2492 = vmatprep.subr.bf16.mxu0 0
  %2493 = vmatpush1.bf16.msra.mxu0 %v2313
  %2494 = vmatprep.subr.bf16.mxu0 0
  %2495 = vmatpush1.bf16.msra.mxu0 %v2314
  %2496 = vmatprep.subr.bf16.mxu0 0
  %2497 = vmatpush1.bf16.msra.mxu0 %v2315
  %2498 = vmatprep.subr.bf16.mxu0 0
  %2499 = vmatpush1.bf16.msra.mxu0 %v2316
  %2500 = vmatprep.subr.bf16.mxu0 0
  %2501 = vmatpush1.bf16.msra.mxu0 %v2317
  %2502 = vmatprep.subr.bf16.mxu0 0
  %2503 = vmatpush1.bf16.msra.mxu0 %v2318
  %2504 = vmatprep.subr.bf16.mxu0 0
  %2505 = vmatpush1.bf16.msra.mxu0 %v2319
  %2506 = vmatprep.subr.bf16.mxu0 0
  %2507 = vmatpush1.bf16.msra.mxu0 %v2320
  %2508 = vmatprep.subr.bf16.mxu0 0
  %2509 = vmatpush1.bf16.msra.mxu0 %v2321
  %2510 = vmatprep.subr.bf16.mxu0 0
  %2511 = vmatpush1.bf16.msra.mxu0 %v2322
  %2512 = vmatprep.subr.bf16.mxu0 0
  %2513 = vmatpush1.bf16.msra.mxu0 %v2323
  %2514 = vmatprep.subr.bf16.mxu0 0
  %2515 = vmatpush1.bf16.msra.mxu0 %v2324
  %2516 = vmatprep.subr.bf16.mxu0 0
  %2517 = vmatpush1.bf16.msra.mxu0 %v2325
  %2518 = vmatprep.mubr.bf16.mxu0 %v1885
  %2519 = vmatmul.mubr.bf16.gmra.mrb[0].mxu0 %v1884
  %v2520 = vpop.f32.mrb[0].mxu0
  %v2521 = vadd.f32 %v2481, %v2520
  %v2522 = vpop.f32.mrb[0].mxu0
  %v2523 = vpop.f32.mrb[0].mxu0
  %v2524 = vpop.f32.mrb[0].mxu0
  %2525 = vdwg.mxu0
  %2526 = vmatprep.subr.bf16.mxu0 0
  %2527 = vmatpush1.bf16.msra.mxu0 %v2326
  %2528 = vmatprep.subr.bf16.mxu0 0
  %2529 = vmatpush1.bf16.msra.mxu0 %v2327
  %2530 = vmatprep.subr.bf16.mxu0 0
  %2531 = vmatpush1.bf16.msra.mxu0 %v2328
  %2532 = vmatprep.subr.bf16.mxu0 0
  %2533 = vmatpush1.bf16.msra.mxu0 %v2329
  %2534 = vmatprep.subr.bf16.mxu0 0
  %2535 = vmatpush1.bf16.msra.mxu0 %v2330
  %2536 = vmatprep.subr.bf16.mxu0 0
  %2537 = vmatpush1.bf16.msra.mxu0 %v2331
  %2538 = vmatprep.subr.bf16.mxu0 0
  %2539 = vmatpush1.bf16.msra.mxu0 %v2332
  %2540 = vmatprep.subr.bf16.mxu0 0
  %2541 = vmatpush1.bf16.msra.mxu0 %v2333
  %2542 = vmatprep.subr.bf16.mxu0 0
  %2543 = vmatpush1.bf16.msra.mxu0 %v2334
  %2544 = vmatprep.subr.bf16.mxu0 0
  %2545 = vmatpush1.bf16.msra.mxu0 %v2335
  %2546 = vmatprep.subr.bf16.mxu0 0
  %2547 = vmatpush1.bf16.msra.mxu0 %v2336
  %2548 = vmatprep.subr.bf16.mxu0 0
  %2549 = vmatpush1.bf16.msra.mxu0 %v2337
  %2550 = vmatprep.subr.bf16.mxu0 0
  %2551 = vmatpush1.bf16.msra.mxu0 %v2338
  %2552 = vmatprep.subr.bf16.mxu0 0
  %2553 = vmatpush1.bf16.msra.mxu0 %v2339
  %2554 = vmatprep.subr.bf16.mxu0 0
  %2555 = vmatpush1.bf16.msra.mxu0 %v2340
  %2556 = vmatprep.subr.bf16.mxu0 0
  %2557 = vmatpush1.bf16.msra.mxu0 %v2341
  %2558 = vmatprep.mubr.bf16.mxu0 %v1887
  %2559 = vmatmul.mubr.bf16.gmra.mrb[0].mxu0 %v1886
  %v2560 = vpop.f32.mrb[0].mxu0
  %v2561 = vadd.f32 %v2521, %v2560
  %v2562 = vpop.f32.mrb[0].mxu0
  %v2563 = vpop.f32.mrb[0].mxu0
  %v2564 = vpop.f32.mrb[0].mxu0
  %2565 = vdwg.mxu0
  %v2566 = vrot.slane %v2561, 4
  %v2567 = vadd.f32 %v2561, %v2566
  %v2568 = vrot.slane %v2567, 2
  %v2569 = vadd.f32 %v2567, %v2568
  %v2570 = vrot.slane %v2569, 1
  %v2571 = vadd.f32 %v2569, %v2570
  %v2572 = vrcp.pop 8.0
  %v2573 = vmul.f32 %v2571, %v2572
  %v2574 = vsub.f32 %v2561, %v2573
  %v2575 = vmul.f32 %v2574, %v2574
  %v2576 = vrot.slane %v2575, 4
  %v2577 = vadd.f32 %v2575, %v2576
  %v2578 = vrot.slane %v2577, 2
  %v2579 = vadd.f32 %v2577, %v2578
  %v2580 = vrot.slane %v2579, 1
  %v2581 = vadd.f32 %v2579, %v2580
  %v2582 = vmul.f32 %v2581, %v2572
  %v2583 = vadd.f32 %v2582, 1e-05
  %v2584 = vrsqrt.pop %v2583
  %v2585 = vmul.f32 %v2574, %v2584
  %v2586 = vlaneseq
  %v2587 = vshrl.u32 %v2586, 7
  %v2588 = vsub.s32 1, %v2587
  %v2589 = vrot.slane %v2017, %v2588
  %v2590 = vmul.f32 %v2585, %v2589
  %v2591 = vlaneseq
  %v2592 = vshrl.u32 %v2591, 7
  %v2593 = vsub.s32 2, %v2592
  %v2594 = vrot.slane %v2017, %v2593
  %v2595 = vadd.f32 %v2590, %v2594
  %vm2596 = vcmp.gt.f32.partialorder %v2595, 0.0
  %v2597 = vmul.f32 %v2595, 0.2
  %v2598 = vsel %vm2596, %v2595, %v2597
  %2599 = vst [vmem:[#allocation4] sm:$0x1] %v2598
  %v2602 = vunpack.c.l.s4 1983009808
  %v2603 = vunpack.c.0.s8 %v2602
  %v2604 = vlaneseq
  %v2605 = vshrl.u32 %v2604, 7
  %v2606 = vsub.s32 %v2603, %v2605
  %v2607 = vrot.slane %v2598, %v2606
  %v2608 = vrot.slane %v2607, 7
  %v2609 = vrot.slane %v2608, 2
  %2611 = vst [vmem:[#allocation4 + $0x2] sm:$0x1] %v2609
  %v2612 = vcombine.high %v2607, %v2607
  %2614 = vst [vmem:[#allocation4 + $0x4] sm:$0x1] %v2612
  %v2615 = vrot.slane %v2612, 7
  %v2616 = vrot.slane %v2615, 2
  %2618 = vst [vmem:[#allocation4 + $0x6] sm:$0x1] %v2616
  %v2619 = vcombine.high %v2598, %v2598
  %v2621 = vunpack.c.l.s4 1983009808
  %v2622 = vunpack.c.0.s8 %v2621
  %v2623 = vlaneseq
  %v2624 = vshrl.u32 %v2623, 7
  %v2625 = vsub.s32 %v2622, %v2624
  %v2626 = vrot.slane %v2619, %v2625
  %2628 = vst [vmem:[#allocation4 + $0x1] sm:$0x1] %v2626
  %v2629 = vrot.slane %v2626, 7
  %v2630 = vrot.slane %v2629, 2
  %2632 = vst [vmem:[#allocation4 + $0x3] sm:$0x1] %v2630
  %v2633 = vcombine.high %v2626, %v2626
  %2635 = vst [vmem:[#allocation4 + $0x5] sm:$0x1] %v2633
  %v2636 = vrot.slane %v2633, 7
  %v2637 = vrot.slane %v2636, 2
  %2639 = vst [vmem:[#allocation4 + $0x7] sm:$0x1] %v2637
  %v2640 = vld [vmem:[#allocation4] sm:$0xff]
  %v2642 = vcombine.high %v2640, %v2640
  %v2644 = vunpack.c.l.s4 1983009808
  %v2645 = vunpack.c.0.s8 %v2644
  %v2646 = vlaneseq
  %v2647 = vshrl.u32 %v2646, 7
  %v2648 = vsub.s32 %v2645, %v2647
  %v2649 = vrot.slane %v2640, %v2648
  %v2651 = vunpack.c.l.s4 1983009808
  %v2652 = vunpack.c.0.s8 %v2651
  %v2653 = vlaneseq
  %v2654 = vshrl.u32 %v2653, 7
  %v2655 = vsub.s32 %v2652, %v2654
  %v2656 = vrot.slane %v2642, %v2655
  %v2657 = vcombine.high %v2649, %v2649
  %v2658 = vcombine.high %v2656, %v2656
  %v2663 = vpack.c.bf16 %v2649, %v2649
  %v2664 = vpack.c.bf16 %v2657, %v2657
  %v2665 = vpack.c.bf16 %v2656, %v2656
  %v2666 = vpack.c.bf16 %v2658, %v2658
  %v2667 = vld [vmem:[%s6] sm:$0xff]
  %v2668 = vld [vmem:[%s6 + $0x8] sm:$0xff]
  %v2669 = vld [vmem:[%s6 + $0x10] sm:$0xff]
  %v2670 = vld [vmem:[%s6 + $0x18] sm:$0xff]
  %v2671 = vld [vmem:[%s6 + $0x20] sm:$0xff]
  %v2672 = vld [vmem:[%s6 + $0x28] sm:$0xff]
  %v2673 = vld [vmem:[%s6 + $0x30] sm:$0xff]
  %v2674 = vld [vmem:[%s6 + $0x38] sm:$0xff]
  %v2675 = vld [vmem:[%s6 + $0x40] sm:$0xff]
  %v2676 = vld [vmem:[%s6 + $0x48] sm:$0xff]
  %v2677 = vld [vmem:[%s6 + $0x50] sm:$0xff]
  %v2678 = vld [vmem:[%s6 + $0x58] sm:$0xff]
  %v2679 = vld [vmem:[%s6 + $0x60] sm:$0xff]
  %v2680 = vld [vmem:[%s6 + $0x68] sm:$0xff]
  %v2681 = vld [vmem:[%s6 + $0x70] sm:$0xff]
  %v2682 = vld [vmem:[%s6 + $0x78] sm:$0xff]
  %v2683 = vld [vmem:[%s6 + $0x80] sm:$0xff]
  %v2684 = vld [vmem:[%s6 + $0x88] sm:$0xff]
  %v2685 = vld [vmem:[%s6 + $0x90] sm:$0xff]
  %v2686 = vld [vmem:[%s6 + $0x98] sm:$0xff]
  %v2687 = vld [vmem:[%s6 + $0xa0] sm:$0xff]
  %v2688 = vld [vmem:[%s6 + $0xa8] sm:$0xff]
  %v2689 = vld [vmem:[%s6 + $0xb0] sm:$0xff]
  %v2690 = vld [vmem:[%s6 + $0xb8] sm:$0xff]
  %v2691 = vld [vmem:[%s6 + $0xc0] sm:$0xff]
  %v2692 = vld [vmem:[%s6 + $0xc8] sm:$0xff]
  %v2693 = vld [vmem:[%s6 + $0xd0] sm:$0xff]
  %v2694 = vld [vmem:[%s6 + $0xd8] sm:$0xff]
  %v2695 = vld [vmem:[%s6 + $0xe0] sm:$0xff]
  %v2696 = vld [vmem:[%s6 + $0xe8] sm:$0xff]
  %v2697 = vld [vmem:[%s6 + $0xf0] sm:$0xff]
  %v2698 = vld [vmem:[%s6 + $0xf8] sm:$0xff]
  %v2699 = vld [vmem:[%s6 + $0x100] sm:$0xff]
  %v2700 = vld [vmem:[%s6 + $0x108] sm:$0xff]
  %v2701 = vld [vmem:[%s6 + $0x110] sm:$0xff]
  %v2702 = vld [vmem:[%s6 + $0x118] sm:$0xff]
  %v2703 = vld [vmem:[%s6 + $0x120] sm:$0xff]
  %v2704 = vld [vmem:[%s6 + $0x128] sm:$0xff]
  %v2705 = vld [vmem:[%s6 + $0x130] sm:$0xff]
  %v2706 = vld [vmem:[%s6 + $0x138] sm:$0xff]
  %v2707 = vld [vmem:[%s6 + $0x140] sm:$0xff]
  %v2708 = vld [vmem:[%s6 + $0x148] sm:$0xff]
  %v2709 = vld [vmem:[%s6 + $0x150] sm:$0xff]
  %v2710 = vld [vmem:[%s6 + $0x158] sm:$0xff]
  %v2711 = vld [vmem:[%s6 + $0x160] sm:$0xff]
  %v2712 = vld [vmem:[%s6 + $0x168] sm:$0xff]
  %v2713 = vld [vmem:[%s6 + $0x170] sm:$0xff]
  %v2714 = vld [vmem:[%s6 + $0x178] sm:$0xff]
  %v2715 = vld [vmem:[%s6 + $0x180] sm:$0xff]
  %v2716 = vld [vmem:[%s6 + $0x188] sm:$0xff]
  %v2717 = vld [vmem:[%s6 + $0x190] sm:$0xff]
  %v2718 = vld [vmem:[%s6 + $0x198] sm:$0xff]
  %v2719 = vld [vmem:[%s6 + $0x1a0] sm:$0xff]
  %v2720 = vld [vmem:[%s6 + $0x1a8] sm:$0xff]
  %v2721 = vld [vmem:[%s6 + $0x1b0] sm:$0xff]
  %v2722 = vld [vmem:[%s6 + $0x1b8] sm:$0xff]
  %v2723 = vld [vmem:[%s6 + $0x1c0] sm:$0xff]
  %v2724 = vld [vmem:[%s6 + $0x1c8] sm:$0xff]
  %v2725 = vld [vmem:[%s6 + $0x1d0] sm:$0xff]
  %v2726 = vld [vmem:[%s6 + $0x1d8] sm:$0xff]
  %v2727 = vld [vmem:[%s6 + $0x1e0] sm:$0xff]
  %v2728 = vld [vmem:[%s6 + $0x1e8] sm:$0xff]
  %v2729 = vld [vmem:[%s6 + $0x1f0] sm:$0xff]
  %v2730 = vld [vmem:[%s6 + $0x1f8] sm:$0xff]
  %s2731 = scalar_lea.vmem %s8, 24
  %v2732 = vld [vmem:[%s2731] sm:$0x77]
  %v2734 = vlaneseq
  %v2735 = vshrl.u32 %v2734, 7
  %v2736 = vsub.s32 0, %v2735
  %v2737 = vrot.slane %v2732, %v2736
  %v2738 = vlaneseq
  %v2739 = vshrl.u32 %v2738, 7
  %v2740 = vsub.s32 4, %v2739
  %v2741 = vrot.slane %v2732, %v2740
  %v2744 = vlaneseq
  %v2745 = vshrl.u32 %v2744, 7
  %v2746 = vsub.s32 0, %v2745
  %v2747 = vrot.slane %v2737, %v2746
  %v2748 = vlaneseq
  %v2749 = vshrl.u32 %v2748, 7
  %v2750 = vsub.s32 0, %v2749
  %v2751 = vrot.slane %v2741, %v2750
  %v2816 = vunpack.c.l.b16 %v2667
  %v2817 = vunpack.c.h.b16 %v2667
  %v2818 = vunpack.c.l.b16 %v2668
  %v2819 = vunpack.c.h.b16 %v2668
  %v2820 = vunpack.c.l.b16 %v2669
  %v2821 = vunpack.c.h.b16 %v2669
  %v2822 = vunpack.c.l.b16 %v2670
  %v2823 = vunpack.c.h.b16 %v2670
  %v2824 = vunpack.c.l.b16 %v2671
  %v2825 = vunpack.c.h.b16 %v2671
  %v2826 = vunpack.c.l.b16 %v2672
  %v2827 = vunpack.c.h.b16 %v2672
  %v2828 = vunpack.c.l.b16 %v2673
  %v2829 = vunpack.c.h.b16 %v2673
  %v2830 = vunpack.c.l.b16 %v2674
  %v2831 = vunpack.c.h.b16 %v2674
  %v2832 = vunpack.c.l.b16 %v2675
  %v2833 = vunpack.c.h.b16 %v2675
  %v2834 = vunpack.c.l.b16 %v2676
  %v2835 = vunpack.c.h.b16 %v2676
  %v2836 = vunpack.c.l.b16 %v2677
  %v2837 = vunpack.c.h.b16 %v2677
  %v2838 = vunpack.c.l.b16 %v2678
  %v2839 = vunpack.c.h.b16 %v2678
  %v2840 = vunpack.c.l.b16 %v2679
  %v2841 = vunpack.c.h.b16 %v2679
  %v2842 = vunpack.c.l.b16 %v2680
  %v2843 = vunpack.c.h.b16 %v2680
  %v2844 = vunpack.c.l.b16 %v2681
  %v2845 = vunpack.c.h.b16 %v2681
  %v2846 = vunpack.c.l.b16 %v2682
  %v2847 = vunpack.c.h.b16 %v2682
  %v2848 = vunpack.c.l.b16 %v2683
  %v2849 = vunpack.c.h.b16 %v2683
  %v2850 = vunpack.c.l.b16 %v2684
  %v2851 = vunpack.c.h.b16 %v2684
  %v2852 = vunpack.c.l.b16 %v2685
  %v2853 = vunpack.c.h.b16 %v2685
  %v2854 = vunpack.c.l.b16 %v2686
  %v2855 = vunpack.c.h.b16 %v2686
  %v2856 = vunpack.c.l.b16 %v2687
  %v2857 = vunpack.c.h.b16 %v2687
  %v2858 = vunpack.c.l.b16 %v2688
  %v2859 = vunpack.c.h.b16 %v2688
  %v2860 = vunpack.c.l.b16 %v2689
  %v2861 = vunpack.c.h.b16 %v2689
  %v2862 = vunpack.c.l.b16 %v2690
  %v2863 = vunpack.c.h.b16 %v2690
  %v2864 = vunpack.c.l.b16 %v2691
  %v2865 = vunpack.c.h.b16 %v2691
  %v2866 = vunpack.c.l.b16 %v2692
  %v2867 = vunpack.c.h.b16 %v2692
  %v2868 = vunpack.c.l.b16 %v2693
  %v2869 = vunpack.c.h.b16 %v2693
  %v2870 = vunpack.c.l.b16 %v2694
  %v2871 = vunpack.c.h.b16 %v2694
  %v2872 = vunpack.c.l.b16 %v2695
  %v2873 = vunpack.c.h.b16 %v2695
  %v2874 = vunpack.c.l.b16 %v2696
  %v2875 = vunpack.c.h.b16 %v2696
  %v2876 = vunpack.c.l.b16 %v2697
  %v2877 = vunpack.c.h.b16 %v2697
  %v2878 = vunpack.c.l.b16 %v2698
  %v2879 = vunpack.c.h.b16 %v2698
  %v2880 = vunpack.c.l.b16 %v2699
  %v2881 = vunpack.c.h.b16 %v2699
  %v2882 = vunpack.c.l.b16 %v2700
  %v2883 = vunpack.c.h.b16 %v2700
  %v2884 = vunpack.c.l.b16 %v2701
  %v2885 = vunpack.c.h.b16 %v2701
  %v2886 = vunpack.c.l.b16 %v2702
  %v2887 = vunpack.c.h.b16 %v2702
  %v2888 = vunpack.c.l.b16 %v2703
  %v2889 = vunpack.c.h.b16 %v2703
  %v2890 = vunpack.c.l.b16 %v2704
  %v2891 = vunpack.c.h.b16 %v2704
  %v2892 = vunpack.c.l.b16 %v2705
  %v2893 = vunpack.c.h.b16 %v2705
  %v2894 = vunpack.c.l.b16 %v2706
  %v2895 = vunpack.c.h.b16 %v2706
  %v2896 = vunpack.c.l.b16 %v2707
  %v2897 = vunpack.c.h.b16 %v2707
  %v2898 = vunpack.c.l.b16 %v2708
  %v2899 = vunpack.c.h.b16 %v2708
  %v2900 = vunpack.c.l.b16 %v2709
  %v2901 = vunpack.c.h.b16 %v2709
  %v2902 = vunpack.c.l.b16 %v2710
  %v2903 = vunpack.c.h.b16 %v2710
  %v2904 = vunpack.c.l.b16 %v2711
  %v2905 = vunpack.c.h.b16 %v2711
  %v2906 = vunpack.c.l.b16 %v2712
  %v2907 = vunpack.c.h.b16 %v2712
  %v2908 = vunpack.c.l.b16 %v2713
  %v2909 = vunpack.c.h.b16 %v2713
  %v2910 = vunpack.c.l.b16 %v2714
  %v2911 = vunpack.c.h.b16 %v2714
  %v2912 = vunpack.c.l.b16 %v2715
  %v2913 = vunpack.c.h.b16 %v2715
  %v2914 = vunpack.c.l.b16 %v2716
  %v2915 = vunpack.c.h.b16 %v2716
  %v2916 = vunpack.c.l.b16 %v2717
  %v2917 = vunpack.c.h.b16 %v2717
  %v2918 = vunpack.c.l.b16 %v2718
  %v2919 = vunpack.c.h.b16 %v2718
  %v2920 = vunpack.c.l.b16 %v2719
  %v2921 = vunpack.c.h.b16 %v2719
  %v2922 = vunpack.c.l.b16 %v2720
  %v2923 = vunpack.c.h.b16 %v2720
  %v2924 = vunpack.c.l.b16 %v2721
  %v2925 = vunpack.c.h.b16 %v2721
  %v2926 = vunpack.c.l.b16 %v2722
  %v2927 = vunpack.c.h.b16 %v2722
  %v2928 = vunpack.c.l.b16 %v2723
  %v2929 = vunpack.c.h.b16 %v2723
  %v2930 = vunpack.c.l.b16 %v2724
  %v2931 = vunpack.c.h.b16 %v2724
  %v2932 = vunpack.c.l.b16 %v2725
  %v2933 = vunpack.c.h.b16 %v2725
  %v2934 = vunpack.c.l.b16 %v2726
  %v2935 = vunpack.c.h.b16 %v2726
  %v2936 = vunpack.c.l.b16 %v2727
  %v2937 = vunpack.c.h.b16 %v2727
  %v2938 = vunpack.c.l.b16 %v2728
  %v2939 = vunpack.c.h.b16 %v2728
  %v2940 = vunpack.c.l.b16 %v2729
  %v2941 = vunpack.c.h.b16 %v2729
  %v2942 = vunpack.c.l.b16 %v2730
  %v2943 = vunpack.c.h.b16 %v2730
  %v2944 = vpack.c.b16 %v2818, %v2816
  %v2945 = vpack.c.b16 %v2819, %v2817
  %v2946 = vpack.c.b16 %v2822, %v2820
  %v2947 = vpack.c.b16 %v2823, %v2821
  %v2948 = vpack.c.b16 %v2826, %v2824
  %v2949 = vpack.c.b16 %v2827, %v2825
  %v2950 = vpack.c.b16 %v2830, %v2828
  %v2951 = vpack.c.b16 %v2831, %v2829
  %v2952 = vpack.c.b16 %v2834, %v2832
  %v2953 = vpack.c.b16 %v2835, %v2833
  %v2954 = vpack.c.b16 %v2838, %v2836
  %v2955 = vpack.c.b16 %v2839, %v2837
  %v2956 = vpack.c.b16 %v2842, %v2840
  %v2957 = vpack.c.b16 %v2843, %v2841
  %v2958 = vpack.c.b16 %v2846, %v2844
  %v2959 = vpack.c.b16 %v2847, %v2845
  %v2960 = vpack.c.b16 %v2850, %v2848
  %v2961 = vpack.c.b16 %v2851, %v2849
  %v2962 = vpack.c.b16 %v2854, %v2852
  %v2963 = vpack.c.b16 %v2855, %v2853
  %v2964 = vpack.c.b16 %v2858, %v2856
  %v2965 = vpack.c.b16 %v2859, %v2857
  %v2966 = vpack.c.b16 %v2862, %v2860
  %v2967 = vpack.c.b16 %v2863, %v2861
  %v2968 = vpack.c.b16 %v2866, %v2864
  %v2969 = vpack.c.b16 %v2867, %v2865
  %v2970 = vpack.c.b16 %v2870, %v2868
  %v2971 = vpack.c.b16 %v2871, %v2869
  %v2972 = vpack.c.b16 %v2874, %v2872
  %v2973 = vpack.c.b16 %v2875, %v2873
  %v2974 = vpack.c.b16 %v2878, %v2876
  %v2975 = vpack.c.b16 %v2879, %v2877
  %v2976 = vpack.c.b16 %v2882, %v2880
  %v2977 = vpack.c.b16 %v2883, %v2881
  %v2978 = vpack.c.b16 %v2886, %v2884
  %v2979 = vpack.c.b16 %v2887, %v2885
  %v2980 = vpack.c.b16 %v2890, %v2888
  %v2981 = vpack.c.b16 %v2891, %v2889
  %v2982 = vpack.c.b16 %v2894, %v2892
  %v2983 = vpack.c.b16 %v2895, %v2893
  %v2984 = vpack.c.b16 %v2898, %v2896
  %v2985 = vpack.c.b16 %v2899, %v2897
  %v2986 = vpack.c.b16 %v2902, %v2900
  %v2987 = vpack.c.b16 %v2903, %v2901
  %v2988 = vpack.c.b16 %v2906, %v2904
  %v2989 = vpack.c.b16 %v2907, %v2905
  %v2990 = vpack.c.b16 %v2910, %v2908
  %v2991 = vpack.c.b16 %v2911, %v2909
  %v2992 = vpack.c.b16 %v2914, %v2912
  %v2993 = vpack.c.b16 %v2915, %v2913
  %v2994 = vpack.c.b16 %v2918, %v2916
  %v2995 = vpack.c.b16 %v2919, %v2917
  %v2996 = vpack.c.b16 %v2922, %v2920
  %v2997 = vpack.c.b16 %v2923, %v2921
  %v2998 = vpack.c.b16 %v2926, %v2924
  %v2999 = vpack.c.b16 %v2927, %v2925
  %v3000 = vpack.c.b16 %v2930, %v2928
  %v3001 = vpack.c.b16 %v2931, %v2929
  %v3002 = vpack.c.b16 %v2934, %v2932
  %v3003 = vpack.c.b16 %v2935, %v2933
  %v3004 = vpack.c.b16 %v2938, %v2936
  %v3005 = vpack.c.b16 %v2939, %v2937
  %v3006 = vpack.c.b16 %v2942, %v2940
  %v3007 = vpack.c.b16 %v2943, %v2941
  %3072 = vmatprep.subr.bf16.mxu0 %v2945
  %3073 = vmatpush1.bf16.msra.mxu0 %v2944
  %3074 = vmatprep.subr.bf16.mxu0 %v2947
  %3075 = vmatpush1.bf16.msra.mxu0 %v2946
  %3076 = vmatprep.subr.bf16.mxu0 %v2949
  %3077 = vmatpush1.bf16.msra.mxu0 %v2948
  %3078 = vmatprep.subr.bf16.mxu0 %v2951
  %3079 = vmatpush1.bf16.msra.mxu0 %v2950
  %3080 = vmatprep.subr.bf16.mxu0 %v2953
  %3081 = vmatpush1.bf16.msra.mxu0 %v2952
  %3082 = vmatprep.subr.bf16.mxu0 %v2955
  %3083 = vmatpush1.bf16.msra.mxu0 %v2954
  %3084 = vmatprep.subr.bf16.mxu0 %v2957
  %3085 = vmatpush1.bf16.msra.mxu0 %v2956
  %3086 = vmatprep.subr.bf16.mxu0 %v2959
  %3087 = vmatpush1.bf16.msra.mxu0 %v2958
  %3088 = vmatprep.subr.bf16.mxu0 %v2961
  %3089 = vmatpush1.bf16.msra.mxu0 %v2960
  %3090 = vmatprep.subr.bf16.mxu0 %v2963
  %3091 = vmatpush1.bf16.msra.mxu0 %v2962
  %3092 = vmatprep.subr.bf16.mxu0 %v2965
  %3093 = vmatpush1.bf16.msra.mxu0 %v2964
  %3094 = vmatprep.subr.bf16.mxu0 %v2967
  %3095 = vmatpush1.bf16.msra.mxu0 %v2966
  %3096 = vmatprep.subr.bf16.mxu0 %v2969
  %3097 = vmatpush1.bf16.msra.mxu0 %v2968
  %3098 = vmatprep.subr.bf16.mxu0 %v2971
  %3099 = vmatpush1.bf16.msra.mxu0 %v2970
  %3100 = vmatprep.subr.bf16.mxu0 %v2973
  %3101 = vmatpush1.bf16.msra.mxu0 %v2972
  %3102 = vmatprep.subr.bf16.mxu0 %v2975
  %3103 = vmatpush1.bf16.msra.mxu0 %v2974
  %3104 = vmatprep.mubr.bf16.mxu0 %v2664
  %3105 = vmatmul.mubr.bf16.gmra.mrb[0].mxu0 %v2663
  %v3106 = vpop.f32.mrb[0].mxu0
  %v3107 = vadd.f32 %v2747, %v3106
  %v3108 = vpop.f32.mrb[0].mxu0
  %v3109 = vadd.f32 %v2751, %v3108
  %v3110 = vpop.f32.mrb[0].mxu0
  %v3111 = vpop.f32.mrb[0].mxu0
  %3112 = vdwg.mxu0
  %3113 = vmatprep.subr.bf16.mxu0 %v2977
  %3114 = vmatpush1.bf16.msra.mxu0 %v2976
  %3115 = vmatprep.subr.bf16.mxu0 %v2979
  %3116 = vmatpush1.bf16.msra.mxu0 %v2978
  %3117 = vmatprep.subr.bf16.mxu0 %v2981
  %3118 = vmatpush1.bf16.msra.mxu0 %v2980
  %3119 = vmatprep.subr.bf16.mxu0 %v2983
  %3120 = vmatpush1.bf16.msra.mxu0 %v2982
  %3121 = vmatprep.subr.bf16.mxu0 %v2985
  %3122 = vmatpush1.bf16.msra.mxu0 %v2984
  %3123 = vmatprep.subr.bf16.mxu0 %v2987
  %3124 = vmatpush1.bf16.msra.mxu0 %v2986
  %3125 = vmatprep.subr.bf16.mxu0 %v2989
  %3126 = vmatpush1.bf16.msra.mxu0 %v2988
  %3127 = vmatprep.subr.bf16.mxu0 %v2991
  %3128 = vmatpush1.bf16.msra.mxu0 %v2990
  %3129 = vmatprep.subr.bf16.mxu0 %v2993
  %3130 = vmatpush1.bf16.msra.mxu0 %v2992
  %3131 = vmatprep.subr.bf16.mxu0 %v2995
  %3132 = vmatpush1.bf16.msra.mxu0 %v2994
  %3133 = vmatprep.subr.bf16.mxu0 %v2997
  %3134 = vmatpush1.bf16.msra.mxu0 %v2996
  %3135 = vmatprep.subr.bf16.mxu0 %v2999
  %3136 = vmatpush1.bf16.msra.mxu0 %v2998
  %3137 = vmatprep.subr.bf16.mxu0 %v3001
  %3138 = vmatpush1.bf16.msra.mxu0 %v3000
  %3139 = vmatprep.subr.bf16.mxu0 %v3003
  %3140 = vmatpush1.bf16.msra.mxu0 %v3002
  %3141 = vmatprep.subr.bf16.mxu0 %v3005
  %3142 = vmatpush1.bf16.msra.mxu0 %v3004
  %3143 = vmatprep.subr.bf16.mxu0 %v3007
  %3144 = vmatpush1.bf16.msra.mxu0 %v3006
  %3145 = vmatprep.mubr.bf16.mxu0 %v2666
  %3146 = vmatmul.mubr.bf16.gmra.mrb[0].mxu0 %v2665
  %v3147 = vpop.f32.mrb[0].mxu0
  %v3148 = vadd.f32 %v3107, %v3147
  %v3149 = vpop.f32.mrb[0].mxu0
  %v3150 = vadd.f32 %v3109, %v3149
  %v3151 = vpop.f32.mrb[0].mxu0
  %v3152 = vpop.f32.mrb[0].mxu0
  %3153 = vdwg.mxu0
  %vm3154 = vcmask 1041408
  %v3155 = vsel %vm3154, %v3148, 0.0
  %v3156 = vrot.slane %v3155, 4
  %v3157 = vadd.f32 %v3155, %v3156
  %v3158 = vrot.slane %v3157, 2
  %v3159 = vadd.f32 %v3157, %v3158
  %v3160 = vrot.slane %v3159, 1
  %v3161 = vadd.f32 %v3159, %v3160
  %v3162 = vsel %vm3154, %v3150, 0.0
  %v3163 = vrot.slane %v3162, 4
  %v3164 = vadd.f32 %v3162, %v3163
  %v3165 = vrot.slane %v3164, 2
  %v3166 = vadd.f32 %v3164, %v3165
  %v3167 = vrot.slane %v3166, 1
  %v3168 = vadd.f32 %v3166, %v3167
  %v3169 = vrcp.pop 2.0
  %v3170 = vmul.f32 %v3161, %v3169
  %v3171 = vmul.f32 %v3168, %v3169
  %v3172 = vsub.f32 %v3148, %v3170
  %v3173 = vsub.f32 %v3150, %v3171
  %v3174 = vmul.f32 %v3172, %v3172
  %v3175 = vmul.f32 %v3173, %v3173
  %v3176 = vsel %vm3154, %v3174, 0.0
  %v3177 = vrot.slane %v3176, 4
  %v3178 = vadd.f32 %v3176, %v3177
  %v3179 = vrot.slane %v3178, 2
  %v3180 = vadd.f32 %v3178, %v3179
  %v3181 = vrot.slane %v3180, 1
  %v3182 = vadd.f32 %v3180, %v3181
  %v3183 = vsel %vm3154, %v3175, 0.0
  %v3184 = vrot.slane %v3183, 4
  %v3185 = vadd.f32 %v3183, %v3184
  %v3186 = vrot.slane %v3185, 2
  %v3187 = vadd.f32 %v3185, %v3186
  %v3188 = vrot.slane %v3187, 1
  %v3189 = vadd.f32 %v3187, %v3188
  %v3190 = vmul.f32 %v3182, %v3169
  %v3191 = vmul.f32 %v3189, %v3169
  %v3192 = vadd.f32 %v3190, 1e-05
  %v3193 = vadd.f32 %v3191, 1e-05
  %v3194 = vrsqrt.pop %v3192
  %v3195 = vrsqrt.pop %v3193
  %v3196 = vmul.f32 %v3172, %v3194
  %v3197 = vmul.f32 %v3173, %v3195
  %v3198 = vlaneseq
  %v3199 = vshrl.u32 %v3198, 7
  %v3200 = vsub.s32 1, %v3199
  %v3201 = vrot.slane %v2732, %v3200
  %v3202 = vlaneseq
  %v3203 = vshrl.u32 %v3202, 7
  %v3204 = vsub.s32 5, %v3203
  %v3205 = vrot.slane %v2732, %v3204
  %v3208 = vlaneseq
  %v3209 = vshrl.u32 %v3208, 7
  %v3210 = vsub.s32 1, %v3209
  %v3211 = vrot.slane %v3201, %v3210
  %v3212 = vlaneseq
  %v3213 = vshrl.u32 %v3212, 7
  %v3214 = vsub.s32 1, %v3213
  %v3215 = vrot.slane %v3205, %v3214
  %v3216 = vmul.f32 %v3196, %v3211
  %v3217 = vmul.f32 %v3197, %v3215
  %v3218 = vlaneseq
  %v3219 = vshrl.u32 %v3218, 7
  %v3220 = vsub.s32 2, %v3219
  %v3221 = vrot.slane %v2732, %v3220
  %v3222 = vlaneseq
  %v3223 = vshrl.u32 %v3222, 7
  %v3224 = vsub.s32 6, %v3223
  %v3225 = vrot.slane %v2732, %v3224
  %v3228 = vlaneseq
  %v3229 = vshrl.u32 %v3228, 7
  %v3230 = vsub.s32 2, %v3229
  %v3231 = vrot.slane %v3221, %v3230
  %v3232 = vlaneseq
  %v3233 = vshrl.u32 %v3232, 7
  %v3234 = vsub.s32 2, %v3233
  %v3235 = vrot.slane %v3225, %v3234
  %v3236 = vadd.f32 %v3216, %v3231
  %v3237 = vadd.f32 %v3217, %v3235
  %vm3238 = vcmp.gt.f32.partialorder %v3236, 0.0
  %vm3239 = vcmp.gt.f32.partialorder %v3237, 0.0
  %v3240 = vmul.f32 %v3236, 0.2
  %v3241 = vmul.f32 %v3237, 0.2
  %v3242 = vsel %vm3238, %v3236, %v3240
  %v3243 = vsel %vm3239, %v3237, %v3241
  %v3244 = vpack.c.bf16 %v3242, %v3242
  %v3245 = vpack.c.bf16 %v3243, %v3243
  %v3246 = vld [vmem:[%s7] sm:$0xf]
  %v3247 = vld [vmem:[%s7 + $0x4] sm:$0xf]
  %v3248 = vld [vmem:[%s7 + $0x8] sm:$0xf]
  %v3249 = vld [vmem:[%s7 + $0xc] sm:$0xf]
  %v3250 = vld [vmem:[%s7 + $0x10] sm:$0xf]
  %v3251 = vld [vmem:[%s7 + $0x14] sm:$0xf]
  %v3252 = vld [vmem:[%s7 + $0x18] sm:$0xf]
  %v3253 = vld [vmem:[%s7 + $0x1c] sm:$0xf]
  %v3254 = vld [vmem:[%s7 + $0x20] sm:$0xf]
  %v3255 = vld [vmem:[%s7 + $0x24] sm:$0xf]
  %v3256 = vld [vmem:[%s7 + $0x28] sm:$0xf]
  %v3257 = vld [vmem:[%s7 + $0x2c] sm:$0xf]
  %v3258 = vld [vmem:[%s7 + $0x30] sm:$0xf]
  %v3259 = vld [vmem:[%s7 + $0x34] sm:$0xf]
  %v3260 = vld [vmem:[%s7 + $0x38] sm:$0xf]
  %v3261 = vld [vmem:[%s7 + $0x3c] sm:$0xf]
  %v3262 = vld [vmem:[%s7 + $0x40] sm:$0xf]
  %v3263 = vld [vmem:[%s7 + $0x44] sm:$0xf]
  %v3264 = vld [vmem:[%s7 + $0x48] sm:$0xf]
  %v3265 = vld [vmem:[%s7 + $0x4c] sm:$0xf]
  %v3266 = vld [vmem:[%s7 + $0x50] sm:$0xf]
  %v3267 = vld [vmem:[%s7 + $0x54] sm:$0xf]
  %v3268 = vld [vmem:[%s7 + $0x58] sm:$0xf]
  %v3269 = vld [vmem:[%s7 + $0x5c] sm:$0xf]
  %v3270 = vld [vmem:[%s7 + $0x60] sm:$0xf]
  %v3271 = vld [vmem:[%s7 + $0x64] sm:$0xf]
  %v3272 = vld [vmem:[%s7 + $0x68] sm:$0xf]
  %v3273 = vld [vmem:[%s7 + $0x6c] sm:$0xf]
  %v3274 = vld [vmem:[%s7 + $0x70] sm:$0xf]
  %v3275 = vld [vmem:[%s7 + $0x74] sm:$0xf]
  %v3276 = vld [vmem:[%s7 + $0x78] sm:$0xf]
  %v3277 = vld [vmem:[%s7 + $0x7c] sm:$0xf]
  %s3278 = scalar_lea.vmem %s8, 32
  %v3279 = vld [vmem:[%s3278] sm:$0x77]
  %v3280 = vlaneseq
  %v3281 = vshrl.u32 %v3280, 7
  %v3282 = vsub.s32 0, %v3281
  %v3283 = vrot.slane %v3279, %v3282
  %v3316 = vunpack.c.l.b16 %v3246
  %v3317 = vunpack.c.l.b16 %v3247
  %v3318 = vunpack.c.l.b16 %v3248
  %v3319 = vunpack.c.l.b16 %v3249
  %v3320 = vunpack.c.l.b16 %v3250
  %v3321 = vunpack.c.l.b16 %v3251
  %v3322 = vunpack.c.l.b16 %v3252
  %v3323 = vunpack.c.l.b16 %v3253
  %v3324 = vunpack.c.l.b16 %v3254
  %v3325 = vunpack.c.l.b16 %v3255
  %v3326 = vunpack.c.l.b16 %v3256
  %v3327 = vunpack.c.l.b16 %v3257
  %v3328 = vunpack.c.l.b16 %v3258
  %v3329 = vunpack.c.l.b16 %v3259
  %v3330 = vunpack.c.l.b16 %v3260
  %v3331 = vunpack.c.l.b16 %v3261
  %v3332 = vunpack.c.l.b16 %v3262
  %v3333 = vunpack.c.l.b16 %v3263
  %v3334 = vunpack.c.l.b16 %v3264
  %v3335 = vunpack.c.l.b16 %v3265
  %v3336 = vunpack.c.l.b16 %v3266
  %v3337 = vunpack.c.l.b16 %v3267
  %v3338 = vunpack.c.l.b16 %v3268
  %v3339 = vunpack.c.l.b16 %v3269
  %v3340 = vunpack.c.l.b16 %v3270
  %v3341 = vunpack.c.l.b16 %v3271
  %v3342 = vunpack.c.l.b16 %v3272
  %v3343 = vunpack.c.l.b16 %v3273
  %v3344 = vunpack.c.l.b16 %v3274
  %v3345 = vunpack.c.l.b16 %v3275
  %v3346 = vunpack.c.l.b16 %v3276
  %v3347 = vunpack.c.l.b16 %v3277
  %v3348 = vpack.c.b16 %v3317, %v3316
  %v3349 = vpack.c.b16 %v3319, %v3318
  %v3350 = vpack.c.b16 %v3321, %v3320
  %v3351 = vpack.c.b16 %v3323, %v3322
  %v3352 = vpack.c.b16 %v3325, %v3324
  %v3353 = vpack.c.b16 %v3327, %v3326
  %v3354 = vpack.c.b16 %v3329, %v3328
  %v3355 = vpack.c.b16 %v3331, %v3330
  %v3356 = vpack.c.b16 %v3333, %v3332
  %v3357 = vpack.c.b16 %v3335, %v3334
  %v3358 = vpack.c.b16 %v3337, %v3336
  %v3359 = vpack.c.b16 %v3339, %v3338
  %v3360 = vpack.c.b16 %v3341, %v3340
  %v3361 = vpack.c.b16 %v3343, %v3342
  %v3362 = vpack.c.b16 %v3345, %v3344
  %v3363 = vpack.c.b16 %v3347, %v3346
  %3380 = vmatprep.subr.bf16.mxu0 0
  %3381 = vmatpush1.bf16.msra.mxu0 %v3348
  %3382 = vmatprep.subr.bf16.mxu0 0
  %3383 = vmatpush1.bf16.msra.mxu0 %v3349
  %3384 = vmatprep.subr.bf16.mxu0 0
  %3385 = vmatpush1.bf16.msra.mxu0 %v3350
  %3386 = vmatprep.subr.bf16.mxu0 0
  %3387 = vmatpush1.bf16.msra.mxu0 %v3351
  %3388 = vmatprep.subr.bf16.mxu0 0
  %3389 = vmatpush1.bf16.msra.mxu0 %v3352
  %3390 = vmatprep.subr.bf16.mxu0 0
  %3391 = vmatpush1.bf16.msra.mxu0 %v3353
  %3392 = vmatprep.subr.bf16.mxu0 0
  %3393 = vmatpush1.bf16.msra.mxu0 %v3354
  %3394 = vmatprep.subr.bf16.mxu0 0
  %3395 = vmatpush1.bf16.msra.mxu0 %v3355
  %3396 = vmatprep.subr.bf16.mxu0 0
  %3397 = vmatpush1.bf16.msra.mxu0 %v3356
  %3398 = vmatprep.subr.bf16.mxu0 0
  %3399 = vmatpush1.bf16.msra.mxu0 %v3357
  %3400 = vmatprep.subr.bf16.mxu0 0
  %3401 = vmatpush1.bf16.msra.mxu0 %v3358
  %3402 = vmatprep.subr.bf16.mxu0 0
  %3403 = vmatpush1.bf16.msra.mxu0 %v3359
  %3404 = vmatprep.subr.bf16.mxu0 0
  %3405 = vmatpush1.bf16.msra.mxu0 %v3360
  %3406 = vmatprep.subr.bf16.mxu0 0
  %3407 = vmatpush1.bf16.msra.mxu0 %v3361
  %3408 = vmatprep.subr.bf16.mxu0 0
  %3409 = vmatpush1.bf16.msra.mxu0 %v3362
  %3410 = vmatprep.subr.bf16.mxu0 0
  %3411 = vmatpush1.bf16.msra.mxu0 %v3363
  %3412 = vmatprep.mubr.bf16.mxu0 %v3245
  %3413 = vmatmul.mubr.bf16.gmra.mrb[0].mxu0 %v3244
  %v3414 = vpop.f32.mrb[0].mxu0
  %v3415 = vadd.f32 %v3283, %v3414
  %v3416 = vpop.f32.mrb[0].mxu0
  %v3417 = vpop.f32.mrb[0].mxu0
  %v3418 = vpop.f32.mrb[0].mxu0
  %3419 = vdwg.mxu0
  %v3420 = vmax.f32 %v3415, 0.0
  %3421 = vst [vmem:[%s9] sm:$0x3] %v3420
  // Predicated region
  $region38: #{discriminator_forward.1} parent=0 // pred_check
    _
  $region39: #{discriminator_forward.1} parent=0 // pred_check_branch
    %3423 = sbr.rel (0) target = $region41
  $region40: #{discriminator_forward.1} parent=0 // pred_region
    _
  $region41: #{discriminator_forward.1} parent=0 // pred_fallthru
    _
  // Predicated region
  $region42: #{discriminator_forward.1} parent=0 // pred_check
    _
  $region43: #{discriminator_forward.1} parent=0 // pred_check_branch
    %3425 = sbr.rel (0) target = $region45
  $region44: #{discriminator_forward.1} parent=0 // pred_region
    _
  $region45: #{discriminator_forward.1} parent=0 // pred_fallthru
    _

</llo_original>
